<compile_context>
chip_gen: v7x
topology: tpu7x:2x2x1
jax: 0.10.0
libtpu: 0.0.40
codegen_flags: <defaults>
</compile_context>

<pallas_src>
import jax
import jax.numpy as jnp
import numpy as np
from jax.experimental import pallas as pl
from jax.experimental.pallas import tpu as pltpu

EPS = 1e-5


def _div_const(x, c):
    """x // c, strength-reduced at trace time for power-of-two c."""
    if c & (c - 1) == 0:
        return jnp.right_shift(x, int(c).bit_length() - 1)
    return x // c


def _mod_const(x, c):
    """x % c, strength-reduced at trace time for power-of-two c."""
    if c & (c - 1) == 0:
        return jnp.bitwise_and(x, c - 1)
    return x % c


def _make_kernel(C, N, D, H, W, KPAD, shifts, deltas):
    NQ = N * D * H * W
    n_taps = len(shifts)              # 27
    n_blocks = KPAD // (2 * C)        # 14 tap-pair blocks of 8 rows each
    assert 2 * C == 8, "tap-pair packing assumes 2*C == 8 (C == 4)"
    assert n_blocks * 2 * C == KPAD and 2 * n_blocks >= n_taps

    def kernel(x2_ref, w1_ref, w2_ref, pp_ref, out_ref, p_ref):
        # x2_ref: (8, NQ)  rows 0-3 == rows 4-7 == the C input channels
        # w1_ref: (8, KPAD) row-duplicated conv1 weights; w2_ref: (4, KPAD)
        # pp_ref: (8, 4)   columns [g1, be1, g2, be2] (rows 4-7 duplicate 0-3)
        # p_ref : (KPAD, NQ) im2col scratch

        # Per-lane (d, h, w) coordinates, computed once from a 2-D iota.
        q = jax.lax.broadcasted_iota(jnp.int32, (2 * C, NQ), 1)
        dd = _div_const(_mod_const(q, D * H * W), H * W)
        hh = _mod_const(_div_const(q, W), H)
        ww = _mod_const(q, W)
        row_lt4 = jax.lax.broadcasted_iota(jnp.int32, (2 * C, 1), 0) < C  # (8,1)

        def im2col(src2):
            # src2: (8, NQ) value with rows 0-3 == rows 4-7 (the C channels).
            # Row layout of p_ref: row = tap*C + ci (tap-major), K-pad rows last.
            for p in range(n_blocks):
                tA, tB = 2 * p, 2 * p + 1
                rolledA = pltpu.roll(src2, shift=shifts[tA], axis=1)
                if tB < n_taps:
                    rolledB = pltpu.roll(src2, shift=shifts[tB], axis=1)
                    data = jnp.where(row_lt4, rolledA, rolledB)
                    dB = deltas[tB]
                else:
                    # Lone last tap: rows 4-7 are the K-padding rows; the
                    # out-of-range "delta" below masks them to exact zeros,
                    # folding the padding zero-init into this store.
                    data = rolledA
                    dB = (D, H, W)
                dA = deltas[tA]

                # Halo-validity mask (handles zero padding AND the sample
                # boundary of the lane-concatenated batch).  Emit only the
                # compares that can actually fail; the all-valid center tap
                # contributes no compares at all.
                conds = []
                for a, b, size, coord in ((dA[0], dB[0], D, dd),
                                          (dA[1], dB[1], H, hh),
                                          (dA[2], dB[2], W, ww)):
                    need_lo = min(a, b) < 0
                    need_hi = max(a, b) > 0
                    if not (need_lo or need_hi):
                        continue
                    delta = a if a == b else jnp.where(row_lt4, a, b)  # (8,1)
                    v = coord + delta
                    if need_lo:
                        conds.append(v >= 0)
                    if need_hi:
                        conds.append(v < size)
                if conds:
                    valid = conds[0]
                    for c in conds[1:]:
                        valid = valid & c
                    data = jnp.where(valid, data, 0.0)

                # Full-width, 8-aligned, unmasked store.
                p_ref[2 * C * p:2 * C * (p + 1), :] = data

        def bn(h, gamma, beta):
            # Training-mode BatchNorm3d: biased batch stats over N, D, H, W
            # (per-channel lane reduction).  Conv bias omitted: it is exactly
            # cancelled by the mean subtraction.
            mean = jnp.mean(h, axis=1, keepdims=True)
            var = jnp.mean(jnp.square(h - mean), axis=1, keepdims=True)
            return (h - mean) * jax.lax.rsqrt(var + EPS) * gamma + beta

        # ---- conv1 -> bn1 -> relu  (row-duplicated output: ready for im2col) --
        im2col(x2_ref[...])
        h1 = jnp.dot(w1_ref[...], p_ref[...], preferred_element_type=jnp.float32)
        h1 = jnp.maximum(bn(h1, pp_ref[:, 0:1], pp_ref[:, 1:2]), 0.0)   # (8, NQ)

        # ---- conv2 -> bn2 ----------------------------------------------------
        im2col(h1)
        h2 = jnp.dot(w2_ref[...], p_ref[...], preferred_element_type=jnp.float32)
        h2 = bn(h2, pp_ref[0:C, 2:3], pp_ref[0:C, 3:4])                 # (C, NQ)

        # ---- identity shortcut + relu ---------------------------------------
        out_ref[...] = jnp.maximum(h2 + x2_ref[0:C, :], 0.0).astype(out_ref.dtype)

    return kernel


def resblock_forward(x_ncdhw, params):
    """x_ncdhw: (N, C, D, H, W) float32, like the PyTorch module (stride=1,
    downsample=False, training-mode BN)."""
    w1, b1, g1, be1, w2, b2, g2, be2 = params
    del b1, b2  # cancelled by training-mode BN mean subtraction (see reference)
    N, Cin, D, H, W = x_ncdhw.shape
    Cout = w1.shape[0]
    assert Cin == Cout == 4, "kernel specialized for C=4 (identity shortcut, 2*C==8 tap pairs)"
    C = Cout
    NQ = N * D * H * W
    KPAD = 112                       # 27*C = 108 rounded up to a multiple of 8
    assert 27 * C <= KPAD

    # NCDHW -> (C, N*D*H*W): channels on sublanes, flat (n,d,h,w) on lanes.
    x = jnp.transpose(x_ncdhw, (1, 0, 2, 3, 4)).reshape(C, NQ).astype(jnp.float32)
    x2 = jnp.concatenate([x, x], axis=0)                    # (8, NQ), dup rows

    def prep_w(w, dup_rows):
        # (Cout, Cin, 3, 3, 3) -> (Cout, 27*Cin) tap-major columns, pad K->112.
        wk = jnp.transpose(w, (0, 2, 3, 4, 1)).reshape(Cout, 27 * Cin)
        wk = jnp.pad(wk, ((0, 0), (0, KPAD - 27 * Cin)))
        if dup_rows:
            wk = jnp.concatenate([wk, wk], axis=0)
        return wk.astype(jnp.float32)

    w1k = prep_w(w1, True)           # (8, 112)  row-duplicated
    w2k = prep_w(w2, False)          # (4, 112)

    # Per-channel BN affine params packed column-wise: [g1, be1, g2, be2].
    pp4 = jnp.stack([g1, be1, g2, be2], axis=1).astype(jnp.float32)   # (C, 4)
    pp = jnp.concatenate([pp4, pp4], axis=0)                          # (8, 4)

    # Lane-roll shifts and per-tap (kd-1, kh-1, kw-1) deltas (static).
    shifts, deltas = [], []
    for kd in range(3):
        for kh in range(3):
            for kw in range(3):
                off = (kd - 1) * H * W + (kh - 1) * W + (kw - 1)
                shifts.append((-off) % NQ)   # roll so result[q] = src[q + off]
                deltas.append((kd - 1, kh - 1, kw - 1))

    kernel = _make_kernel(C, N, D, H, W, KPAD, tuple(shifts), tuple(deltas))
    vmem = pl.BlockSpec(memory_space=pltpu.MemorySpace.VMEM)

    out = pl.pallas_call(
        kernel,
        out_shape=jax.ShapeDtypeStruct((C, NQ), jnp.float32),
        in_specs=[vmem] * 4,
        out_specs=vmem,
        scratch_shapes=[pltpu.VMEM((KPAD, NQ), jnp.float32)],   # im2col buffer
    )(x2, w1k, w2k, pp)

    out = out.reshape(C, N, D, H, W)
    return jnp.transpose(out, (1, 0, 2, 3, 4))  # back to NCDHW


def resblock_reference(x_ncdhw, params):
    """Pure-JAX reference with the module's exact semantics (bias kept)."""
    w1, b1, g1, be1, w2, b2, g2, be2 = params
    x = jnp.transpose(x_ncdhw, (0, 2, 3, 4, 1))  # NDHWC

    def conv(h, w, b):
        k = jnp.transpose(w, (2, 3, 4, 1, 0))  # DHWIO
        y = jax.lax.conv_general_dilated(
            h, k, window_strides=(1, 1, 1), padding=((1, 1),) * 3,
            dimension_numbers=("NDHWC", "DHWIO", "NDHWC"),
            precision=jax.lax.Precision.HIGHEST)
        return y + b

    def bn(h, g, be):
        m = jnp.mean(h, axis=(0, 1, 2, 3), keepdims=True)
        v = jnp.mean((h - m) ** 2, axis=(0, 1, 2, 3), keepdims=True)
        return (h - m) * jax.lax.rsqrt(v + EPS) * g + be

    h = jax.nn.relu(bn(conv(x, w1, b1), g1, be1))
    h = bn(conv(h, w2, b2), g2, be2)
    out = jax.nn.relu(h + x)
    return jnp.transpose(out, (0, 4, 1, 2, 3))


if __name__ == "__main__":
    N, C, D, H, W = 2, 4, 8, 8, 8  # in_channels = out_channels = 4, stride=1

    key = jax.random.PRNGKey(0)
    ks = jax.random.split(key, 9)
    x = jax.random.normal(ks[0], (N, C, D, H, W), jnp.float32)
    w1 = 0.1 * jax.random.normal(ks[1], (C, C, 3, 3, 3), jnp.float32)
    b1 = 0.1 * jax.random.normal(ks[2], (C,), jnp.float32)
    w2 = 0.1 * jax.random.normal(ks[3], (C, C, 3, 3, 3), jnp.float32)
    b2 = 0.1 * jax.random.normal(ks[4], (C,), jnp.float32)
    g1 = 1.0 + 0.1 * jax.random.normal(ks[5], (C,), jnp.float32)
    be1 = 0.1 * jax.random.normal(ks[6], (C,), jnp.float32)
    g2 = 1.0 + 0.1 * jax.random.normal(ks[7], (C,), jnp.float32)
    be2 = 0.1 * jax.random.normal(ks[8], (C,), jnp.float32)
    params = (w1, b1, g1, be1, w2, b2, g2, be2)

    out = jax.block_until_ready(resblock_forward(x, params))
    ref = jax.block_until_ready(resblock_reference(x, params))
    np.testing.assert_allclose(np.asarray(out), np.asarray(ref), rtol=1e-3, atol=1e-3)
    print("KERNEL_OK")
</pallas_src>

<mosaic_0001>
module attributes {stable_mosaic.version = 11 : i64} {
  func.func @kernel(%arg0: memref<8x1024xf32, #tpu.memory_space<vmem>>, %arg1: memref<8x112xf32, #tpu.memory_space<vmem>>, %arg2: memref<4x112xf32, #tpu.memory_space<vmem>>, %arg3: memref<8x4xf32, #tpu.memory_space<vmem>>, %arg4: memref<4x1024xf32, #tpu.memory_space<vmem>>, %arg5: memref<112x1024xf32, #tpu.memory_space<vmem>>) attributes {dimension_semantics = [], scalar_prefetch = 0 : i64, scratch_operands = 1 : i64, tpu.core_type = #tpu.core_type<tc>} {
    %0 = tpu.iota {dimensions = array<i32: 1>} : vector<8x1024xi32>
    %c511_i32 = arith.constant 511 : i32
    %1 = vector.broadcast %c511_i32 : i32 to vector<8x1024xi32>
    %2 = arith.andi %0, %1 : vector<8x1024xi32>
    %c6_i32 = arith.constant 6 : i32
    %3 = vector.broadcast %c6_i32 : i32 to vector<8x1024xi32>
    %4 = arith.shrsi %2, %3 : vector<8x1024xi32>
    %c3_i32 = arith.constant 3 : i32
    %5 = vector.broadcast %c3_i32 : i32 to vector<8x1024xi32>
    %6 = arith.shrsi %0, %5 : vector<8x1024xi32>
    %c7_i32 = arith.constant 7 : i32
    %7 = vector.broadcast %c7_i32 : i32 to vector<8x1024xi32>
    %8 = arith.andi %6, %7 : vector<8x1024xi32>
    %c7_i32_0 = arith.constant 7 : i32
    %9 = vector.broadcast %c7_i32_0 : i32 to vector<8x1024xi32>
    %10 = arith.andi %0, %9 : vector<8x1024xi32>
    %11 = tpu.iota {dimensions = array<i32: 0>} : vector<8x1xi32>
    %c4_i32 = arith.constant 4 : i32
    %12 = vector.broadcast %c4_i32 : i32 to vector<8x1xi32>
    %13 = arith.cmpi slt, %11, %12 : vector<8x1xi32>
    %c0 = arith.constant 0 : index
    %c0_1 = arith.constant 0 : index
    %14 = vector.load %arg0[%c0, %c0_1] : memref<8x1024xf32, #tpu.memory_space<vmem>>, vector<8x1024xf32>
    %c73_i32 = arith.constant 73 : i32
    %15 = tpu.dynamic_rotate %14 by %c73_i32 dim 1 : vector<8x1024xf32>, i32 -> vector<8x1024xf32>
    %c72_i32 = arith.constant 72 : i32
    %16 = tpu.dynamic_rotate %14 by %c72_i32 dim 1 : vector<8x1024xf32>, i32 -> vector<8x1024xf32>
    %17 = vector.shape_cast %13 : vector<8x1xi1> to vector<8x1xi1>
    %18 = vector.broadcast %17 : vector<8x1xi1> to vector<8x1024xi1>
    %19 = arith.select %18, %15, %16 : vector<8x1024xi1>, vector<8x1024xf32>
    %c-1_i32 = arith.constant -1 : i32
    %20 = vector.broadcast %c-1_i32 : i32 to vector<8x1024xi32>
    %21 = arith.addi %4, %20 : vector<8x1024xi32>
    %c0_i32 = arith.constant 0 : i32
    %22 = vector.broadcast %c0_i32 : i32 to vector<8x1024xi32>
    %23 = arith.cmpi sge, %21, %22 : vector<8x1024xi32>
    %c-1_i32_2 = arith.constant -1 : i32
    %24 = vector.broadcast %c-1_i32_2 : i32 to vector<8x1024xi32>
    %25 = arith.addi %8, %24 : vector<8x1024xi32>
    %c0_i32_3 = arith.constant 0 : i32
    %26 = vector.broadcast %c0_i32_3 : i32 to vector<8x1024xi32>
    %27 = arith.cmpi sge, %25, %26 : vector<8x1024xi32>
    %c-1_i32_4 = arith.constant -1 : i32
    %c0_i32_5 = arith.constant 0 : i32
    %28 = vector.broadcast %c-1_i32_4 : i32 to vector<8x1xi32>
    %29 = vector.broadcast %c0_i32_5 : i32 to vector<8x1xi32>
    %30 = arith.select %13, %28, %29 : vector<8x1xi1>, vector<8x1xi32>
    %31 = vector.broadcast %30 : vector<8x1xi32> to vector<8x1024xi32>
    %32 = arith.addi %10, %31 : vector<8x1024xi32>
    %c0_i32_6 = arith.constant 0 : i32
    %33 = vector.broadcast %c0_i32_6 : i32 to vector<8x1024xi32>
    %34 = arith.cmpi sge, %32, %33 : vector<8x1024xi32>
    %35 = arith.andi %23, %27 : vector<8x1024xi1>
    %36 = arith.andi %35, %34 : vector<8x1024xi1>
    %cst = arith.constant 0.000000e+00 : f32
    %37 = vector.broadcast %cst : f32 to vector<8x1024xf32>
    %38 = arith.select %36, %19, %37 : vector<8x1024xi1>, vector<8x1024xf32>
    %c0_7 = arith.constant 0 : index
    %c0_8 = arith.constant 0 : index
    %39 = vector.load %arg5[%c0_7, %c0_8] : memref<112x1024xf32, #tpu.memory_space<vmem>>, vector<8x1024xf32>
    tpu.vector_store %arg5[%c0_7, %c0_8], %38 {strides = array<i32>} : memref<112x1024xf32, #tpu.memory_space<vmem>>, vector<8x1024xf32>,
    %c71_i32 = arith.constant 71 : i32
    %40 = tpu.dynamic_rotate %14 by %c71_i32 dim 1 : vector<8x1024xf32>, i32 -> vector<8x1024xf32>
    %c65_i32 = arith.constant 65 : i32
    %41 = tpu.dynamic_rotate %14 by %c65_i32 dim 1 : vector<8x1024xf32>, i32 -> vector<8x1024xf32>
    %42 = vector.shape_cast %13 : vector<8x1xi1> to vector<8x1xi1>
    %43 = vector.broadcast %42 : vector<8x1xi1> to vector<8x1024xi1>
    %44 = arith.select %43, %40, %41 : vector<8x1024xi1>, vector<8x1024xf32>
    %c-1_i32_9 = arith.constant -1 : i32
    %45 = vector.broadcast %c-1_i32_9 : i32 to vector<8x1024xi32>
    %46 = arith.addi %4, %45 : vector<8x1024xi32>
    %c0_i32_10 = arith.constant 0 : i32
    %47 = vector.broadcast %c0_i32_10 : i32 to vector<8x1024xi32>
    %48 = arith.cmpi sge, %46, %47 : vector<8x1024xi32>
    %c-1_i32_11 = arith.constant -1 : i32
    %c0_i32_12 = arith.constant 0 : i32
    %49 = vector.broadcast %c-1_i32_11 : i32 to vector<8x1xi32>
    %50 = vector.broadcast %c0_i32_12 : i32 to vector<8x1xi32>
    %51 = arith.select %13, %49, %50 : vector<8x1xi1>, vector<8x1xi32>
    %52 = vector.broadcast %51 : vector<8x1xi32> to vector<8x1024xi32>
    %53 = arith.addi %8, %52 : vector<8x1024xi32>
    %c0_i32_13 = arith.constant 0 : i32
    %54 = vector.broadcast %c0_i32_13 : i32 to vector<8x1024xi32>
    %55 = arith.cmpi sge, %53, %54 : vector<8x1024xi32>
    %c1_i32 = arith.constant 1 : i32
    %c-1_i32_14 = arith.constant -1 : i32
    %56 = vector.broadcast %c1_i32 : i32 to vector<8x1xi32>
    %57 = vector.broadcast %c-1_i32_14 : i32 to vector<8x1xi32>
    %58 = arith.select %13, %56, %57 : vector<8x1xi1>, vector<8x1xi32>
    %59 = vector.broadcast %58 : vector<8x1xi32> to vector<8x1024xi32>
    %60 = arith.addi %10, %59 : vector<8x1024xi32>
    %c0_i32_15 = arith.constant 0 : i32
    %61 = vector.broadcast %c0_i32_15 : i32 to vector<8x1024xi32>
    %62 = arith.cmpi sge, %60, %61 : vector<8x1024xi32>
    %c8_i32 = arith.constant 8 : i32
    %63 = vector.broadcast %c8_i32 : i32 to vector<8x1024xi32>
    %64 = arith.cmpi slt, %60, %63 : vector<8x1024xi32>
    %65 = arith.andi %48, %55 : vector<8x1024xi1>
    %66 = arith.andi %65, %62 : vector<8x1024xi1>
    %67 = arith.andi %66, %64 : vector<8x1024xi1>
    %cst_16 = arith.constant 0.000000e+00 : f32
    %68 = vector.broadcast %cst_16 : f32 to vector<8x1024xf32>
    %69 = arith.select %67, %44, %68 : vector<8x1024xi1>, vector<8x1024xf32>
    %c8 = arith.constant 8 : index
    %c0_17 = arith.constant 0 : index
    %70 = vector.load %arg5[%c8, %c0_17] : memref<112x1024xf32, #tpu.memory_space<vmem>>, vector<8x1024xf32>
    tpu.vector_store %arg5[%c8, %c0_17], %69 {strides = array<i32>} : memref<112x1024xf32, #tpu.memory_space<vmem>>, vector<8x1024xf32>,
    %c64_i32 = arith.constant 64 : i32
    %71 = tpu.dynamic_rotate %14 by %c64_i32 dim 1 : vector<8x1024xf32>, i32 -> vector<8x1024xf32>
    %c63_i32 = arith.constant 63 : i32
    %72 = tpu.dynamic_rotate %14 by %c63_i32 dim 1 : vector<8x1024xf32>, i32 -> vector<8x1024xf32>
    %73 = vector.shape_cast %13 : vector<8x1xi1> to vector<8x1xi1>
    %74 = vector.broadcast %73 : vector<8x1xi1> to vector<8x1024xi1>
    %75 = arith.select %74, %71, %72 : vector<8x1024xi1>, vector<8x1024xf32>
    %c-1_i32_18 = arith.constant -1 : i32
    %76 = vector.broadcast %c-1_i32_18 : i32 to vector<8x1024xi32>
    %77 = arith.addi %4, %76 : vector<8x1024xi32>
    %c0_i32_19 = arith.constant 0 : i32
    %78 = vector.broadcast %c0_i32_19 : i32 to vector<8x1024xi32>
    %79 = arith.cmpi sge, %77, %78 : vector<8x1024xi32>
    %c0_i32_20 = arith.constant 0 : i32
    %c1_i32_21 = arith.constant 1 : i32
    %80 = vector.broadcast %c0_i32_20 : i32 to vector<8x1xi32>
    %81 = vector.broadcast %c1_i32_21 : i32 to vector<8x1xi32>
    %82 = arith.select %13, %80, %81 : vector<8x1xi1>, vector<8x1xi32>
    %83 = vector.broadcast %82 : vector<8x1xi32> to vector<8x1024xi32>
    %84 = arith.addi %10, %83 : vector<8x1024xi32>
    %c8_i32_22 = arith.constant 8 : i32
    %85 = vector.broadcast %c8_i32_22 : i32 to vector<8x1024xi32>
    %86 = arith.cmpi slt, %84, %85 : vector<8x1024xi32>
    %87 = arith.andi %79, %86 : vector<8x1024xi1>
    %cst_23 = arith.constant 0.000000e+00 : f32
    %88 = vector.broadcast %cst_23 : f32 to vector<8x1024xf32>
    %89 = arith.select %87, %75, %88 : vector<8x1024xi1>, vector<8x1024xf32>
    %c16 = arith.constant 16 : index
    %c0_24 = arith.constant 0 : index
    %90 = vector.load %arg5[%c16, %c0_24] : memref<112x1024xf32, #tpu.memory_space<vmem>>, vector<8x1024xf32>
    tpu.vector_store %arg5[%c16, %c0_24], %89 {strides = array<i32>} : memref<112x1024xf32, #tpu.memory_space<vmem>>, vector<8x1024xf32>,
    %c57_i32 = arith.constant 57 : i32
    %91 = tpu.dynamic_rotate %14 by %c57_i32 dim 1 : vector<8x1024xf32>, i32 -> vector<8x1024xf32>
    %c56_i32 = arith.constant 56 : i32
    %92 = tpu.dynamic_rotate %14 by %c56_i32 dim 1 : vector<8x1024xf32>, i32 -> vector<8x1024xf32>
    %93 = vector.shape_cast %13 : vector<8x1xi1> to vector<8x1xi1>
    %94 = vector.broadcast %93 : vector<8x1xi1> to vector<8x1024xi1>
    %95 = arith.select %94, %91, %92 : vector<8x1024xi1>, vector<8x1024xf32>
    %c-1_i32_25 = arith.constant -1 : i32
    %96 = vector.broadcast %c-1_i32_25 : i32 to vector<8x1024xi32>
    %97 = arith.addi %4, %96 : vector<8x1024xi32>
    %c0_i32_26 = arith.constant 0 : i32
    %98 = vector.broadcast %c0_i32_26 : i32 to vector<8x1024xi32>
    %99 = arith.cmpi sge, %97, %98 : vector<8x1024xi32>
    %c1_i32_27 = arith.constant 1 : i32
    %100 = vector.broadcast %c1_i32_27 : i32 to vector<8x1024xi32>
    %101 = arith.addi %8, %100 : vector<8x1024xi32>
    %c8_i32_28 = arith.constant 8 : i32
    %102 = vector.broadcast %c8_i32_28 : i32 to vector<8x1024xi32>
    %103 = arith.cmpi slt, %101, %102 : vector<8x1024xi32>
    %c-1_i32_29 = arith.constant -1 : i32
    %c0_i32_30 = arith.constant 0 : i32
    %104 = vector.broadcast %c-1_i32_29 : i32 to vector<8x1xi32>
    %105 = vector.broadcast %c0_i32_30 : i32 to vector<8x1xi32>
    %106 = arith.select %13, %104, %105 : vector<8x1xi1>, vector<8x1xi32>
    %107 = vector.broadcast %106 : vector<8x1xi32> to vector<8x1024xi32>
    %108 = arith.addi %10, %107 : vector<8x1024xi32>
    %c0_i32_31 = arith.constant 0 : i32
    %109 = vector.broadcast %c0_i32_31 : i32 to vector<8x1024xi32>
    %110 = arith.cmpi sge, %108, %109 : vector<8x1024xi32>
    %111 = arith.andi %99, %103 : vector<8x1024xi1>
    %112 = arith.andi %111, %110 : vector<8x1024xi1>
    %cst_32 = arith.constant 0.000000e+00 : f32
    %113 = vector.broadcast %cst_32 : f32 to vector<8x1024xf32>
    %114 = arith.select %112, %95, %113 : vector<8x1024xi1>, vector<8x1024xf32>
    %c24 = arith.constant 24 : index
    %c0_33 = arith.constant 0 : index
    %115 = vector.load %arg5[%c24, %c0_33] : memref<112x1024xf32, #tpu.memory_space<vmem>>, vector<8x1024xf32>
    tpu.vector_store %arg5[%c24, %c0_33], %114 {strides = array<i32>} : memref<112x1024xf32, #tpu.memory_space<vmem>>, vector<8x1024xf32>,
    %c55_i32 = arith.constant 55 : i32
    %116 = tpu.dynamic_rotate %14 by %c55_i32 dim 1 : vector<8x1024xf32>, i32 -> vector<8x1024xf32>
    %c9_i32 = arith.constant 9 : i32
    %117 = tpu.dynamic_rotate %14 by %c9_i32 dim 1 : vector<8x1024xf32>, i32 -> vector<8x1024xf32>
    %118 = vector.shape_cast %13 : vector<8x1xi1> to vector<8x1xi1>
    %119 = vector.broadcast %118 : vector<8x1xi1> to vector<8x1024xi1>
    %120 = arith.select %119, %116, %117 : vector<8x1024xi1>, vector<8x1024xf32>
    %c-1_i32_34 = arith.constant -1 : i32
    %c0_i32_35 = arith.constant 0 : i32
    %121 = vector.broadcast %c-1_i32_34 : i32 to vector<8x1xi32>
    %122 = vector.broadcast %c0_i32_35 : i32 to vector<8x1xi32>
    %123 = arith.select %13, %121, %122 : vector<8x1xi1>, vector<8x1xi32>
    %124 = vector.broadcast %123 : vector<8x1xi32> to vector<8x1024xi32>
    %125 = arith.addi %4, %124 : vector<8x1024xi32>
    %c0_i32_36 = arith.constant 0 : i32
    %126 = vector.broadcast %c0_i32_36 : i32 to vector<8x1024xi32>
    %127 = arith.cmpi sge, %125, %126 : vector<8x1024xi32>
    %c1_i32_37 = arith.constant 1 : i32
    %c-1_i32_38 = arith.constant -1 : i32
    %128 = vector.broadcast %c1_i32_37 : i32 to vector<8x1xi32>
    %129 = vector.broadcast %c-1_i32_38 : i32 to vector<8x1xi32>
    %130 = arith.select %13, %128, %129 : vector<8x1xi1>, vector<8x1xi32>
    %131 = vector.broadcast %130 : vector<8x1xi32> to vector<8x1024xi32>
    %132 = arith.addi %8, %131 : vector<8x1024xi32>
    %c0_i32_39 = arith.constant 0 : i32
    %133 = vector.broadcast %c0_i32_39 : i32 to vector<8x1024xi32>
    %134 = arith.cmpi sge, %132, %133 : vector<8x1024xi32>
    %c8_i32_40 = arith.constant 8 : i32
    %135 = vector.broadcast %c8_i32_40 : i32 to vector<8x1024xi32>
    %136 = arith.cmpi slt, %132, %135 : vector<8x1024xi32>
    %c1_i32_41 = arith.constant 1 : i32
    %c-1_i32_42 = arith.constant -1 : i32
    %137 = vector.broadcast %c1_i32_41 : i32 to vector<8x1xi32>
    %138 = vector.broadcast %c-1_i32_42 : i32 to vector<8x1xi32>
    %139 = arith.select %13, %137, %138 : vector<8x1xi1>, vector<8x1xi32>
    %140 = vector.broadcast %139 : vector<8x1xi32> to vector<8x1024xi32>
    %141 = arith.addi %10, %140 : vector<8x1024xi32>
    %c0_i32_43 = arith.constant 0 : i32
    %142 = vector.broadcast %c0_i32_43 : i32 to vector<8x1024xi32>
    %143 = arith.cmpi sge, %141, %142 : vector<8x1024xi32>
    %c8_i32_44 = arith.constant 8 : i32
    %144 = vector.broadcast %c8_i32_44 : i32 to vector<8x1024xi32>
    %145 = arith.cmpi slt, %141, %144 : vector<8x1024xi32>
    %146 = arith.andi %127, %134 : vector<8x1024xi1>
    %147 = arith.andi %146, %136 : vector<8x1024xi1>
    %148 = arith.andi %147, %143 : vector<8x1024xi1>
    %149 = arith.andi %148, %145 : vector<8x1024xi1>
    %cst_45 = arith.constant 0.000000e+00 : f32
    %150 = vector.broadcast %cst_45 : f32 to vector<8x1024xf32>
    %151 = arith.select %149, %120, %150 : vector<8x1024xi1>, vector<8x1024xf32>
    %c32 = arith.constant 32 : index
    %c0_46 = arith.constant 0 : index
    %152 = vector.load %arg5[%c32, %c0_46] : memref<112x1024xf32, #tpu.memory_space<vmem>>, vector<8x1024xf32>
    tpu.vector_store %arg5[%c32, %c0_46], %151 {strides = array<i32>} : memref<112x1024xf32, #tpu.memory_space<vmem>>, vector<8x1024xf32>,
    %c8_i32_47 = arith.constant 8 : i32
    %153 = tpu.dynamic_rotate %14 by %c8_i32_47 dim 1 : vector<8x1024xf32>, i32 -> vector<8x1024xf32>
    %c7_i32_48 = arith.constant 7 : i32
    %154 = tpu.dynamic_rotate %14 by %c7_i32_48 dim 1 : vector<8x1024xf32>, i32 -> vector<8x1024xf32>
    %155 = vector.shape_cast %13 : vector<8x1xi1> to vector<8x1xi1>
    %156 = vector.broadcast %155 : vector<8x1xi1> to vector<8x1024xi1>
    %157 = arith.select %156, %153, %154 : vector<8x1024xi1>, vector<8x1024xf32>
    %c-1_i32_49 = arith.constant -1 : i32
    %158 = vector.broadcast %c-1_i32_49 : i32 to vector<8x1024xi32>
    %159 = arith.addi %8, %158 : vector<8x1024xi32>
    %c0_i32_50 = arith.constant 0 : i32
    %160 = vector.broadcast %c0_i32_50 : i32 to vector<8x1024xi32>
    %161 = arith.cmpi sge, %159, %160 : vector<8x1024xi32>
    %c0_i32_51 = arith.constant 0 : i32
    %c1_i32_52 = arith.constant 1 : i32
    %162 = vector.broadcast %c0_i32_51 : i32 to vector<8x1xi32>
    %163 = vector.broadcast %c1_i32_52 : i32 to vector<8x1xi32>
    %164 = arith.select %13, %162, %163 : vector<8x1xi1>, vector<8x1xi32>
    %165 = vector.broadcast %164 : vector<8x1xi32> to vector<8x1024xi32>
    %166 = arith.addi %10, %165 : vector<8x1024xi32>
    %c8_i32_53 = arith.constant 8 : i32
    %167 = vector.broadcast %c8_i32_53 : i32 to vector<8x1024xi32>
    %168 = arith.cmpi slt, %166, %167 : vector<8x1024xi32>
    %169 = arith.andi %161, %168 : vector<8x1024xi1>
    %cst_54 = arith.constant 0.000000e+00 : f32
    %170 = vector.broadcast %cst_54 : f32 to vector<8x1024xf32>
    %171 = arith.select %169, %157, %170 : vector<8x1024xi1>, vector<8x1024xf32>
    %c40 = arith.constant 40 : index
    %c0_55 = arith.constant 0 : index
    %172 = vector.load %arg5[%c40, %c0_55] : memref<112x1024xf32, #tpu.memory_space<vmem>>, vector<8x1024xf32>
    tpu.vector_store %arg5[%c40, %c0_55], %171 {strides = array<i32>} : memref<112x1024xf32, #tpu.memory_space<vmem>>, vector<8x1024xf32>,
    %c1_i32_56 = arith.constant 1 : i32
    %173 = tpu.dynamic_rotate %14 by %c1_i32_56 dim 1 : vector<8x1024xf32>, i32 -> vector<8x1024xf32>
    %c0_i32_57 = arith.constant 0 : i32
    %174 = tpu.dynamic_rotate %14 by %c0_i32_57 dim 1 : vector<8x1024xf32>, i32 -> vector<8x1024xf32>
    %175 = vector.shape_cast %13 : vector<8x1xi1> to vector<8x1xi1>
    %176 = vector.broadcast %175 : vector<8x1xi1> to vector<8x1024xi1>
    %177 = arith.select %176, %173, %174 : vector<8x1024xi1>, vector<8x1024xf32>
    %c-1_i32_58 = arith.constant -1 : i32
    %c0_i32_59 = arith.constant 0 : i32
    %178 = vector.broadcast %c-1_i32_58 : i32 to vector<8x1xi32>
    %179 = vector.broadcast %c0_i32_59 : i32 to vector<8x1xi32>
    %180 = arith.select %13, %178, %179 : vector<8x1xi1>, vector<8x1xi32>
    %181 = vector.broadcast %180 : vector<8x1xi32> to vector<8x1024xi32>
    %182 = arith.addi %10, %181 : vector<8x1024xi32>
    %c0_i32_60 = arith.constant 0 : i32
    %183 = vector.broadcast %c0_i32_60 : i32 to vector<8x1024xi32>
    %184 = arith.cmpi sge, %182, %183 : vector<8x1024xi32>
    %cst_61 = arith.constant 0.000000e+00 : f32
    %185 = vector.broadcast %cst_61 : f32 to vector<8x1024xf32>
    %186 = arith.select %184, %177, %185 : vector<8x1024xi1>, vector<8x1024xf32>
    %c48 = arith.constant 48 : index
    %c0_62 = arith.constant 0 : index
    %187 = vector.load %arg5[%c48, %c0_62] : memref<112x1024xf32, #tpu.memory_space<vmem>>, vector<8x1024xf32>
    tpu.vector_store %arg5[%c48, %c0_62], %186 {strides = array<i32>} : memref<112x1024xf32, #tpu.memory_space<vmem>>, vector<8x1024xf32>,
    %c1023_i32 = arith.constant 1023 : i32
    %188 = tpu.dynamic_rotate %14 by %c1023_i32 dim 1 : vector<8x1024xf32>, i32 -> vector<8x1024xf32>
    %c1017_i32 = arith.constant 1017 : i32
    %189 = tpu.dynamic_rotate %14 by %c1017_i32 dim 1 : vector<8x1024xf32>, i32 -> vector<8x1024xf32>
    %190 = vector.shape_cast %13 : vector<8x1xi1> to vector<8x1xi1>
    %191 = vector.broadcast %190 : vector<8x1xi1> to vector<8x1024xi1>
    %192 = arith.select %191, %188, %189 : vector<8x1024xi1>, vector<8x1024xf32>
    %c0_i32_63 = arith.constant 0 : i32
    %c1_i32_64 = arith.constant 1 : i32
    %193 = vector.broadcast %c0_i32_63 : i32 to vector<8x1xi32>
    %194 = vector.broadcast %c1_i32_64 : i32 to vector<8x1xi32>
    %195 = arith.select %13, %193, %194 : vector<8x1xi1>, vector<8x1xi32>
    %196 = vector.broadcast %195 : vector<8x1xi32> to vector<8x1024xi32>
    %197 = arith.addi %8, %196 : vector<8x1024xi32>
    %c8_i32_65 = arith.constant 8 : i32
    %198 = vector.broadcast %c8_i32_65 : i32 to vector<8x1024xi32>
    %199 = arith.cmpi slt, %197, %198 : vector<8x1024xi32>
    %c1_i32_66 = arith.constant 1 : i32
    %c-1_i32_67 = arith.constant -1 : i32
    %200 = vector.broadcast %c1_i32_66 : i32 to vector<8x1xi32>
    %201 = vector.broadcast %c-1_i32_67 : i32 to vector<8x1xi32>
    %202 = arith.select %13, %200, %201 : vector<8x1xi1>, vector<8x1xi32>
    %203 = vector.broadcast %202 : vector<8x1xi32> to vector<8x1024xi32>
    %204 = arith.addi %10, %203 : vector<8x1024xi32>
    %c0_i32_68 = arith.constant 0 : i32
    %205 = vector.broadcast %c0_i32_68 : i32 to vector<8x1024xi32>
    %206 = arith.cmpi sge, %204, %205 : vector<8x1024xi32>
    %c8_i32_69 = arith.constant 8 : i32
    %207 = vector.broadcast %c8_i32_69 : i32 to vector<8x1024xi32>
    %208 = arith.cmpi slt, %204, %207 : vector<8x1024xi32>
    %209 = arith.andi %199, %206 : vector<8x1024xi1>
    %210 = arith.andi %209, %208 : vector<8x1024xi1>
    %cst_70 = arith.constant 0.000000e+00 : f32
    %211 = vector.broadcast %cst_70 : f32 to vector<8x1024xf32>
    %212 = arith.select %210, %192, %211 : vector<8x1024xi1>, vector<8x1024xf32>
    %c56 = arith.constant 56 : index
    %c0_71 = arith.constant 0 : index
    %213 = vector.load %arg5[%c56, %c0_71] : memref<112x1024xf32, #tpu.memory_space<vmem>>, vector<8x1024xf32>
    tpu.vector_store %arg5[%c56, %c0_71], %212 {strides = array<i32>} : memref<112x1024xf32, #tpu.memory_space<vmem>>, vector<8x1024xf32>,
    %c1016_i32 = arith.constant 1016 : i32
    %214 = tpu.dynamic_rotate %14 by %c1016_i32 dim 1 : vector<8x1024xf32>, i32 -> vector<8x1024xf32>
    %c1015_i32 = arith.constant 1015 : i32
    %215 = tpu.dynamic_rotate %14 by %c1015_i32 dim 1 : vector<8x1024xf32>, i32 -> vector<8x1024xf32>
    %216 = vector.shape_cast %13 : vector<8x1xi1> to vector<8x1xi1>
    %217 = vector.broadcast %216 : vector<8x1xi1> to vector<8x1024xi1>
    %218 = arith.select %217, %214, %215 : vector<8x1024xi1>, vector<8x1024xf32>
    %c1_i32_72 = arith.constant 1 : i32
    %219 = vector.broadcast %c1_i32_72 : i32 to vector<8x1024xi32>
    %220 = arith.addi %8, %219 : vector<8x1024xi32>
    %c8_i32_73 = arith.constant 8 : i32
    %221 = vector.broadcast %c8_i32_73 : i32 to vector<8x1024xi32>
    %222 = arith.cmpi slt, %220, %221 : vector<8x1024xi32>
    %c0_i32_74 = arith.constant 0 : i32
    %c1_i32_75 = arith.constant 1 : i32
    %223 = vector.broadcast %c0_i32_74 : i32 to vector<8x1xi32>
    %224 = vector.broadcast %c1_i32_75 : i32 to vector<8x1xi32>
    %225 = arith.select %13, %223, %224 : vector<8x1xi1>, vector<8x1xi32>
    %226 = vector.broadcast %225 : vector<8x1xi32> to vector<8x1024xi32>
    %227 = arith.addi %10, %226 : vector<8x1024xi32>
    %c8_i32_76 = arith.constant 8 : i32
    %228 = vector.broadcast %c8_i32_76 : i32 to vector<8x1024xi32>
    %229 = arith.cmpi slt, %227, %228 : vector<8x1024xi32>
    %230 = arith.andi %222, %229 : vector<8x1024xi1>
    %cst_77 = arith.constant 0.000000e+00 : f32
    %231 = vector.broadcast %cst_77 : f32 to vector<8x1024xf32>
    %232 = arith.select %230, %218, %231 : vector<8x1024xi1>, vector<8x1024xf32>
    %c64 = arith.constant 64 : index
    %c0_78 = arith.constant 0 : index
    %233 = vector.load %arg5[%c64, %c0_78] : memref<112x1024xf32, #tpu.memory_space<vmem>>, vector<8x1024xf32>
    tpu.vector_store %arg5[%c64, %c0_78], %232 {strides = array<i32>} : memref<112x1024xf32, #tpu.memory_space<vmem>>, vector<8x1024xf32>,
    %c969_i32 = arith.constant 969 : i32
    %234 = tpu.dynamic_rotate %14 by %c969_i32 dim 1 : vector<8x1024xf32>, i32 -> vector<8x1024xf32>
    %c968_i32 = arith.constant 968 : i32
    %235 = tpu.dynamic_rotate %14 by %c968_i32 dim 1 : vector<8x1024xf32>, i32 -> vector<8x1024xf32>
    %236 = vector.shape_cast %13 : vector<8x1xi1> to vector<8x1xi1>
    %237 = vector.broadcast %236 : vector<8x1xi1> to vector<8x1024xi1>
    %238 = arith.select %237, %234, %235 : vector<8x1024xi1>, vector<8x1024xf32>
    %c1_i32_79 = arith.constant 1 : i32
    %239 = vector.broadcast %c1_i32_79 : i32 to vector<8x1024xi32>
    %240 = arith.addi %4, %239 : vector<8x1024xi32>
    %c8_i32_80 = arith.constant 8 : i32
    %241 = vector.broadcast %c8_i32_80 : i32 to vector<8x1024xi32>
    %242 = arith.cmpi slt, %240, %241 : vector<8x1024xi32>
    %c-1_i32_81 = arith.constant -1 : i32
    %243 = vector.broadcast %c-1_i32_81 : i32 to vector<8x1024xi32>
    %244 = arith.addi %8, %243 : vector<8x1024xi32>
    %c0_i32_82 = arith.constant 0 : i32
    %245 = vector.broadcast %c0_i32_82 : i32 to vector<8x1024xi32>
    %246 = arith.cmpi sge, %244, %245 : vector<8x1024xi32>
    %c-1_i32_83 = arith.constant -1 : i32
    %c0_i32_84 = arith.constant 0 : i32
    %247 = vector.broadcast %c-1_i32_83 : i32 to vector<8x1xi32>
    %248 = vector.broadcast %c0_i32_84 : i32 to vector<8x1xi32>
    %249 = arith.select %13, %247, %248 : vector<8x1xi1>, vector<8x1xi32>
    %250 = vector.broadcast %249 : vector<8x1xi32> to vector<8x1024xi32>
    %251 = arith.addi %10, %250 : vector<8x1024xi32>
    %c0_i32_85 = arith.constant 0 : i32
    %252 = vector.broadcast %c0_i32_85 : i32 to vector<8x1024xi32>
    %253 = arith.cmpi sge, %251, %252 : vector<8x1024xi32>
    %254 = arith.andi %242, %246 : vector<8x1024xi1>
    %255 = arith.andi %254, %253 : vector<8x1024xi1>
    %cst_86 = arith.constant 0.000000e+00 : f32
    %256 = vector.broadcast %cst_86 : f32 to vector<8x1024xf32>
    %257 = arith.select %255, %238, %256 : vector<8x1024xi1>, vector<8x1024xf32>
    %c72 = arith.constant 72 : index
    %c0_87 = arith.constant 0 : index
    %258 = vector.load %arg5[%c72, %c0_87] : memref<112x1024xf32, #tpu.memory_space<vmem>>, vector<8x1024xf32>
    tpu.vector_store %arg5[%c72, %c0_87], %257 {strides = array<i32>} : memref<112x1024xf32, #tpu.memory_space<vmem>>, vector<8x1024xf32>,
    %c967_i32 = arith.constant 967 : i32
    %259 = tpu.dynamic_rotate %14 by %c967_i32 dim 1 : vector<8x1024xf32>, i32 -> vector<8x1024xf32>
    %c961_i32 = arith.constant 961 : i32
    %260 = tpu.dynamic_rotate %14 by %c961_i32 dim 1 : vector<8x1024xf32>, i32 -> vector<8x1024xf32>
    %261 = vector.shape_cast %13 : vector<8x1xi1> to vector<8x1xi1>
    %262 = vector.broadcast %261 : vector<8x1xi1> to vector<8x1024xi1>
    %263 = arith.select %262, %259, %260 : vector<8x1024xi1>, vector<8x1024xf32>
    %c1_i32_88 = arith.constant 1 : i32
    %264 = vector.broadcast %c1_i32_88 : i32 to vector<8x1024xi32>
    %265 = arith.addi %4, %264 : vector<8x1024xi32>
    %c8_i32_89 = arith.constant 8 : i32
    %266 = vector.broadcast %c8_i32_89 : i32 to vector<8x1024xi32>
    %267 = arith.cmpi slt, %265, %266 : vector<8x1024xi32>
    %c-1_i32_90 = arith.constant -1 : i32
    %c0_i32_91 = arith.constant 0 : i32
    %268 = vector.broadcast %c-1_i32_90 : i32 to vector<8x1xi32>
    %269 = vector.broadcast %c0_i32_91 : i32 to vector<8x1xi32>
    %270 = arith.select %13, %268, %269 : vector<8x1xi1>, vector<8x1xi32>
    %271 = vector.broadcast %270 : vector<8x1xi32> to vector<8x1024xi32>
    %272 = arith.addi %8, %271 : vector<8x1024xi32>
    %c0_i32_92 = arith.constant 0 : i32
    %273 = vector.broadcast %c0_i32_92 : i32 to vector<8x1024xi32>
    %274 = arith.cmpi sge, %272, %273 : vector<8x1024xi32>
    %c1_i32_93 = arith.constant 1 : i32
    %c-1_i32_94 = arith.constant -1 : i32
    %275 = vector.broadcast %c1_i32_93 : i32 to vector<8x1xi32>
    %276 = vector.broadcast %c-1_i32_94 : i32 to vector<8x1xi32>
    %277 = arith.select %13, %275, %276 : vector<8x1xi1>, vector<8x1xi32>
    %278 = vector.broadcast %277 : vector<8x1xi32> to vector<8x1024xi32>
    %279 = arith.addi %10, %278 : vector<8x1024xi32>
    %c0_i32_95 = arith.constant 0 : i32
    %280 = vector.broadcast %c0_i32_95 : i32 to vector<8x1024xi32>
    %281 = arith.cmpi sge, %279, %280 : vector<8x1024xi32>
    %c8_i32_96 = arith.constant 8 : i32
    %282 = vector.broadcast %c8_i32_96 : i32 to vector<8x1024xi32>
    %283 = arith.cmpi slt, %279, %282 : vector<8x1024xi32>
    %284 = arith.andi %267, %274 : vector<8x1024xi1>
    %285 = arith.andi %284, %281 : vector<8x1024xi1>
    %286 = arith.andi %285, %283 : vector<8x1024xi1>
    %cst_97 = arith.constant 0.000000e+00 : f32
    %287 = vector.broadcast %cst_97 : f32 to vector<8x1024xf32>
    %288 = arith.select %286, %263, %287 : vector<8x1024xi1>, vector<8x1024xf32>
    %c80 = arith.constant 80 : index
    %c0_98 = arith.constant 0 : index
    %289 = vector.load %arg5[%c80, %c0_98] : memref<112x1024xf32, #tpu.memory_space<vmem>>, vector<8x1024xf32>
    tpu.vector_store %arg5[%c80, %c0_98], %288 {strides = array<i32>} : memref<112x1024xf32, #tpu.memory_space<vmem>>, vector<8x1024xf32>,
    %c960_i32 = arith.constant 960 : i32
    %290 = tpu.dynamic_rotate %14 by %c960_i32 dim 1 : vector<8x1024xf32>, i32 -> vector<8x1024xf32>
    %c959_i32 = arith.constant 959 : i32
    %291 = tpu.dynamic_rotate %14 by %c959_i32 dim 1 : vector<8x1024xf32>, i32 -> vector<8x1024xf32>
    %292 = vector.shape_cast %13 : vector<8x1xi1> to vector<8x1xi1>
    %293 = vector.broadcast %292 : vector<8x1xi1> to vector<8x1024xi1>
    %294 = arith.select %293, %290, %291 : vector<8x1024xi1>, vector<8x1024xf32>
    %c1_i32_99 = arith.constant 1 : i32
    %295 = vector.broadcast %c1_i32_99 : i32 to vector<8x1024xi32>
    %296 = arith.addi %4, %295 : vector<8x1024xi32>
    %c8_i32_100 = arith.constant 8 : i32
    %297 = vector.broadcast %c8_i32_100 : i32 to vector<8x1024xi32>
    %298 = arith.cmpi slt, %296, %297 : vector<8x1024xi32>
    %c0_i32_101 = arith.constant 0 : i32
    %c1_i32_102 = arith.constant 1 : i32
    %299 = vector.broadcast %c0_i32_101 : i32 to vector<8x1xi32>
    %300 = vector.broadcast %c1_i32_102 : i32 to vector<8x1xi32>
    %301 = arith.select %13, %299, %300 : vector<8x1xi1>, vector<8x1xi32>
    %302 = vector.broadcast %301 : vector<8x1xi32> to vector<8x1024xi32>
    %303 = arith.addi %10, %302 : vector<8x1024xi32>
    %c8_i32_103 = arith.constant 8 : i32
    %304 = vector.broadcast %c8_i32_103 : i32 to vector<8x1024xi32>
    %305 = arith.cmpi slt, %303, %304 : vector<8x1024xi32>
    %306 = arith.andi %298, %305 : vector<8x1024xi1>
    %cst_104 = arith.constant 0.000000e+00 : f32
    %307 = vector.broadcast %cst_104 : f32 to vector<8x1024xf32>
    %308 = arith.select %306, %294, %307 : vector<8x1024xi1>, vector<8x1024xf32>
    %c88 = arith.constant 88 : index
    %c0_105 = arith.constant 0 : index
    %309 = vector.load %arg5[%c88, %c0_105] : memref<112x1024xf32, #tpu.memory_space<vmem>>, vector<8x1024xf32>
    tpu.vector_store %arg5[%c88, %c0_105], %308 {strides = array<i32>} : memref<112x1024xf32, #tpu.memory_space<vmem>>, vector<8x1024xf32>,
    %c953_i32 = arith.constant 953 : i32
    %310 = tpu.dynamic_rotate %14 by %c953_i32 dim 1 : vector<8x1024xf32>, i32 -> vector<8x1024xf32>
    %c952_i32 = arith.constant 952 : i32
    %311 = tpu.dynamic_rotate %14 by %c952_i32 dim 1 : vector<8x1024xf32>, i32 -> vector<8x1024xf32>
    %312 = vector.shape_cast %13 : vector<8x1xi1> to vector<8x1xi1>
    %313 = vector.broadcast %312 : vector<8x1xi1> to vector<8x1024xi1>
    %314 = arith.select %313, %310, %311 : vector<8x1024xi1>, vector<8x1024xf32>
    %c1_i32_106 = arith.constant 1 : i32
    %315 = vector.broadcast %c1_i32_106 : i32 to vector<8x1024xi32>
    %316 = arith.addi %4, %315 : vector<8x1024xi32>
    %c8_i32_107 = arith.constant 8 : i32
    %317 = vector.broadcast %c8_i32_107 : i32 to vector<8x1024xi32>
    %318 = arith.cmpi slt, %316, %317 : vector<8x1024xi32>
    %c1_i32_108 = arith.constant 1 : i32
    %319 = vector.broadcast %c1_i32_108 : i32 to vector<8x1024xi32>
    %320 = arith.addi %8, %319 : vector<8x1024xi32>
    %c8_i32_109 = arith.constant 8 : i32
    %321 = vector.broadcast %c8_i32_109 : i32 to vector<8x1024xi32>
    %322 = arith.cmpi slt, %320, %321 : vector<8x1024xi32>
    %c-1_i32_110 = arith.constant -1 : i32
    %c0_i32_111 = arith.constant 0 : i32
    %323 = vector.broadcast %c-1_i32_110 : i32 to vector<8x1xi32>
    %324 = vector.broadcast %c0_i32_111 : i32 to vector<8x1xi32>
    %325 = arith.select %13, %323, %324 : vector<8x1xi1>, vector<8x1xi32>
    %326 = vector.broadcast %325 : vector<8x1xi32> to vector<8x1024xi32>
    %327 = arith.addi %10, %326 : vector<8x1024xi32>
    %c0_i32_112 = arith.constant 0 : i32
    %328 = vector.broadcast %c0_i32_112 : i32 to vector<8x1024xi32>
    %329 = arith.cmpi sge, %327, %328 : vector<8x1024xi32>
    %330 = arith.andi %318, %322 : vector<8x1024xi1>
    %331 = arith.andi %330, %329 : vector<8x1024xi1>
    %cst_113 = arith.constant 0.000000e+00 : f32
    %332 = vector.broadcast %cst_113 : f32 to vector<8x1024xf32>
    %333 = arith.select %331, %314, %332 : vector<8x1024xi1>, vector<8x1024xf32>
    %c96 = arith.constant 96 : index
    %c0_114 = arith.constant 0 : index
    %334 = vector.load %arg5[%c96, %c0_114] : memref<112x1024xf32, #tpu.memory_space<vmem>>, vector<8x1024xf32>
    tpu.vector_store %arg5[%c96, %c0_114], %333 {strides = array<i32>} : memref<112x1024xf32, #tpu.memory_space<vmem>>, vector<8x1024xf32>,
    %c951_i32 = arith.constant 951 : i32
    %335 = tpu.dynamic_rotate %14 by %c951_i32 dim 1 : vector<8x1024xf32>, i32 -> vector<8x1024xf32>
    %c1_i32_115 = arith.constant 1 : i32
    %c8_i32_116 = arith.constant 8 : i32
    %336 = vector.broadcast %c1_i32_115 : i32 to vector<8x1xi32>
    %337 = vector.broadcast %c8_i32_116 : i32 to vector<8x1xi32>
    %338 = arith.select %13, %336, %337 : vector<8x1xi1>, vector<8x1xi32>
    %339 = vector.broadcast %338 : vector<8x1xi32> to vector<8x1024xi32>
    %340 = arith.addi %4, %339 : vector<8x1024xi32>
    %c8_i32_117 = arith.constant 8 : i32
    %341 = vector.broadcast %c8_i32_117 : i32 to vector<8x1024xi32>
    %342 = arith.cmpi slt, %340, %341 : vector<8x1024xi32>
    %c1_i32_118 = arith.constant 1 : i32
    %c8_i32_119 = arith.constant 8 : i32
    %343 = vector.broadcast %c1_i32_118 : i32 to vector<8x1xi32>
    %344 = vector.broadcast %c8_i32_119 : i32 to vector<8x1xi32>
    %345 = arith.select %13, %343, %344 : vector<8x1xi1>, vector<8x1xi32>
    %346 = vector.broadcast %345 : vector<8x1xi32> to vector<8x1024xi32>
    %347 = arith.addi %8, %346 : vector<8x1024xi32>
    %c8_i32_120 = arith.constant 8 : i32
    %348 = vector.broadcast %c8_i32_120 : i32 to vector<8x1024xi32>
    %349 = arith.cmpi slt, %347, %348 : vector<8x1024xi32>
    %c1_i32_121 = arith.constant 1 : i32
    %c8_i32_122 = arith.constant 8 : i32
    %350 = vector.broadcast %c1_i32_121 : i32 to vector<8x1xi32>
    %351 = vector.broadcast %c8_i32_122 : i32 to vector<8x1xi32>
    %352 = arith.select %13, %350, %351 : vector<8x1xi1>, vector<8x1xi32>
    %353 = vector.broadcast %352 : vector<8x1xi32> to vector<8x1024xi32>
    %354 = arith.addi %10, %353 : vector<8x1024xi32>
    %c8_i32_123 = arith.constant 8 : i32
    %355 = vector.broadcast %c8_i32_123 : i32 to vector<8x1024xi32>
    %356 = arith.cmpi slt, %354, %355 : vector<8x1024xi32>
    %357 = arith.andi %342, %349 : vector<8x1024xi1>
    %358 = arith.andi %357, %356 : vector<8x1024xi1>
    %cst_124 = arith.constant 0.000000e+00 : f32
    %359 = vector.broadcast %cst_124 : f32 to vector<8x1024xf32>
    %360 = arith.select %358, %335, %359 : vector<8x1024xi1>, vector<8x1024xf32>
    %c104 = arith.constant 104 : index
    %c0_125 = arith.constant 0 : index
    %361 = vector.load %arg5[%c104, %c0_125] : memref<112x1024xf32, #tpu.memory_space<vmem>>, vector<8x1024xf32>
    tpu.vector_store %arg5[%c104, %c0_125], %360 {strides = array<i32>} : memref<112x1024xf32, #tpu.memory_space<vmem>>, vector<8x1024xf32>,
    %c0_126 = arith.constant 0 : index
    %c0_127 = arith.constant 0 : index
    %362 = vector.load %arg1[%c0_126, %c0_127] : memref<8x112xf32, #tpu.memory_space<vmem>>, vector<8x112xf32>
    %c0_128 = arith.constant 0 : index
    %c0_129 = arith.constant 0 : index
    %363 = vector.load %arg5[%c0_128, %c0_129] : memref<112x1024xf32, #tpu.memory_space<vmem>>, vector<112x1024xf32>
    %cst_130 = arith.constant dense<0.000000e+00> : vector<8x1024xf32>
    %364 = tpu.matmul %362, %363, %cst_130 {dimension_numbers = #tpu.dot_dimension_numbers<[1], [0], [0], [1], [0, 0, 1, 1], [], []>} : vector<8x112xf32>, vector<112x1024xf32>, vector<8x1024xf32> -> vector<8x1024xf32>
    %c0_131 = arith.constant 0 : index
    %c0_132 = arith.constant 0 : index
    %365 = vector.load %arg3[%c0_131, %c0_132] : memref<8x4xf32, #tpu.memory_space<vmem>>, vector<8x1xf32>
    %c0_133 = arith.constant 0 : index
    %c1 = arith.constant 1 : index
    %366 = vector.load %arg3[%c0_133, %c1] : memref<8x4xf32, #tpu.memory_space<vmem>>, vector<8x1xf32>
    %cst_134 = arith.constant dense<0.000000e+00> : vector<8xf32>
    %367 = vector.multi_reduction <add>, %364, %cst_134 [1] : vector<8x1024xf32> to vector<8xf32>
    %368 = vector.shape_cast %367 : vector<8xf32> to vector<8x1xf32>
    %cst_135 = arith.constant 1.024000e+03 : f32
    %369 = vector.broadcast %cst_135 : f32 to vector<8x1xf32>
    %370 = arith.divf %368, %369 : vector<8x1xf32>
    %371 = vector.broadcast %370 : vector<8x1xf32> to vector<8x1024xf32>
    %372 = arith.subf %364, %371 : vector<8x1024xf32>
    %373 = arith.mulf %372, %372 : vector<8x1024xf32>
    %cst_136 = arith.constant dense<0.000000e+00> : vector<8xf32>
    %374 = vector.multi_reduction <add>, %373, %cst_136 [1] : vector<8x1024xf32> to vector<8xf32>
    %375 = vector.shape_cast %374 : vector<8xf32> to vector<8x1xf32>
    %cst_137 = arith.constant 1.024000e+03 : f32
    %376 = vector.broadcast %cst_137 : f32 to vector<8x1xf32>
    %377 = arith.divf %375, %376 : vector<8x1xf32>
    %378 = vector.broadcast %370 : vector<8x1xf32> to vector<8x1024xf32>
    %379 = arith.subf %364, %378 : vector<8x1024xf32>
    %cst_138 = arith.constant 9.99999974E-6 : f32
    %380 = vector.broadcast %cst_138 : f32 to vector<8x1xf32>
    %381 = arith.addf %377, %380 : vector<8x1xf32>
    %382 = math.rsqrt %381 : vector<8x1xf32>
    %383 = vector.broadcast %382 : vector<8x1xf32> to vector<8x1024xf32>
    %384 = arith.mulf %379, %383 : vector<8x1024xf32>
    %385 = vector.broadcast %365 : vector<8x1xf32> to vector<8x1024xf32>
    %386 = arith.mulf %384, %385 : vector<8x1024xf32>
    %387 = vector.broadcast %366 : vector<8x1xf32> to vector<8x1024xf32>
    %388 = arith.addf %386, %387 : vector<8x1024xf32>
    %cst_139 = arith.constant 0.000000e+00 : f32
    %389 = vector.broadcast %cst_139 : f32 to vector<8x1024xf32>
    %390 = arith.maximumf %388, %389 : vector<8x1024xf32>
    %c73_i32_140 = arith.constant 73 : i32
    %391 = tpu.dynamic_rotate %390 by %c73_i32_140 dim 1 : vector<8x1024xf32>, i32 -> vector<8x1024xf32>
    %c72_i32_141 = arith.constant 72 : i32
    %392 = tpu.dynamic_rotate %390 by %c72_i32_141 dim 1 : vector<8x1024xf32>, i32 -> vector<8x1024xf32>
    %393 = vector.shape_cast %13 : vector<8x1xi1> to vector<8x1xi1>
    %394 = vector.broadcast %393 : vector<8x1xi1> to vector<8x1024xi1>
    %395 = arith.select %394, %391, %392 : vector<8x1024xi1>, vector<8x1024xf32>
    %c-1_i32_142 = arith.constant -1 : i32
    %396 = vector.broadcast %c-1_i32_142 : i32 to vector<8x1024xi32>
    %397 = arith.addi %4, %396 : vector<8x1024xi32>
    %c0_i32_143 = arith.constant 0 : i32
    %398 = vector.broadcast %c0_i32_143 : i32 to vector<8x1024xi32>
    %399 = arith.cmpi sge, %397, %398 : vector<8x1024xi32>
    %c-1_i32_144 = arith.constant -1 : i32
    %400 = vector.broadcast %c-1_i32_144 : i32 to vector<8x1024xi32>
    %401 = arith.addi %8, %400 : vector<8x1024xi32>
    %c0_i32_145 = arith.constant 0 : i32
    %402 = vector.broadcast %c0_i32_145 : i32 to vector<8x1024xi32>
    %403 = arith.cmpi sge, %401, %402 : vector<8x1024xi32>
    %c-1_i32_146 = arith.constant -1 : i32
    %c0_i32_147 = arith.constant 0 : i32
    %404 = vector.broadcast %c-1_i32_146 : i32 to vector<8x1xi32>
    %405 = vector.broadcast %c0_i32_147 : i32 to vector<8x1xi32>
    %406 = arith.select %13, %404, %405 : vector<8x1xi1>, vector<8x1xi32>
    %407 = vector.broadcast %406 : vector<8x1xi32> to vector<8x1024xi32>
    %408 = arith.addi %10, %407 : vector<8x1024xi32>
    %c0_i32_148 = arith.constant 0 : i32
    %409 = vector.broadcast %c0_i32_148 : i32 to vector<8x1024xi32>
    %410 = arith.cmpi sge, %408, %409 : vector<8x1024xi32>
    %411 = arith.andi %399, %403 : vector<8x1024xi1>
    %412 = arith.andi %411, %410 : vector<8x1024xi1>
    %cst_149 = arith.constant 0.000000e+00 : f32
    %413 = vector.broadcast %cst_149 : f32 to vector<8x1024xf32>
    %414 = arith.select %412, %395, %413 : vector<8x1024xi1>, vector<8x1024xf32>
    %c0_150 = arith.constant 0 : index
    %c0_151 = arith.constant 0 : index
    %415 = vector.load %arg5[%c0_150, %c0_151] : memref<112x1024xf32, #tpu.memory_space<vmem>>, vector<8x1024xf32>
    tpu.vector_store %arg5[%c0_150, %c0_151], %414 {strides = array<i32>} : memref<112x1024xf32, #tpu.memory_space<vmem>>, vector<8x1024xf32>,
    %c71_i32_152 = arith.constant 71 : i32
    %416 = tpu.dynamic_rotate %390 by %c71_i32_152 dim 1 : vector<8x1024xf32>, i32 -> vector<8x1024xf32>
    %c65_i32_153 = arith.constant 65 : i32
    %417 = tpu.dynamic_rotate %390 by %c65_i32_153 dim 1 : vector<8x1024xf32>, i32 -> vector<8x1024xf32>
    %418 = vector.shape_cast %13 : vector<8x1xi1> to vector<8x1xi1>
    %419 = vector.broadcast %418 : vector<8x1xi1> to vector<8x1024xi1>
    %420 = arith.select %419, %416, %417 : vector<8x1024xi1>, vector<8x1024xf32>
    %c-1_i32_154 = arith.constant -1 : i32
    %421 = vector.broadcast %c-1_i32_154 : i32 to vector<8x1024xi32>
    %422 = arith.addi %4, %421 : vector<8x1024xi32>
    %c0_i32_155 = arith.constant 0 : i32
    %423 = vector.broadcast %c0_i32_155 : i32 to vector<8x1024xi32>
    %424 = arith.cmpi sge, %422, %423 : vector<8x1024xi32>
    %c-1_i32_156 = arith.constant -1 : i32
    %c0_i32_157 = arith.constant 0 : i32
    %425 = vector.broadcast %c-1_i32_156 : i32 to vector<8x1xi32>
    %426 = vector.broadcast %c0_i32_157 : i32 to vector<8x1xi32>
    %427 = arith.select %13, %425, %426 : vector<8x1xi1>, vector<8x1xi32>
    %428 = vector.broadcast %427 : vector<8x1xi32> to vector<8x1024xi32>
    %429 = arith.addi %8, %428 : vector<8x1024xi32>
    %c0_i32_158 = arith.constant 0 : i32
    %430 = vector.broadcast %c0_i32_158 : i32 to vector<8x1024xi32>
    %431 = arith.cmpi sge, %429, %430 : vector<8x1024xi32>
    %c1_i32_159 = arith.constant 1 : i32
    %c-1_i32_160 = arith.constant -1 : i32
    %432 = vector.broadcast %c1_i32_159 : i32 to vector<8x1xi32>
    %433 = vector.broadcast %c-1_i32_160 : i32 to vector<8x1xi32>
    %434 = arith.select %13, %432, %433 : vector<8x1xi1>, vector<8x1xi32>
    %435 = vector.broadcast %434 : vector<8x1xi32> to vector<8x1024xi32>
    %436 = arith.addi %10, %435 : vector<8x1024xi32>
    %c0_i32_161 = arith.constant 0 : i32
    %437 = vector.broadcast %c0_i32_161 : i32 to vector<8x1024xi32>
    %438 = arith.cmpi sge, %436, %437 : vector<8x1024xi32>
    %c8_i32_162 = arith.constant 8 : i32
    %439 = vector.broadcast %c8_i32_162 : i32 to vector<8x1024xi32>
    %440 = arith.cmpi slt, %436, %439 : vector<8x1024xi32>
    %441 = arith.andi %424, %431 : vector<8x1024xi1>
    %442 = arith.andi %441, %438 : vector<8x1024xi1>
    %443 = arith.andi %442, %440 : vector<8x1024xi1>
    %cst_163 = arith.constant 0.000000e+00 : f32
    %444 = vector.broadcast %cst_163 : f32 to vector<8x1024xf32>
    %445 = arith.select %443, %420, %444 : vector<8x1024xi1>, vector<8x1024xf32>
    %c8_164 = arith.constant 8 : index
    %c0_165 = arith.constant 0 : index
    %446 = vector.load %arg5[%c8_164, %c0_165] : memref<112x1024xf32, #tpu.memory_space<vmem>>, vector<8x1024xf32>
    tpu.vector_store %arg5[%c8_164, %c0_165], %445 {strides = array<i32>} : memref<112x1024xf32, #tpu.memory_space<vmem>>, vector<8x1024xf32>,
    %c64_i32_166 = arith.constant 64 : i32
    %447 = tpu.dynamic_rotate %390 by %c64_i32_166 dim 1 : vector<8x1024xf32>, i32 -> vector<8x1024xf32>
    %c63_i32_167 = arith.constant 63 : i32
    %448 = tpu.dynamic_rotate %390 by %c63_i32_167 dim 1 : vector<8x1024xf32>, i32 -> vector<8x1024xf32>
    %449 = vector.shape_cast %13 : vector<8x1xi1> to vector<8x1xi1>
    %450 = vector.broadcast %449 : vector<8x1xi1> to vector<8x1024xi1>
    %451 = arith.select %450, %447, %448 : vector<8x1024xi1>, vector<8x1024xf32>
    %c-1_i32_168 = arith.constant -1 : i32
    %452 = vector.broadcast %c-1_i32_168 : i32 to vector<8x1024xi32>
    %453 = arith.addi %4, %452 : vector<8x1024xi32>
    %c0_i32_169 = arith.constant 0 : i32
    %454 = vector.broadcast %c0_i32_169 : i32 to vector<8x1024xi32>
    %455 = arith.cmpi sge, %453, %454 : vector<8x1024xi32>
    %c0_i32_170 = arith.constant 0 : i32
    %c1_i32_171 = arith.constant 1 : i32
    %456 = vector.broadcast %c0_i32_170 : i32 to vector<8x1xi32>
    %457 = vector.broadcast %c1_i32_171 : i32 to vector<8x1xi32>
    %458 = arith.select %13, %456, %457 : vector<8x1xi1>, vector<8x1xi32>
    %459 = vector.broadcast %458 : vector<8x1xi32> to vector<8x1024xi32>
    %460 = arith.addi %10, %459 : vector<8x1024xi32>
    %c8_i32_172 = arith.constant 8 : i32
    %461 = vector.broadcast %c8_i32_172 : i32 to vector<8x1024xi32>
    %462 = arith.cmpi slt, %460, %461 : vector<8x1024xi32>
    %463 = arith.andi %455, %462 : vector<8x1024xi1>
    %cst_173 = arith.constant 0.000000e+00 : f32
    %464 = vector.broadcast %cst_173 : f32 to vector<8x1024xf32>
    %465 = arith.select %463, %451, %464 : vector<8x1024xi1>, vector<8x1024xf32>
    %c16_174 = arith.constant 16 : index
    %c0_175 = arith.constant 0 : index
    %466 = vector.load %arg5[%c16_174, %c0_175] : memref<112x1024xf32, #tpu.memory_space<vmem>>, vector<8x1024xf32>
    tpu.vector_store %arg5[%c16_174, %c0_175], %465 {strides = array<i32>} : memref<112x1024xf32, #tpu.memory_space<vmem>>, vector<8x1024xf32>,
    %c57_i32_176 = arith.constant 57 : i32
    %467 = tpu.dynamic_rotate %390 by %c57_i32_176 dim 1 : vector<8x1024xf32>, i32 -> vector<8x1024xf32>
    %c56_i32_177 = arith.constant 56 : i32
    %468 = tpu.dynamic_rotate %390 by %c56_i32_177 dim 1 : vector<8x1024xf32>, i32 -> vector<8x1024xf32>
    %469 = vector.shape_cast %13 : vector<8x1xi1> to vector<8x1xi1>
    %470 = vector.broadcast %469 : vector<8x1xi1> to vector<8x1024xi1>
    %471 = arith.select %470, %467, %468 : vector<8x1024xi1>, vector<8x1024xf32>
    %c-1_i32_178 = arith.constant -1 : i32
    %472 = vector.broadcast %c-1_i32_178 : i32 to vector<8x1024xi32>
    %473 = arith.addi %4, %472 : vector<8x1024xi32>
    %c0_i32_179 = arith.constant 0 : i32
    %474 = vector.broadcast %c0_i32_179 : i32 to vector<8x1024xi32>
    %475 = arith.cmpi sge, %473, %474 : vector<8x1024xi32>
    %c1_i32_180 = arith.constant 1 : i32
    %476 = vector.broadcast %c1_i32_180 : i32 to vector<8x1024xi32>
    %477 = arith.addi %8, %476 : vector<8x1024xi32>
    %c8_i32_181 = arith.constant 8 : i32
    %478 = vector.broadcast %c8_i32_181 : i32 to vector<8x1024xi32>
    %479 = arith.cmpi slt, %477, %478 : vector<8x1024xi32>
    %c-1_i32_182 = arith.constant -1 : i32
    %c0_i32_183 = arith.constant 0 : i32
    %480 = vector.broadcast %c-1_i32_182 : i32 to vector<8x1xi32>
    %481 = vector.broadcast %c0_i32_183 : i32 to vector<8x1xi32>
    %482 = arith.select %13, %480, %481 : vector<8x1xi1>, vector<8x1xi32>
    %483 = vector.broadcast %482 : vector<8x1xi32> to vector<8x1024xi32>
    %484 = arith.addi %10, %483 : vector<8x1024xi32>
    %c0_i32_184 = arith.constant 0 : i32
    %485 = vector.broadcast %c0_i32_184 : i32 to vector<8x1024xi32>
    %486 = arith.cmpi sge, %484, %485 : vector<8x1024xi32>
    %487 = arith.andi %475, %479 : vector<8x1024xi1>
    %488 = arith.andi %487, %486 : vector<8x1024xi1>
    %cst_185 = arith.constant 0.000000e+00 : f32
    %489 = vector.broadcast %cst_185 : f32 to vector<8x1024xf32>
    %490 = arith.select %488, %471, %489 : vector<8x1024xi1>, vector<8x1024xf32>
    %c24_186 = arith.constant 24 : index
    %c0_187 = arith.constant 0 : index
    %491 = vector.load %arg5[%c24_186, %c0_187] : memref<112x1024xf32, #tpu.memory_space<vmem>>, vector<8x1024xf32>
    tpu.vector_store %arg5[%c24_186, %c0_187], %490 {strides = array<i32>} : memref<112x1024xf32, #tpu.memory_space<vmem>>, vector<8x1024xf32>,
    %c55_i32_188 = arith.constant 55 : i32
    %492 = tpu.dynamic_rotate %390 by %c55_i32_188 dim 1 : vector<8x1024xf32>, i32 -> vector<8x1024xf32>
    %c9_i32_189 = arith.constant 9 : i32
    %493 = tpu.dynamic_rotate %390 by %c9_i32_189 dim 1 : vector<8x1024xf32>, i32 -> vector<8x1024xf32>
    %494 = vector.shape_cast %13 : vector<8x1xi1> to vector<8x1xi1>
    %495 = vector.broadcast %494 : vector<8x1xi1> to vector<8x1024xi1>
    %496 = arith.select %495, %492, %493 : vector<8x1024xi1>, vector<8x1024xf32>
    %c-1_i32_190 = arith.constant -1 : i32
    %c0_i32_191 = arith.constant 0 : i32
    %497 = vector.broadcast %c-1_i32_190 : i32 to vector<8x1xi32>
    %498 = vector.broadcast %c0_i32_191 : i32 to vector<8x1xi32>
    %499 = arith.select %13, %497, %498 : vector<8x1xi1>, vector<8x1xi32>
    %500 = vector.broadcast %499 : vector<8x1xi32> to vector<8x1024xi32>
    %501 = arith.addi %4, %500 : vector<8x1024xi32>
    %c0_i32_192 = arith.constant 0 : i32
    %502 = vector.broadcast %c0_i32_192 : i32 to vector<8x1024xi32>
    %503 = arith.cmpi sge, %501, %502 : vector<8x1024xi32>
    %c1_i32_193 = arith.constant 1 : i32
    %c-1_i32_194 = arith.constant -1 : i32
    %504 = vector.broadcast %c1_i32_193 : i32 to vector<8x1xi32>
    %505 = vector.broadcast %c-1_i32_194 : i32 to vector<8x1xi32>
    %506 = arith.select %13, %504, %505 : vector<8x1xi1>, vector<8x1xi32>
    %507 = vector.broadcast %506 : vector<8x1xi32> to vector<8x1024xi32>
    %508 = arith.addi %8, %507 : vector<8x1024xi32>
    %c0_i32_195 = arith.constant 0 : i32
    %509 = vector.broadcast %c0_i32_195 : i32 to vector<8x1024xi32>
    %510 = arith.cmpi sge, %508, %509 : vector<8x1024xi32>
    %c8_i32_196 = arith.constant 8 : i32
    %511 = vector.broadcast %c8_i32_196 : i32 to vector<8x1024xi32>
    %512 = arith.cmpi slt, %508, %511 : vector<8x1024xi32>
    %c1_i32_197 = arith.constant 1 : i32
    %c-1_i32_198 = arith.constant -1 : i32
    %513 = vector.broadcast %c1_i32_197 : i32 to vector<8x1xi32>
    %514 = vector.broadcast %c-1_i32_198 : i32 to vector<8x1xi32>
    %515 = arith.select %13, %513, %514 : vector<8x1xi1>, vector<8x1xi32>
    %516 = vector.broadcast %515 : vector<8x1xi32> to vector<8x1024xi32>
    %517 = arith.addi %10, %516 : vector<8x1024xi32>
    %c0_i32_199 = arith.constant 0 : i32
    %518 = vector.broadcast %c0_i32_199 : i32 to vector<8x1024xi32>
    %519 = arith.cmpi sge, %517, %518 : vector<8x1024xi32>
    %c8_i32_200 = arith.constant 8 : i32
    %520 = vector.broadcast %c8_i32_200 : i32 to vector<8x1024xi32>
    %521 = arith.cmpi slt, %517, %520 : vector<8x1024xi32>
    %522 = arith.andi %503, %510 : vector<8x1024xi1>
    %523 = arith.andi %522, %512 : vector<8x1024xi1>
    %524 = arith.andi %523, %519 : vector<8x1024xi1>
    %525 = arith.andi %524, %521 : vector<8x1024xi1>
    %cst_201 = arith.constant 0.000000e+00 : f32
    %526 = vector.broadcast %cst_201 : f32 to vector<8x1024xf32>
    %527 = arith.select %525, %496, %526 : vector<8x1024xi1>, vector<8x1024xf32>
    %c32_202 = arith.constant 32 : index
    %c0_203 = arith.constant 0 : index
    %528 = vector.load %arg5[%c32_202, %c0_203] : memref<112x1024xf32, #tpu.memory_space<vmem>>, vector<8x1024xf32>
    tpu.vector_store %arg5[%c32_202, %c0_203], %527 {strides = array<i32>} : memref<112x1024xf32, #tpu.memory_space<vmem>>, vector<8x1024xf32>,
    %c8_i32_204 = arith.constant 8 : i32
    %529 = tpu.dynamic_rotate %390 by %c8_i32_204 dim 1 : vector<8x1024xf32>, i32 -> vector<8x1024xf32>
    %c7_i32_205 = arith.constant 7 : i32
    %530 = tpu.dynamic_rotate %390 by %c7_i32_205 dim 1 : vector<8x1024xf32>, i32 -> vector<8x1024xf32>
    %531 = vector.shape_cast %13 : vector<8x1xi1> to vector<8x1xi1>
    %532 = vector.broadcast %531 : vector<8x1xi1> to vector<8x1024xi1>
    %533 = arith.select %532, %529, %530 : vector<8x1024xi1>, vector<8x1024xf32>
    %c-1_i32_206 = arith.constant -1 : i32
    %534 = vector.broadcast %c-1_i32_206 : i32 to vector<8x1024xi32>
    %535 = arith.addi %8, %534 : vector<8x1024xi32>
    %c0_i32_207 = arith.constant 0 : i32
    %536 = vector.broadcast %c0_i32_207 : i32 to vector<8x1024xi32>
    %537 = arith.cmpi sge, %535, %536 : vector<8x1024xi32>
    %c0_i32_208 = arith.constant 0 : i32
    %c1_i32_209 = arith.constant 1 : i32
    %538 = vector.broadcast %c0_i32_208 : i32 to vector<8x1xi32>
    %539 = vector.broadcast %c1_i32_209 : i32 to vector<8x1xi32>
    %540 = arith.select %13, %538, %539 : vector<8x1xi1>, vector<8x1xi32>
    %541 = vector.broadcast %540 : vector<8x1xi32> to vector<8x1024xi32>
    %542 = arith.addi %10, %541 : vector<8x1024xi32>
    %c8_i32_210 = arith.constant 8 : i32
    %543 = vector.broadcast %c8_i32_210 : i32 to vector<8x1024xi32>
    %544 = arith.cmpi slt, %542, %543 : vector<8x1024xi32>
    %545 = arith.andi %537, %544 : vector<8x1024xi1>
    %cst_211 = arith.constant 0.000000e+00 : f32
    %546 = vector.broadcast %cst_211 : f32 to vector<8x1024xf32>
    %547 = arith.select %545, %533, %546 : vector<8x1024xi1>, vector<8x1024xf32>
    %c40_212 = arith.constant 40 : index
    %c0_213 = arith.constant 0 : index
    %548 = vector.load %arg5[%c40_212, %c0_213] : memref<112x1024xf32, #tpu.memory_space<vmem>>, vector<8x1024xf32>
    tpu.vector_store %arg5[%c40_212, %c0_213], %547 {strides = array<i32>} : memref<112x1024xf32, #tpu.memory_space<vmem>>, vector<8x1024xf32>,
    %c1_i32_214 = arith.constant 1 : i32
    %549 = tpu.dynamic_rotate %390 by %c1_i32_214 dim 1 : vector<8x1024xf32>, i32 -> vector<8x1024xf32>
    %c0_i32_215 = arith.constant 0 : i32
    %550 = tpu.dynamic_rotate %390 by %c0_i32_215 dim 1 : vector<8x1024xf32>, i32 -> vector<8x1024xf32>
    %551 = vector.shape_cast %13 : vector<8x1xi1> to vector<8x1xi1>
    %552 = vector.broadcast %551 : vector<8x1xi1> to vector<8x1024xi1>
    %553 = arith.select %552, %549, %550 : vector<8x1024xi1>, vector<8x1024xf32>
    %c-1_i32_216 = arith.constant -1 : i32
    %c0_i32_217 = arith.constant 0 : i32
    %554 = vector.broadcast %c-1_i32_216 : i32 to vector<8x1xi32>
    %555 = vector.broadcast %c0_i32_217 : i32 to vector<8x1xi32>
    %556 = arith.select %13, %554, %555 : vector<8x1xi1>, vector<8x1xi32>
    %557 = vector.broadcast %556 : vector<8x1xi32> to vector<8x1024xi32>
    %558 = arith.addi %10, %557 : vector<8x1024xi32>
    %c0_i32_218 = arith.constant 0 : i32
    %559 = vector.broadcast %c0_i32_218 : i32 to vector<8x1024xi32>
    %560 = arith.cmpi sge, %558, %559 : vector<8x1024xi32>
    %cst_219 = arith.constant 0.000000e+00 : f32
    %561 = vector.broadcast %cst_219 : f32 to vector<8x1024xf32>
    %562 = arith.select %560, %553, %561 : vector<8x1024xi1>, vector<8x1024xf32>
    %c48_220 = arith.constant 48 : index
    %c0_221 = arith.constant 0 : index
    %563 = vector.load %arg5[%c48_220, %c0_221] : memref<112x1024xf32, #tpu.memory_space<vmem>>, vector<8x1024xf32>
    tpu.vector_store %arg5[%c48_220, %c0_221], %562 {strides = array<i32>} : memref<112x1024xf32, #tpu.memory_space<vmem>>, vector<8x1024xf32>,
    %c1023_i32_222 = arith.constant 1023 : i32
    %564 = tpu.dynamic_rotate %390 by %c1023_i32_222 dim 1 : vector<8x1024xf32>, i32 -> vector<8x1024xf32>
    %c1017_i32_223 = arith.constant 1017 : i32
    %565 = tpu.dynamic_rotate %390 by %c1017_i32_223 dim 1 : vector<8x1024xf32>, i32 -> vector<8x1024xf32>
    %566 = vector.shape_cast %13 : vector<8x1xi1> to vector<8x1xi1>
    %567 = vector.broadcast %566 : vector<8x1xi1> to vector<8x1024xi1>
    %568 = arith.select %567, %564, %565 : vector<8x1024xi1>, vector<8x1024xf32>
    %c0_i32_224 = arith.constant 0 : i32
    %c1_i32_225 = arith.constant 1 : i32
    %569 = vector.broadcast %c0_i32_224 : i32 to vector<8x1xi32>
    %570 = vector.broadcast %c1_i32_225 : i32 to vector<8x1xi32>
    %571 = arith.select %13, %569, %570 : vector<8x1xi1>, vector<8x1xi32>
    %572 = vector.broadcast %571 : vector<8x1xi32> to vector<8x1024xi32>
    %573 = arith.addi %8, %572 : vector<8x1024xi32>
    %c8_i32_226 = arith.constant 8 : i32
    %574 = vector.broadcast %c8_i32_226 : i32 to vector<8x1024xi32>
    %575 = arith.cmpi slt, %573, %574 : vector<8x1024xi32>
    %c1_i32_227 = arith.constant 1 : i32
    %c-1_i32_228 = arith.constant -1 : i32
    %576 = vector.broadcast %c1_i32_227 : i32 to vector<8x1xi32>
    %577 = vector.broadcast %c-1_i32_228 : i32 to vector<8x1xi32>
    %578 = arith.select %13, %576, %577 : vector<8x1xi1>, vector<8x1xi32>
    %579 = vector.broadcast %578 : vector<8x1xi32> to vector<8x1024xi32>
    %580 = arith.addi %10, %579 : vector<8x1024xi32>
    %c0_i32_229 = arith.constant 0 : i32
    %581 = vector.broadcast %c0_i32_229 : i32 to vector<8x1024xi32>
    %582 = arith.cmpi sge, %580, %581 : vector<8x1024xi32>
    %c8_i32_230 = arith.constant 8 : i32
    %583 = vector.broadcast %c8_i32_230 : i32 to vector<8x1024xi32>
    %584 = arith.cmpi slt, %580, %583 : vector<8x1024xi32>
    %585 = arith.andi %575, %582 : vector<8x1024xi1>
    %586 = arith.andi %585, %584 : vector<8x1024xi1>
    %cst_231 = arith.constant 0.000000e+00 : f32
    %587 = vector.broadcast %cst_231 : f32 to vector<8x1024xf32>
    %588 = arith.select %586, %568, %587 : vector<8x1024xi1>, vector<8x1024xf32>
    %c56_232 = arith.constant 56 : index
    %c0_233 = arith.constant 0 : index
    %589 = vector.load %arg5[%c56_232, %c0_233] : memref<112x1024xf32, #tpu.memory_space<vmem>>, vector<8x1024xf32>
    tpu.vector_store %arg5[%c56_232, %c0_233], %588 {strides = array<i32>} : memref<112x1024xf32, #tpu.memory_space<vmem>>, vector<8x1024xf32>,
    %c1016_i32_234 = arith.constant 1016 : i32
    %590 = tpu.dynamic_rotate %390 by %c1016_i32_234 dim 1 : vector<8x1024xf32>, i32 -> vector<8x1024xf32>
    %c1015_i32_235 = arith.constant 1015 : i32
    %591 = tpu.dynamic_rotate %390 by %c1015_i32_235 dim 1 : vector<8x1024xf32>, i32 -> vector<8x1024xf32>
    %592 = vector.shape_cast %13 : vector<8x1xi1> to vector<8x1xi1>
    %593 = vector.broadcast %592 : vector<8x1xi1> to vector<8x1024xi1>
    %594 = arith.select %593, %590, %591 : vector<8x1024xi1>, vector<8x1024xf32>
    %c1_i32_236 = arith.constant 1 : i32
    %595 = vector.broadcast %c1_i32_236 : i32 to vector<8x1024xi32>
    %596 = arith.addi %8, %595 : vector<8x1024xi32>
    %c8_i32_237 = arith.constant 8 : i32
    %597 = vector.broadcast %c8_i32_237 : i32 to vector<8x1024xi32>
    %598 = arith.cmpi slt, %596, %597 : vector<8x1024xi32>
    %c0_i32_238 = arith.constant 0 : i32
    %c1_i32_239 = arith.constant 1 : i32
    %599 = vector.broadcast %c0_i32_238 : i32 to vector<8x1xi32>
    %600 = vector.broadcast %c1_i32_239 : i32 to vector<8x1xi32>
    %601 = arith.select %13, %599, %600 : vector<8x1xi1>, vector<8x1xi32>
    %602 = vector.broadcast %601 : vector<8x1xi32> to vector<8x1024xi32>
    %603 = arith.addi %10, %602 : vector<8x1024xi32>
    %c8_i32_240 = arith.constant 8 : i32
    %604 = vector.broadcast %c8_i32_240 : i32 to vector<8x1024xi32>
    %605 = arith.cmpi slt, %603, %604 : vector<8x1024xi32>
    %606 = arith.andi %598, %605 : vector<8x1024xi1>
    %cst_241 = arith.constant 0.000000e+00 : f32
    %607 = vector.broadcast %cst_241 : f32 to vector<8x1024xf32>
    %608 = arith.select %606, %594, %607 : vector<8x1024xi1>, vector<8x1024xf32>
    %c64_242 = arith.constant 64 : index
    %c0_243 = arith.constant 0 : index
    %609 = vector.load %arg5[%c64_242, %c0_243] : memref<112x1024xf32, #tpu.memory_space<vmem>>, vector<8x1024xf32>
    tpu.vector_store %arg5[%c64_242, %c0_243], %608 {strides = array<i32>} : memref<112x1024xf32, #tpu.memory_space<vmem>>, vector<8x1024xf32>,
    %c969_i32_244 = arith.constant 969 : i32
    %610 = tpu.dynamic_rotate %390 by %c969_i32_244 dim 1 : vector<8x1024xf32>, i32 -> vector<8x1024xf32>
    %c968_i32_245 = arith.constant 968 : i32
    %611 = tpu.dynamic_rotate %390 by %c968_i32_245 dim 1 : vector<8x1024xf32>, i32 -> vector<8x1024xf32>
    %612 = vector.shape_cast %13 : vector<8x1xi1> to vector<8x1xi1>
    %613 = vector.broadcast %612 : vector<8x1xi1> to vector<8x1024xi1>
    %614 = arith.select %613, %610, %611 : vector<8x1024xi1>, vector<8x1024xf32>
    %c1_i32_246 = arith.constant 1 : i32
    %615 = vector.broadcast %c1_i32_246 : i32 to vector<8x1024xi32>
    %616 = arith.addi %4, %615 : vector<8x1024xi32>
    %c8_i32_247 = arith.constant 8 : i32
    %617 = vector.broadcast %c8_i32_247 : i32 to vector<8x1024xi32>
    %618 = arith.cmpi slt, %616, %617 : vector<8x1024xi32>
    %c-1_i32_248 = arith.constant -1 : i32
    %619 = vector.broadcast %c-1_i32_248 : i32 to vector<8x1024xi32>
    %620 = arith.addi %8, %619 : vector<8x1024xi32>
    %c0_i32_249 = arith.constant 0 : i32
    %621 = vector.broadcast %c0_i32_249 : i32 to vector<8x1024xi32>
    %622 = arith.cmpi sge, %620, %621 : vector<8x1024xi32>
    %c-1_i32_250 = arith.constant -1 : i32
    %c0_i32_251 = arith.constant 0 : i32
    %623 = vector.broadcast %c-1_i32_250 : i32 to vector<8x1xi32>
    %624 = vector.broadcast %c0_i32_251 : i32 to vector<8x1xi32>
    %625 = arith.select %13, %623, %624 : vector<8x1xi1>, vector<8x1xi32>
    %626 = vector.broadcast %625 : vector<8x1xi32> to vector<8x1024xi32>
    %627 = arith.addi %10, %626 : vector<8x1024xi32>
    %c0_i32_252 = arith.constant 0 : i32
    %628 = vector.broadcast %c0_i32_252 : i32 to vector<8x1024xi32>
    %629 = arith.cmpi sge, %627, %628 : vector<8x1024xi32>
    %630 = arith.andi %618, %622 : vector<8x1024xi1>
    %631 = arith.andi %630, %629 : vector<8x1024xi1>
    %cst_253 = arith.constant 0.000000e+00 : f32
    %632 = vector.broadcast %cst_253 : f32 to vector<8x1024xf32>
    %633 = arith.select %631, %614, %632 : vector<8x1024xi1>, vector<8x1024xf32>
    %c72_254 = arith.constant 72 : index
    %c0_255 = arith.constant 0 : index
    %634 = vector.load %arg5[%c72_254, %c0_255] : memref<112x1024xf32, #tpu.memory_space<vmem>>, vector<8x1024xf32>
    tpu.vector_store %arg5[%c72_254, %c0_255], %633 {strides = array<i32>} : memref<112x1024xf32, #tpu.memory_space<vmem>>, vector<8x1024xf32>,
    %c967_i32_256 = arith.constant 967 : i32
    %635 = tpu.dynamic_rotate %390 by %c967_i32_256 dim 1 : vector<8x1024xf32>, i32 -> vector<8x1024xf32>
    %c961_i32_257 = arith.constant 961 : i32
    %636 = tpu.dynamic_rotate %390 by %c961_i32_257 dim 1 : vector<8x1024xf32>, i32 -> vector<8x1024xf32>
    %637 = vector.shape_cast %13 : vector<8x1xi1> to vector<8x1xi1>
    %638 = vector.broadcast %637 : vector<8x1xi1> to vector<8x1024xi1>
    %639 = arith.select %638, %635, %636 : vector<8x1024xi1>, vector<8x1024xf32>
    %c1_i32_258 = arith.constant 1 : i32
    %640 = vector.broadcast %c1_i32_258 : i32 to vector<8x1024xi32>
    %641 = arith.addi %4, %640 : vector<8x1024xi32>
    %c8_i32_259 = arith.constant 8 : i32
    %642 = vector.broadcast %c8_i32_259 : i32 to vector<8x1024xi32>
    %643 = arith.cmpi slt, %641, %642 : vector<8x1024xi32>
    %c-1_i32_260 = arith.constant -1 : i32
    %c0_i32_261 = arith.constant 0 : i32
    %644 = vector.broadcast %c-1_i32_260 : i32 to vector<8x1xi32>
    %645 = vector.broadcast %c0_i32_261 : i32 to vector<8x1xi32>
    %646 = arith.select %13, %644, %645 : vector<8x1xi1>, vector<8x1xi32>
    %647 = vector.broadcast %646 : vector<8x1xi32> to vector<8x1024xi32>
    %648 = arith.addi %8, %647 : vector<8x1024xi32>
    %c0_i32_262 = arith.constant 0 : i32
    %649 = vector.broadcast %c0_i32_262 : i32 to vector<8x1024xi32>
    %650 = arith.cmpi sge, %648, %649 : vector<8x1024xi32>
    %c1_i32_263 = arith.constant 1 : i32
    %c-1_i32_264 = arith.constant -1 : i32
    %651 = vector.broadcast %c1_i32_263 : i32 to vector<8x1xi32>
    %652 = vector.broadcast %c-1_i32_264 : i32 to vector<8x1xi32>
    %653 = arith.select %13, %651, %652 : vector<8x1xi1>, vector<8x1xi32>
    %654 = vector.broadcast %653 : vector<8x1xi32> to vector<8x1024xi32>
    %655 = arith.addi %10, %654 : vector<8x1024xi32>
    %c0_i32_265 = arith.constant 0 : i32
    %656 = vector.broadcast %c0_i32_265 : i32 to vector<8x1024xi32>
    %657 = arith.cmpi sge, %655, %656 : vector<8x1024xi32>
    %c8_i32_266 = arith.constant 8 : i32
    %658 = vector.broadcast %c8_i32_266 : i32 to vector<8x1024xi32>
    %659 = arith.cmpi slt, %655, %658 : vector<8x1024xi32>
    %660 = arith.andi %643, %650 : vector<8x1024xi1>
    %661 = arith.andi %660, %657 : vector<8x1024xi1>
    %662 = arith.andi %661, %659 : vector<8x1024xi1>
    %cst_267 = arith.constant 0.000000e+00 : f32
    %663 = vector.broadcast %cst_267 : f32 to vector<8x1024xf32>
    %664 = arith.select %662, %639, %663 : vector<8x1024xi1>, vector<8x1024xf32>
    %c80_268 = arith.constant 80 : index
    %c0_269 = arith.constant 0 : index
    %665 = vector.load %arg5[%c80_268, %c0_269] : memref<112x1024xf32, #tpu.memory_space<vmem>>, vector<8x1024xf32>
    tpu.vector_store %arg5[%c80_268, %c0_269], %664 {strides = array<i32>} : memref<112x1024xf32, #tpu.memory_space<vmem>>, vector<8x1024xf32>,
    %c960_i32_270 = arith.constant 960 : i32
    %666 = tpu.dynamic_rotate %390 by %c960_i32_270 dim 1 : vector<8x1024xf32>, i32 -> vector<8x1024xf32>
    %c959_i32_271 = arith.constant 959 : i32
    %667 = tpu.dynamic_rotate %390 by %c959_i32_271 dim 1 : vector<8x1024xf32>, i32 -> vector<8x1024xf32>
    %668 = vector.shape_cast %13 : vector<8x1xi1> to vector<8x1xi1>
    %669 = vector.broadcast %668 : vector<8x1xi1> to vector<8x1024xi1>
    %670 = arith.select %669, %666, %667 : vector<8x1024xi1>, vector<8x1024xf32>
    %c1_i32_272 = arith.constant 1 : i32
    %671 = vector.broadcast %c1_i32_272 : i32 to vector<8x1024xi32>
    %672 = arith.addi %4, %671 : vector<8x1024xi32>
    %c8_i32_273 = arith.constant 8 : i32
    %673 = vector.broadcast %c8_i32_273 : i32 to vector<8x1024xi32>
    %674 = arith.cmpi slt, %672, %673 : vector<8x1024xi32>
    %c0_i32_274 = arith.constant 0 : i32
    %c1_i32_275 = arith.constant 1 : i32
    %675 = vector.broadcast %c0_i32_274 : i32 to vector<8x1xi32>
    %676 = vector.broadcast %c1_i32_275 : i32 to vector<8x1xi32>
    %677 = arith.select %13, %675, %676 : vector<8x1xi1>, vector<8x1xi32>
    %678 = vector.broadcast %677 : vector<8x1xi32> to vector<8x1024xi32>
    %679 = arith.addi %10, %678 : vector<8x1024xi32>
    %c8_i32_276 = arith.constant 8 : i32
    %680 = vector.broadcast %c8_i32_276 : i32 to vector<8x1024xi32>
    %681 = arith.cmpi slt, %679, %680 : vector<8x1024xi32>
    %682 = arith.andi %674, %681 : vector<8x1024xi1>
    %cst_277 = arith.constant 0.000000e+00 : f32
    %683 = vector.broadcast %cst_277 : f32 to vector<8x1024xf32>
    %684 = arith.select %682, %670, %683 : vector<8x1024xi1>, vector<8x1024xf32>
    %c88_278 = arith.constant 88 : index
    %c0_279 = arith.constant 0 : index
    %685 = vector.load %arg5[%c88_278, %c0_279] : memref<112x1024xf32, #tpu.memory_space<vmem>>, vector<8x1024xf32>
    tpu.vector_store %arg5[%c88_278, %c0_279], %684 {strides = array<i32>} : memref<112x1024xf32, #tpu.memory_space<vmem>>, vector<8x1024xf32>,
    %c953_i32_280 = arith.constant 953 : i32
    %686 = tpu.dynamic_rotate %390 by %c953_i32_280 dim 1 : vector<8x1024xf32>, i32 -> vector<8x1024xf32>
    %c952_i32_281 = arith.constant 952 : i32
    %687 = tpu.dynamic_rotate %390 by %c952_i32_281 dim 1 : vector<8x1024xf32>, i32 -> vector<8x1024xf32>
    %688 = vector.shape_cast %13 : vector<8x1xi1> to vector<8x1xi1>
    %689 = vector.broadcast %688 : vector<8x1xi1> to vector<8x1024xi1>
    %690 = arith.select %689, %686, %687 : vector<8x1024xi1>, vector<8x1024xf32>
    %c1_i32_282 = arith.constant 1 : i32
    %691 = vector.broadcast %c1_i32_282 : i32 to vector<8x1024xi32>
    %692 = arith.addi %4, %691 : vector<8x1024xi32>
    %c8_i32_283 = arith.constant 8 : i32
    %693 = vector.broadcast %c8_i32_283 : i32 to vector<8x1024xi32>
    %694 = arith.cmpi slt, %692, %693 : vector<8x1024xi32>
    %c1_i32_284 = arith.constant 1 : i32
    %695 = vector.broadcast %c1_i32_284 : i32 to vector<8x1024xi32>
    %696 = arith.addi %8, %695 : vector<8x1024xi32>
    %c8_i32_285 = arith.constant 8 : i32
    %697 = vector.broadcast %c8_i32_285 : i32 to vector<8x1024xi32>
    %698 = arith.cmpi slt, %696, %697 : vector<8x1024xi32>
    %c-1_i32_286 = arith.constant -1 : i32
    %c0_i32_287 = arith.constant 0 : i32
    %699 = vector.broadcast %c-1_i32_286 : i32 to vector<8x1xi32>
    %700 = vector.broadcast %c0_i32_287 : i32 to vector<8x1xi32>
    %701 = arith.select %13, %699, %700 : vector<8x1xi1>, vector<8x1xi32>
    %702 = vector.broadcast %701 : vector<8x1xi32> to vector<8x1024xi32>
    %703 = arith.addi %10, %702 : vector<8x1024xi32>
    %c0_i32_288 = arith.constant 0 : i32
    %704 = vector.broadcast %c0_i32_288 : i32 to vector<8x1024xi32>
    %705 = arith.cmpi sge, %703, %704 : vector<8x1024xi32>
    %706 = arith.andi %694, %698 : vector<8x1024xi1>
    %707 = arith.andi %706, %705 : vector<8x1024xi1>
    %cst_289 = arith.constant 0.000000e+00 : f32
    %708 = vector.broadcast %cst_289 : f32 to vector<8x1024xf32>
    %709 = arith.select %707, %690, %708 : vector<8x1024xi1>, vector<8x1024xf32>
    %c96_290 = arith.constant 96 : index
    %c0_291 = arith.constant 0 : index
    %710 = vector.load %arg5[%c96_290, %c0_291] : memref<112x1024xf32, #tpu.memory_space<vmem>>, vector<8x1024xf32>
    tpu.vector_store %arg5[%c96_290, %c0_291], %709 {strides = array<i32>} : memref<112x1024xf32, #tpu.memory_space<vmem>>, vector<8x1024xf32>,
    %c951_i32_292 = arith.constant 951 : i32
    %711 = tpu.dynamic_rotate %390 by %c951_i32_292 dim 1 : vector<8x1024xf32>, i32 -> vector<8x1024xf32>
    %c1_i32_293 = arith.constant 1 : i32
    %c8_i32_294 = arith.constant 8 : i32
    %712 = vector.broadcast %c1_i32_293 : i32 to vector<8x1xi32>
    %713 = vector.broadcast %c8_i32_294 : i32 to vector<8x1xi32>
    %714 = arith.select %13, %712, %713 : vector<8x1xi1>, vector<8x1xi32>
    %715 = vector.broadcast %714 : vector<8x1xi32> to vector<8x1024xi32>
    %716 = arith.addi %4, %715 : vector<8x1024xi32>
    %c8_i32_295 = arith.constant 8 : i32
    %717 = vector.broadcast %c8_i32_295 : i32 to vector<8x1024xi32>
    %718 = arith.cmpi slt, %716, %717 : vector<8x1024xi32>
    %c1_i32_296 = arith.constant 1 : i32
    %c8_i32_297 = arith.constant 8 : i32
    %719 = vector.broadcast %c1_i32_296 : i32 to vector<8x1xi32>
    %720 = vector.broadcast %c8_i32_297 : i32 to vector<8x1xi32>
    %721 = arith.select %13, %719, %720 : vector<8x1xi1>, vector<8x1xi32>
    %722 = vector.broadcast %721 : vector<8x1xi32> to vector<8x1024xi32>
    %723 = arith.addi %8, %722 : vector<8x1024xi32>
    %c8_i32_298 = arith.constant 8 : i32
    %724 = vector.broadcast %c8_i32_298 : i32 to vector<8x1024xi32>
    %725 = arith.cmpi slt, %723, %724 : vector<8x1024xi32>
    %c1_i32_299 = arith.constant 1 : i32
    %c8_i32_300 = arith.constant 8 : i32
    %726 = vector.broadcast %c1_i32_299 : i32 to vector<8x1xi32>
    %727 = vector.broadcast %c8_i32_300 : i32 to vector<8x1xi32>
    %728 = arith.select %13, %726, %727 : vector<8x1xi1>, vector<8x1xi32>
    %729 = vector.broadcast %728 : vector<8x1xi32> to vector<8x1024xi32>
    %730 = arith.addi %10, %729 : vector<8x1024xi32>
    %c8_i32_301 = arith.constant 8 : i32
    %731 = vector.broadcast %c8_i32_301 : i32 to vector<8x1024xi32>
    %732 = arith.cmpi slt, %730, %731 : vector<8x1024xi32>
    %733 = arith.andi %718, %725 : vector<8x1024xi1>
    %734 = arith.andi %733, %732 : vector<8x1024xi1>
    %cst_302 = arith.constant 0.000000e+00 : f32
    %735 = vector.broadcast %cst_302 : f32 to vector<8x1024xf32>
    %736 = arith.select %734, %711, %735 : vector<8x1024xi1>, vector<8x1024xf32>
    %c104_303 = arith.constant 104 : index
    %c0_304 = arith.constant 0 : index
    %737 = vector.load %arg5[%c104_303, %c0_304] : memref<112x1024xf32, #tpu.memory_space<vmem>>, vector<8x1024xf32>
    tpu.vector_store %arg5[%c104_303, %c0_304], %736 {strides = array<i32>} : memref<112x1024xf32, #tpu.memory_space<vmem>>, vector<8x1024xf32>,
    %c0_305 = arith.constant 0 : index
    %c0_306 = arith.constant 0 : index
    %738 = vector.load %arg2[%c0_305, %c0_306] : memref<4x112xf32, #tpu.memory_space<vmem>>, vector<4x112xf32>
    %c0_307 = arith.constant 0 : index
    %c0_308 = arith.constant 0 : index
    %739 = vector.load %arg5[%c0_307, %c0_308] : memref<112x1024xf32, #tpu.memory_space<vmem>>, vector<112x1024xf32>
    %cst_309 = arith.constant dense<0.000000e+00> : vector<4x1024xf32>
    %740 = tpu.matmul %738, %739, %cst_309 {dimension_numbers = #tpu.dot_dimension_numbers<[1], [0], [0], [1], [0, 0, 1, 1], [], []>} : vector<4x112xf32>, vector<112x1024xf32>, vector<4x1024xf32> -> vector<4x1024xf32>
    %c0_310 = arith.constant 0 : index
    %c2 = arith.constant 2 : index
    %741 = vector.load %arg3[%c0_310, %c2] : memref<8x4xf32, #tpu.memory_space<vmem>>, vector<4x1xf32>
    %c0_311 = arith.constant 0 : index
    %c3 = arith.constant 3 : index
    %742 = vector.load %arg3[%c0_311, %c3] : memref<8x4xf32, #tpu.memory_space<vmem>>, vector<4x1xf32>
    %cst_312 = arith.constant dense<0.000000e+00> : vector<4xf32>
    %743 = vector.multi_reduction <add>, %740, %cst_312 [1] : vector<4x1024xf32> to vector<4xf32>
    %744 = vector.shape_cast %743 : vector<4xf32> to vector<4x1xf32>
    %cst_313 = arith.constant 1.024000e+03 : f32
    %745 = vector.broadcast %cst_313 : f32 to vector<4x1xf32>
    %746 = arith.divf %744, %745 : vector<4x1xf32>
    %747 = vector.broadcast %746 : vector<4x1xf32> to vector<4x1024xf32>
    %748 = arith.subf %740, %747 : vector<4x1024xf32>
    %749 = arith.mulf %748, %748 : vector<4x1024xf32>
    %cst_314 = arith.constant dense<0.000000e+00> : vector<4xf32>
    %750 = vector.multi_reduction <add>, %749, %cst_314 [1] : vector<4x1024xf32> to vector<4xf32>
    %751 = vector.shape_cast %750 : vector<4xf32> to vector<4x1xf32>
    %cst_315 = arith.constant 1.024000e+03 : f32
    %752 = vector.broadcast %cst_315 : f32 to vector<4x1xf32>
    %753 = arith.divf %751, %752 : vector<4x1xf32>
    %754 = vector.broadcast %746 : vector<4x1xf32> to vector<4x1024xf32>
    %755 = arith.subf %740, %754 : vector<4x1024xf32>
    %cst_316 = arith.constant 9.99999974E-6 : f32
    %756 = vector.broadcast %cst_316 : f32 to vector<4x1xf32>
    %757 = arith.addf %753, %756 : vector<4x1xf32>
    %758 = math.rsqrt %757 : vector<4x1xf32>
    %759 = vector.broadcast %758 : vector<4x1xf32> to vector<4x1024xf32>
    %760 = arith.mulf %755, %759 : vector<4x1024xf32>
    %761 = vector.broadcast %741 : vector<4x1xf32> to vector<4x1024xf32>
    %762 = arith.mulf %760, %761 : vector<4x1024xf32>
    %763 = vector.broadcast %742 : vector<4x1xf32> to vector<4x1024xf32>
    %764 = arith.addf %762, %763 : vector<4x1024xf32>
    %c0_317 = arith.constant 0 : index
    %c0_318 = arith.constant 0 : index
    %765 = vector.load %arg0[%c0_317, %c0_318] : memref<8x1024xf32, #tpu.memory_space<vmem>>, vector<4x1024xf32>
    %766 = arith.addf %764, %765 : vector<4x1024xf32>
    %cst_319 = arith.constant 0.000000e+00 : f32
    %767 = vector.broadcast %cst_319 : f32 to vector<4x1024xf32>
    %768 = arith.maximumf %766, %767 : vector<4x1024xf32>
    %c0_320 = arith.constant 0 : index
    %c0_321 = arith.constant 0 : index
    %769 = vector.load %arg4[%c0_320, %c0_321] : memref<4x1024xf32, #tpu.memory_space<vmem>>, vector<4x1024xf32>
    tpu.vector_store %arg4[%c0_320, %c0_321], %768 {strides = array<i32>} : memref<4x1024xf32, #tpu.memory_space<vmem>>, vector<4x1024xf32>,
    return
  }
}

</mosaic_0001>

<llo_original>
// kernel: tpu_custom_call.1
$region0: #{tpu_custom_call.1}
  #allocation0 [shape = 'u32[]', space=smem, size = 0x4, offset = 0x4, fixed_abs, tag = 'smem constant byte address 0x4 - core index']
  #allocation1 [shape = 'u32[144,128]{1,0:T(1,128)}', space=vmem, size = 0x12000, scoped, tag = 'internal scratch']
  #allocation2 [shape = 'f32[112,1024]{1,0:T(8,128)}', space=vmem, size = 0x70000, scoped, tag = 'scratch operand']
  %s0 = inlined_call_operand.hbm [shape: f32[8,1024], index: 0, kind: input, shape index: {}]
  %s1 = inlined_call_operand.vmem [shape: f32[8,112], index: 1, kind: input, shape index: {}]
  %s2 = inlined_call_operand.vmem [shape: f32[4,112], index: 2, kind: input, shape index: {}]
  %s3 = inlined_call_operand.vmem [shape: f32[8,4], index: 3, kind: input, shape index: {}]
  %s4 = inlined_call_operand.hbm [shape: f32[4,1024], index: 4, kind: output, shape index: {}]
  %s5 = sld [smem:[#allocation0]]
  $region30: #{tpu_custom_call.1} parent=0
    _
  %s7 = ssub.s32 1, %s5
  %s8 = scalar_select 0, %s7, %s5
  $region1: #{tpu_custom_call.1} parent=0
    #allocation3 [shape = 'u8[32768]{0}', space=vmem, size = 0x8000, scoped, tag = 'input window, operand 0, single buffered']
    #allocation4 [shape = 's32[1]{0}', space=sflag, size = 0x4, scoped, tag = 'scoped memory for tpu_custom_call.1']
    #allocation5 [shape = 's32[1]{0}', space=sflag, size = 0x4, scoped, tag = 'scoped memory for tpu_custom_call.1']
    #allocation6 [shape = 'u8[16384]{0}', space=vmem, size = 0x4000, scoped, tag = 'output window, operand 0, single buffered']
    %9 = vsyncpa [#allocation4], 0
    %10 = vsyncpa [#allocation5], 0
    // Predicated region
    $region2: #{tpu_custom_call.1} parent=1 // pred_check
      _
    $region3: #{tpu_custom_call.1} parent=1 // pred_check_branch
      %12 = sbr.rel (0) target = $region5
    $region4: #{tpu_custom_call.1} parent=1 // pred_region
      %s14 = ssub.s32 1024, 1024
      %15 = vsyncadd [#allocation4], %s14
      %s17 = sshll.u32 [#allocation3], 4
      %s18 = int_to_ptr.vmem [resolvable:$true] %s17
      %20 = dma.hbm_to_vmem [thread:$0]  %s0, 1024, %s18, [#allocation4]
    $region5: #{tpu_custom_call.1} parent=1 // pred_fallthru
      _
    // Predicated region
    $region6: #{tpu_custom_call.1} parent=1 // pred_check
      _
    $region7: #{tpu_custom_call.1} parent=1 // pred_check_branch
      %22 = sbr.rel (0) target = $region9
    $region8: #{tpu_custom_call.1} parent=1 // pred_region
      _
    $region9: #{tpu_custom_call.1} parent=1 // pred_fallthru
      _
    // Predicated region
    $region10: #{tpu_custom_call.1} parent=1 // pred_check
      _
    $region11: #{tpu_custom_call.1} parent=1 // pred_check_branch
      %24 = sbr.rel (0) target = $region13
    $region12: #{tpu_custom_call.1} parent=1 // pred_region
      _
    $region13: #{tpu_custom_call.1} parent=1 // pred_fallthru
      _
    // Predicated region
    $region14: #{tpu_custom_call.1} parent=1 // pred_check
      _
    $region15: #{tpu_custom_call.1} parent=1 // pred_check_branch
      %26 = sbr.rel (0) target = $region17
    $region16: #{tpu_custom_call.1} parent=1 // pred_region
      _
    $region17: #{tpu_custom_call.1} parent=1 // pred_fallthru
      _
    // Predicated region
    $region18: #{tpu_custom_call.1} parent=1 // pred_check
      _
    $region19: #{tpu_custom_call.1} parent=1 // pred_check_branch
      %28 = sbr.rel (0) target = $region21
    $region20: #{tpu_custom_call.1} parent=1 // pred_region
      %29 = dma.done [#allocation4], 1024
    $region21: #{tpu_custom_call.1} parent=1 // pred_fallthru
      _
    %v30 = vlaneseq
    %v31 = vand.u32 %v30, 127
    %v32 = vadd.s32 %v31, 128
    %v33 = vadd.s32 %v31, 256
    %v34 = vadd.s32 %v31, 384
    %v35 = vadd.s32 %v31, 512
    %v36 = vadd.s32 %v31, 640
    %v37 = vadd.s32 %v31, 768
    %v38 = vadd.s32 %v31, 896
    %v39 = vand.u32 %v31, 511
    %v40 = vand.u32 %v32, 511
    %v41 = vand.u32 %v33, 511
    %v42 = vand.u32 %v34, 511
    %v43 = vand.u32 %v35, 511
    %v44 = vand.u32 %v36, 511
    %v45 = vand.u32 %v37, 511
    %v46 = vand.u32 %v38, 511
    %v47 = vshra.s32 %v39, 6
    %v48 = vshra.s32 %v40, 6
    %v49 = vshra.s32 %v41, 6
    %v50 = vshra.s32 %v42, 6
    %v51 = vshra.s32 %v43, 6
    %v52 = vshra.s32 %v44, 6
    %v53 = vshra.s32 %v45, 6
    %v54 = vshra.s32 %v46, 6
    %v55 = vshra.s32 %v31, 3
    %v56 = vshra.s32 %v32, 3
    %v57 = vshra.s32 %v33, 3
    %v58 = vshra.s32 %v34, 3
    %v59 = vshra.s32 %v35, 3
    %v60 = vshra.s32 %v36, 3
    %v61 = vshra.s32 %v37, 3
    %v62 = vshra.s32 %v38, 3
    %v63 = vand.u32 %v55, 7
    %v64 = vand.u32 %v56, 7
    %v65 = vand.u32 %v57, 7
    %v66 = vand.u32 %v58, 7
    %v67 = vand.u32 %v59, 7
    %v68 = vand.u32 %v60, 7
    %v69 = vand.u32 %v61, 7
    %v70 = vand.u32 %v62, 7
    %v71 = vand.u32 %v31, 7
    %v72 = vand.u32 %v32, 7
    %v73 = vand.u32 %v33, 7
    %v74 = vand.u32 %v34, 7
    %v75 = vand.u32 %v35, 7
    %v76 = vand.u32 %v36, 7
    %v77 = vand.u32 %v37, 7
    %v78 = vand.u32 %v38, 7
    %v79 = vlaneseq
    %v80 = vshrl.u32 %v79, 7
    %vm81 = vcmp.lt.s32.totalorder %v80, 4
    %v82 = vld [vmem:[#allocation3] sm:$0xff]
    %v83 = vld [vmem:[#allocation3 + $0x8] sm:$0xff]
    %v84 = vld [vmem:[#allocation3 + $0x10] sm:$0xff]
    %v85 = vld [vmem:[#allocation3 + $0x18] sm:$0xff]
    %v86 = vld [vmem:[#allocation3 + $0x20] sm:$0xff]
    %v87 = vld [vmem:[#allocation3 + $0x28] sm:$0xff]
    %v88 = vld [vmem:[#allocation3 + $0x30] sm:$0xff]
    %v89 = vld [vmem:[#allocation3 + $0x38] sm:$0xff]
    %90 = vrot.lane.b32.xlu0 %v82, 73
    %v91 = vpop.permute.xlu0 %90
    %92 = vrot.lane.b32.xlu0 %v83, 73
    %v93 = vpop.permute.xlu0 %92
    %94 = vrot.lane.b32.xlu0 %v84, 73
    %v95 = vpop.permute.xlu0 %94
    %96 = vrot.lane.b32.xlu0 %v85, 73
    %v97 = vpop.permute.xlu0 %96
    %98 = vrot.lane.b32.xlu0 %v86, 73
    %v99 = vpop.permute.xlu0 %98
    %100 = vrot.lane.b32.xlu0 %v87, 73
    %v101 = vpop.permute.xlu0 %100
    %102 = vrot.lane.b32.xlu0 %v88, 73
    %v103 = vpop.permute.xlu0 %102
    %104 = vrot.lane.b32.xlu0 %v89, 73
    %v105 = vpop.permute.xlu0 %104
    %vm106 = vcmp.lt.s32.totalorder %v31, 73
    %v107 = vsel %vm106, %v103, %v105
    %v108 = vsel %vm106, %v101, %v103
    %v109 = vsel %vm106, %v99, %v101
    %v110 = vsel %vm106, %v97, %v99
    %v111 = vsel %vm106, %v95, %v97
    %v112 = vsel %vm106, %v93, %v95
    %v113 = vsel %vm106, %v91, %v93
    %v114 = vsel %vm106, %v105, %v91
    %115 = vrot.lane.b32.xlu0 %v82, 72
    %v116 = vpop.permute.xlu0 %115
    %117 = vrot.lane.b32.xlu0 %v83, 72
    %v118 = vpop.permute.xlu0 %117
    %119 = vrot.lane.b32.xlu0 %v84, 72
    %v120 = vpop.permute.xlu0 %119
    %121 = vrot.lane.b32.xlu0 %v85, 72
    %v122 = vpop.permute.xlu0 %121
    %123 = vrot.lane.b32.xlu0 %v86, 72
    %v124 = vpop.permute.xlu0 %123
    %125 = vrot.lane.b32.xlu0 %v87, 72
    %v126 = vpop.permute.xlu0 %125
    %127 = vrot.lane.b32.xlu0 %v88, 72
    %v128 = vpop.permute.xlu0 %127
    %129 = vrot.lane.b32.xlu0 %v89, 72
    %v130 = vpop.permute.xlu0 %129
    %vm131 = vcmp.lt.s32.totalorder %v31, 72
    %v132 = vsel %vm131, %v128, %v130
    %v133 = vsel %vm131, %v126, %v128
    %v134 = vsel %vm131, %v124, %v126
    %v135 = vsel %vm131, %v122, %v124
    %v136 = vsel %vm131, %v120, %v122
    %v137 = vsel %vm131, %v118, %v120
    %v138 = vsel %vm131, %v116, %v118
    %v139 = vsel %vm131, %v130, %v116
    %v140 = vsel %vm81, 1, 0
    %vm141 = vcmp.eq.s32.totalorder %v140, 1
    %v142 = vsel %vm141, %v114, %v139
    %v143 = vsel %vm141, %v113, %v138
    %v144 = vsel %vm141, %v112, %v137
    %v145 = vsel %vm141, %v111, %v136
    %v146 = vsel %vm141, %v110, %v135
    %v147 = vsel %vm141, %v109, %v134
    %v148 = vsel %vm141, %v108, %v133
    %v149 = vsel %vm141, %v107, %v132
    %v150 = vadd.s32 %v47, 4294967295
    %v151 = vadd.s32 %v48, 4294967295
    %v152 = vadd.s32 %v49, 4294967295
    %v153 = vadd.s32 %v50, 4294967295
    %v154 = vadd.s32 %v51, 4294967295
    %v155 = vadd.s32 %v52, 4294967295
    %v156 = vadd.s32 %v53, 4294967295
    %v157 = vadd.s32 %v54, 4294967295
    %vm158 = vcmp.ge.s32.totalorder %v150, 0
    %vm159 = vcmp.ge.s32.totalorder %v151, 0
    %vm160 = vcmp.ge.s32.totalorder %v152, 0
    %vm161 = vcmp.ge.s32.totalorder %v153, 0
    %vm162 = vcmp.ge.s32.totalorder %v154, 0
    %vm163 = vcmp.ge.s32.totalorder %v155, 0
    %vm164 = vcmp.ge.s32.totalorder %v156, 0
    %vm165 = vcmp.ge.s32.totalorder %v157, 0
    %v166 = vadd.s32 %v63, 4294967295
    %v167 = vadd.s32 %v64, 4294967295
    %v168 = vadd.s32 %v65, 4294967295
    %v169 = vadd.s32 %v66, 4294967295
    %v170 = vadd.s32 %v67, 4294967295
    %v171 = vadd.s32 %v68, 4294967295
    %v172 = vadd.s32 %v69, 4294967295
    %v173 = vadd.s32 %v70, 4294967295
    %vm174 = vcmp.ge.s32.totalorder %v166, 0
    %vm175 = vcmp.ge.s32.totalorder %v167, 0
    %vm176 = vcmp.ge.s32.totalorder %v168, 0
    %vm177 = vcmp.ge.s32.totalorder %v169, 0
    %vm178 = vcmp.ge.s32.totalorder %v170, 0
    %vm179 = vcmp.ge.s32.totalorder %v171, 0
    %vm180 = vcmp.ge.s32.totalorder %v172, 0
    %vm181 = vcmp.ge.s32.totalorder %v173, 0
    %v182 = vsel %vm81, 4294967295, 0
    %v183 = vadd.s32 %v71, %v182
    %v184 = vadd.s32 %v72, %v182
    %v185 = vadd.s32 %v73, %v182
    %v186 = vadd.s32 %v74, %v182
    %v187 = vadd.s32 %v75, %v182
    %v188 = vadd.s32 %v76, %v182
    %v189 = vadd.s32 %v77, %v182
    %v190 = vadd.s32 %v78, %v182
    %vm191 = vcmp.ge.s32.totalorder %v183, 0
    %vm192 = vcmp.ge.s32.totalorder %v184, 0
    %vm193 = vcmp.ge.s32.totalorder %v185, 0
    %vm194 = vcmp.ge.s32.totalorder %v186, 0
    %vm195 = vcmp.ge.s32.totalorder %v187, 0
    %vm196 = vcmp.ge.s32.totalorder %v188, 0
    %vm197 = vcmp.ge.s32.totalorder %v189, 0
    %vm198 = vcmp.ge.s32.totalorder %v190, 0
    %vm199 = vmand %vm158, %vm174
    %vm200 = vmand %vm159, %vm175
    %vm201 = vmand %vm160, %vm176
    %vm202 = vmand %vm161, %vm177
    %vm203 = vmand %vm162, %vm178
    %vm204 = vmand %vm163, %vm179
    %vm205 = vmand %vm164, %vm180
    %vm206 = vmand %vm165, %vm181
    %vm207 = vmand %vm199, %vm191
    %vm208 = vmand %vm200, %vm192
    %vm209 = vmand %vm201, %vm193
    %vm210 = vmand %vm202, %vm194
    %vm211 = vmand %vm203, %vm195
    %vm212 = vmand %vm204, %vm196
    %vm213 = vmand %vm205, %vm197
    %vm214 = vmand %vm206, %vm198
    %v215 = vsel %vm207, %v142, 0.0
    %v216 = vsel %vm208, %v143, 0.0
    %v217 = vsel %vm209, %v144, 0.0
    %v218 = vsel %vm210, %v145, 0.0
    %v219 = vsel %vm211, %v146, 0.0
    %v220 = vsel %vm212, %v147, 0.0
    %v221 = vsel %vm213, %v148, 0.0
    %v222 = vsel %vm214, %v149, 0.0
    %223 = vst [vmem:[#allocation2] sm:$0xff] %v215
    %224 = vst [vmem:[#allocation2 + $0x8] sm:$0xff] %v216
    %225 = vst [vmem:[#allocation2 + $0x10] sm:$0xff] %v217
    %226 = vst [vmem:[#allocation2 + $0x18] sm:$0xff] %v218
    %227 = vst [vmem:[#allocation2 + $0x20] sm:$0xff] %v219
    %228 = vst [vmem:[#allocation2 + $0x28] sm:$0xff] %v220
    %229 = vst [vmem:[#allocation2 + $0x30] sm:$0xff] %v221
    %230 = vst [vmem:[#allocation2 + $0x38] sm:$0xff] %v222
    %231 = vrot.lane.b32.xlu0 %v82, 71
    %v232 = vpop.permute.xlu0 %231
    %233 = vrot.lane.b32.xlu0 %v83, 71
    %v234 = vpop.permute.xlu0 %233
    %235 = vrot.lane.b32.xlu0 %v84, 71
    %v236 = vpop.permute.xlu0 %235
    %237 = vrot.lane.b32.xlu0 %v85, 71
    %v238 = vpop.permute.xlu0 %237
    %239 = vrot.lane.b32.xlu0 %v86, 71
    %v240 = vpop.permute.xlu0 %239
    %241 = vrot.lane.b32.xlu0 %v87, 71
    %v242 = vpop.permute.xlu0 %241
    %243 = vrot.lane.b32.xlu0 %v88, 71
    %v244 = vpop.permute.xlu0 %243
    %245 = vrot.lane.b32.xlu0 %v89, 71
    %v246 = vpop.permute.xlu0 %245
    %vm247 = vcmp.lt.s32.totalorder %v31, 71
    %v248 = vsel %vm247, %v244, %v246
    %v249 = vsel %vm247, %v242, %v244
    %v250 = vsel %vm247, %v240, %v242
    %v251 = vsel %vm247, %v238, %v240
    %v252 = vsel %vm247, %v236, %v238
    %v253 = vsel %vm247, %v234, %v236
    %v254 = vsel %vm247, %v232, %v234
    %v255 = vsel %vm247, %v246, %v232
    %256 = vrot.lane.b32.xlu0 %v82, 65
    %v257 = vpop.permute.xlu0 %256
    %258 = vrot.lane.b32.xlu0 %v83, 65
    %v259 = vpop.permute.xlu0 %258
    %260 = vrot.lane.b32.xlu0 %v84, 65
    %v261 = vpop.permute.xlu0 %260
    %262 = vrot.lane.b32.xlu0 %v85, 65
    %v263 = vpop.permute.xlu0 %262
    %264 = vrot.lane.b32.xlu0 %v86, 65
    %v265 = vpop.permute.xlu0 %264
    %266 = vrot.lane.b32.xlu0 %v87, 65
    %v267 = vpop.permute.xlu0 %266
    %268 = vrot.lane.b32.xlu0 %v88, 65
    %v269 = vpop.permute.xlu0 %268
    %270 = vrot.lane.b32.xlu0 %v89, 65
    %v271 = vpop.permute.xlu0 %270
    %vm272 = vcmp.lt.s32.totalorder %v31, 65
    %v273 = vsel %vm272, %v269, %v271
    %v274 = vsel %vm272, %v267, %v269
    %v275 = vsel %vm272, %v265, %v267
    %v276 = vsel %vm272, %v263, %v265
    %v277 = vsel %vm272, %v261, %v263
    %v278 = vsel %vm272, %v259, %v261
    %v279 = vsel %vm272, %v257, %v259
    %v280 = vsel %vm272, %v271, %v257
    %v281 = vsel %vm141, %v255, %v280
    %v282 = vsel %vm141, %v254, %v279
    %v283 = vsel %vm141, %v253, %v278
    %v284 = vsel %vm141, %v252, %v277
    %v285 = vsel %vm141, %v251, %v276
    %v286 = vsel %vm141, %v250, %v275
    %v287 = vsel %vm141, %v249, %v274
    %v288 = vsel %vm141, %v248, %v273
    %v289 = vadd.s32 %v63, %v182
    %v290 = vadd.s32 %v64, %v182
    %v291 = vadd.s32 %v65, %v182
    %v292 = vadd.s32 %v66, %v182
    %v293 = vadd.s32 %v67, %v182
    %v294 = vadd.s32 %v68, %v182
    %v295 = vadd.s32 %v69, %v182
    %v296 = vadd.s32 %v70, %v182
    %vm297 = vcmp.ge.s32.totalorder %v289, 0
    %vm298 = vcmp.ge.s32.totalorder %v290, 0
    %vm299 = vcmp.ge.s32.totalorder %v291, 0
    %vm300 = vcmp.ge.s32.totalorder %v292, 0
    %vm301 = vcmp.ge.s32.totalorder %v293, 0
    %vm302 = vcmp.ge.s32.totalorder %v294, 0
    %vm303 = vcmp.ge.s32.totalorder %v295, 0
    %vm304 = vcmp.ge.s32.totalorder %v296, 0
    %v305 = vsel %vm81, 1, 4294967295
    %v306 = vadd.s32 %v71, %v305
    %v307 = vadd.s32 %v72, %v305
    %v308 = vadd.s32 %v73, %v305
    %v309 = vadd.s32 %v74, %v305
    %v310 = vadd.s32 %v75, %v305
    %v311 = vadd.s32 %v76, %v305
    %v312 = vadd.s32 %v77, %v305
    %v313 = vadd.s32 %v78, %v305
    %vm314 = vcmp.ge.s32.totalorder %v306, 0
    %vm315 = vcmp.ge.s32.totalorder %v307, 0
    %vm316 = vcmp.ge.s32.totalorder %v308, 0
    %vm317 = vcmp.ge.s32.totalorder %v309, 0
    %vm318 = vcmp.ge.s32.totalorder %v310, 0
    %vm319 = vcmp.ge.s32.totalorder %v311, 0
    %vm320 = vcmp.ge.s32.totalorder %v312, 0
    %vm321 = vcmp.ge.s32.totalorder %v313, 0
    %vm322 = vcmp.lt.s32.totalorder %v306, 8
    %vm323 = vcmp.lt.s32.totalorder %v307, 8
    %vm324 = vcmp.lt.s32.totalorder %v308, 8
    %vm325 = vcmp.lt.s32.totalorder %v309, 8
    %vm326 = vcmp.lt.s32.totalorder %v310, 8
    %vm327 = vcmp.lt.s32.totalorder %v311, 8
    %vm328 = vcmp.lt.s32.totalorder %v312, 8
    %vm329 = vcmp.lt.s32.totalorder %v313, 8
    %vm330 = vmand %vm158, %vm297
    %vm331 = vmand %vm159, %vm298
    %vm332 = vmand %vm160, %vm299
    %vm333 = vmand %vm161, %vm300
    %vm334 = vmand %vm162, %vm301
    %vm335 = vmand %vm163, %vm302
    %vm336 = vmand %vm164, %vm303
    %vm337 = vmand %vm165, %vm304
    %vm338 = vmand %vm330, %vm314
    %vm339 = vmand %vm331, %vm315
    %vm340 = vmand %vm332, %vm316
    %vm341 = vmand %vm333, %vm317
    %vm342 = vmand %vm334, %vm318
    %vm343 = vmand %vm335, %vm319
    %vm344 = vmand %vm336, %vm320
    %vm345 = vmand %vm337, %vm321
    %vm346 = vmand %vm338, %vm322
    %vm347 = vmand %vm339, %vm323
    %vm348 = vmand %vm340, %vm324
    %vm349 = vmand %vm341, %vm325
    %vm350 = vmand %vm342, %vm326
    %vm351 = vmand %vm343, %vm327
    %vm352 = vmand %vm344, %vm328
    %vm353 = vmand %vm345, %vm329
    %v354 = vsel %vm346, %v281, 0.0
    %v355 = vsel %vm347, %v282, 0.0
    %v356 = vsel %vm348, %v283, 0.0
    %v357 = vsel %vm349, %v284, 0.0
    %v358 = vsel %vm350, %v285, 0.0
    %v359 = vsel %vm351, %v286, 0.0
    %v360 = vsel %vm352, %v287, 0.0
    %v361 = vsel %vm353, %v288, 0.0
    %362 = vst [vmem:[#allocation2 + $0x40] sm:$0xff] %v354
    %363 = vst [vmem:[#allocation2 + $0x48] sm:$0xff] %v355
    %364 = vst [vmem:[#allocation2 + $0x50] sm:$0xff] %v356
    %365 = vst [vmem:[#allocation2 + $0x58] sm:$0xff] %v357
    %366 = vst [vmem:[#allocation2 + $0x60] sm:$0xff] %v358
    %367 = vst [vmem:[#allocation2 + $0x68] sm:$0xff] %v359
    %368 = vst [vmem:[#allocation2 + $0x70] sm:$0xff] %v360
    %369 = vst [vmem:[#allocation2 + $0x78] sm:$0xff] %v361
    %370 = vrot.lane.b32.xlu0 %v82, 64
    %v371 = vpop.permute.xlu0 %370
    %372 = vrot.lane.b32.xlu0 %v83, 64
    %v373 = vpop.permute.xlu0 %372
    %374 = vrot.lane.b32.xlu0 %v84, 64
    %v375 = vpop.permute.xlu0 %374
    %376 = vrot.lane.b32.xlu0 %v85, 64
    %v377 = vpop.permute.xlu0 %376
    %378 = vrot.lane.b32.xlu0 %v86, 64
    %v379 = vpop.permute.xlu0 %378
    %380 = vrot.lane.b32.xlu0 %v87, 64
    %v381 = vpop.permute.xlu0 %380
    %382 = vrot.lane.b32.xlu0 %v88, 64
    %v383 = vpop.permute.xlu0 %382
    %384 = vrot.lane.b32.xlu0 %v89, 64
    %v385 = vpop.permute.xlu0 %384
    %vm386 = vcmp.lt.s32.totalorder %v31, 64
    %v387 = vsel %vm386, %v383, %v385
    %v388 = vsel %vm386, %v381, %v383
    %v389 = vsel %vm386, %v379, %v381
    %v390 = vsel %vm386, %v377, %v379
    %v391 = vsel %vm386, %v375, %v377
    %v392 = vsel %vm386, %v373, %v375
    %v393 = vsel %vm386, %v371, %v373
    %v394 = vsel %vm386, %v385, %v371
    %395 = vrot.lane.b32.xlu0 %v82, 63
    %v396 = vpop.permute.xlu0 %395
    %397 = vrot.lane.b32.xlu0 %v83, 63
    %v398 = vpop.permute.xlu0 %397
    %399 = vrot.lane.b32.xlu0 %v84, 63
    %v400 = vpop.permute.xlu0 %399
    %401 = vrot.lane.b32.xlu0 %v85, 63
    %v402 = vpop.permute.xlu0 %401
    %403 = vrot.lane.b32.xlu0 %v86, 63
    %v404 = vpop.permute.xlu0 %403
    %405 = vrot.lane.b32.xlu0 %v87, 63
    %v406 = vpop.permute.xlu0 %405
    %407 = vrot.lane.b32.xlu0 %v88, 63
    %v408 = vpop.permute.xlu0 %407
    %409 = vrot.lane.b32.xlu0 %v89, 63
    %v410 = vpop.permute.xlu0 %409
    %vm411 = vcmp.lt.s32.totalorder %v31, 63
    %v412 = vsel %vm411, %v408, %v410
    %v413 = vsel %vm411, %v406, %v408
    %v414 = vsel %vm411, %v404, %v406
    %v415 = vsel %vm411, %v402, %v404
    %v416 = vsel %vm411, %v400, %v402
    %v417 = vsel %vm411, %v398, %v400
    %v418 = vsel %vm411, %v396, %v398
    %v419 = vsel %vm411, %v410, %v396
    %v420 = vsel %vm141, %v394, %v419
    %v421 = vsel %vm141, %v393, %v418
    %v422 = vsel %vm141, %v392, %v417
    %v423 = vsel %vm141, %v391, %v416
    %v424 = vsel %vm141, %v390, %v415
    %v425 = vsel %vm141, %v389, %v414
    %v426 = vsel %vm141, %v388, %v413
    %v427 = vsel %vm141, %v387, %v412
    %v428 = vsel %vm81, 0, 1
    %v429 = vadd.s32 %v71, %v428
    %v430 = vadd.s32 %v72, %v428
    %v431 = vadd.s32 %v73, %v428
    %v432 = vadd.s32 %v74, %v428
    %v433 = vadd.s32 %v75, %v428
    %v434 = vadd.s32 %v76, %v428
    %v435 = vadd.s32 %v77, %v428
    %v436 = vadd.s32 %v78, %v428
    %vm437 = vcmp.lt.s32.totalorder %v429, 8
    %vm438 = vcmp.lt.s32.totalorder %v430, 8
    %vm439 = vcmp.lt.s32.totalorder %v431, 8
    %vm440 = vcmp.lt.s32.totalorder %v432, 8
    %vm441 = vcmp.lt.s32.totalorder %v433, 8
    %vm442 = vcmp.lt.s32.totalorder %v434, 8
    %vm443 = vcmp.lt.s32.totalorder %v435, 8
    %vm444 = vcmp.lt.s32.totalorder %v436, 8
    %vm445 = vmand %vm158, %vm437
    %vm446 = vmand %vm159, %vm438
    %vm447 = vmand %vm160, %vm439
    %vm448 = vmand %vm161, %vm440
    %vm449 = vmand %vm162, %vm441
    %vm450 = vmand %vm163, %vm442
    %vm451 = vmand %vm164, %vm443
    %vm452 = vmand %vm165, %vm444
    %v453 = vsel %vm445, %v420, 0.0
    %v454 = vsel %vm446, %v421, 0.0
    %v455 = vsel %vm447, %v422, 0.0
    %v456 = vsel %vm448, %v423, 0.0
    %v457 = vsel %vm449, %v424, 0.0
    %v458 = vsel %vm450, %v425, 0.0
    %v459 = vsel %vm451, %v426, 0.0
    %v460 = vsel %vm452, %v427, 0.0
    %461 = vst [vmem:[#allocation2 + $0x80] sm:$0xff] %v453
    %462 = vst [vmem:[#allocation2 + $0x88] sm:$0xff] %v454
    %463 = vst [vmem:[#allocation2 + $0x90] sm:$0xff] %v455
    %464 = vst [vmem:[#allocation2 + $0x98] sm:$0xff] %v456
    %465 = vst [vmem:[#allocation2 + $0xa0] sm:$0xff] %v457
    %466 = vst [vmem:[#allocation2 + $0xa8] sm:$0xff] %v458
    %467 = vst [vmem:[#allocation2 + $0xb0] sm:$0xff] %v459
    %468 = vst [vmem:[#allocation2 + $0xb8] sm:$0xff] %v460
    %469 = vrot.lane.b32.xlu0 %v82, 57
    %v470 = vpop.permute.xlu0 %469
    %471 = vrot.lane.b32.xlu0 %v83, 57
    %v472 = vpop.permute.xlu0 %471
    %473 = vrot.lane.b32.xlu0 %v84, 57
    %v474 = vpop.permute.xlu0 %473
    %475 = vrot.lane.b32.xlu0 %v85, 57
    %v476 = vpop.permute.xlu0 %475
    %477 = vrot.lane.b32.xlu0 %v86, 57
    %v478 = vpop.permute.xlu0 %477
    %479 = vrot.lane.b32.xlu0 %v87, 57
    %v480 = vpop.permute.xlu0 %479
    %481 = vrot.lane.b32.xlu0 %v88, 57
    %v482 = vpop.permute.xlu0 %481
    %483 = vrot.lane.b32.xlu0 %v89, 57
    %v484 = vpop.permute.xlu0 %483
    %vm485 = vcmp.lt.s32.totalorder %v31, 57
    %v486 = vsel %vm485, %v482, %v484
    %v487 = vsel %vm485, %v480, %v482
    %v488 = vsel %vm485, %v478, %v480
    %v489 = vsel %vm485, %v476, %v478
    %v490 = vsel %vm485, %v474, %v476
    %v491 = vsel %vm485, %v472, %v474
    %v492 = vsel %vm485, %v470, %v472
    %v493 = vsel %vm485, %v484, %v470
    %494 = vrot.lane.b32.xlu0 %v82, 56
    %v495 = vpop.permute.xlu0 %494
    %496 = vrot.lane.b32.xlu0 %v83, 56
    %v497 = vpop.permute.xlu0 %496
    %498 = vrot.lane.b32.xlu0 %v84, 56
    %v499 = vpop.permute.xlu0 %498
    %500 = vrot.lane.b32.xlu0 %v85, 56
    %v501 = vpop.permute.xlu0 %500
    %502 = vrot.lane.b32.xlu0 %v86, 56
    %v503 = vpop.permute.xlu0 %502
    %504 = vrot.lane.b32.xlu0 %v87, 56
    %v505 = vpop.permute.xlu0 %504
    %506 = vrot.lane.b32.xlu0 %v88, 56
    %v507 = vpop.permute.xlu0 %506
    %508 = vrot.lane.b32.xlu0 %v89, 56
    %v509 = vpop.permute.xlu0 %508
    %vm510 = vcmp.lt.s32.totalorder %v31, 56
    %v511 = vsel %vm510, %v507, %v509
    %v512 = vsel %vm510, %v505, %v507
    %v513 = vsel %vm510, %v503, %v505
    %v514 = vsel %vm510, %v501, %v503
    %v515 = vsel %vm510, %v499, %v501
    %v516 = vsel %vm510, %v497, %v499
    %v517 = vsel %vm510, %v495, %v497
    %v518 = vsel %vm510, %v509, %v495
    %v519 = vsel %vm141, %v493, %v518
    %v520 = vsel %vm141, %v492, %v517
    %v521 = vsel %vm141, %v491, %v516
    %v522 = vsel %vm141, %v490, %v515
    %v523 = vsel %vm141, %v489, %v514
    %v524 = vsel %vm141, %v488, %v513
    %v525 = vsel %vm141, %v487, %v512
    %v526 = vsel %vm141, %v486, %v511
    %v527 = vadd.s32 %v63, 1
    %v528 = vadd.s32 %v64, 1
    %v529 = vadd.s32 %v65, 1
    %v530 = vadd.s32 %v66, 1
    %v531 = vadd.s32 %v67, 1
    %v532 = vadd.s32 %v68, 1
    %v533 = vadd.s32 %v69, 1
    %v534 = vadd.s32 %v70, 1
    %vm535 = vcmp.lt.s32.totalorder %v527, 8
    %vm536 = vcmp.lt.s32.totalorder %v528, 8
    %vm537 = vcmp.lt.s32.totalorder %v529, 8
    %vm538 = vcmp.lt.s32.totalorder %v530, 8
    %vm539 = vcmp.lt.s32.totalorder %v531, 8
    %vm540 = vcmp.lt.s32.totalorder %v532, 8
    %vm541 = vcmp.lt.s32.totalorder %v533, 8
    %vm542 = vcmp.lt.s32.totalorder %v534, 8
    %vm543 = vmand %vm158, %vm535
    %vm544 = vmand %vm159, %vm536
    %vm545 = vmand %vm160, %vm537
    %vm546 = vmand %vm161, %vm538
    %vm547 = vmand %vm162, %vm539
    %vm548 = vmand %vm163, %vm540
    %vm549 = vmand %vm164, %vm541
    %vm550 = vmand %vm165, %vm542
    %vm551 = vmand %vm543, %vm191
    %vm552 = vmand %vm544, %vm192
    %vm553 = vmand %vm545, %vm193
    %vm554 = vmand %vm546, %vm194
    %vm555 = vmand %vm547, %vm195
    %vm556 = vmand %vm548, %vm196
    %vm557 = vmand %vm549, %vm197
    %vm558 = vmand %vm550, %vm198
    %v559 = vsel %vm551, %v519, 0.0
    %v560 = vsel %vm552, %v520, 0.0
    %v561 = vsel %vm553, %v521, 0.0
    %v562 = vsel %vm554, %v522, 0.0
    %v563 = vsel %vm555, %v523, 0.0
    %v564 = vsel %vm556, %v524, 0.0
    %v565 = vsel %vm557, %v525, 0.0
    %v566 = vsel %vm558, %v526, 0.0
    %567 = vst [vmem:[#allocation2 + $0xc0] sm:$0xff] %v559
    %568 = vst [vmem:[#allocation2 + $0xc8] sm:$0xff] %v560
    %569 = vst [vmem:[#allocation2 + $0xd0] sm:$0xff] %v561
    %570 = vst [vmem:[#allocation2 + $0xd8] sm:$0xff] %v562
    %571 = vst [vmem:[#allocation2 + $0xe0] sm:$0xff] %v563
    %572 = vst [vmem:[#allocation2 + $0xe8] sm:$0xff] %v564
    %573 = vst [vmem:[#allocation2 + $0xf0] sm:$0xff] %v565
    %574 = vst [vmem:[#allocation2 + $0xf8] sm:$0xff] %v566
    %575 = vrot.lane.b32.xlu0 %v82, 55
    %v576 = vpop.permute.xlu0 %575
    %577 = vrot.lane.b32.xlu0 %v83, 55
    %v578 = vpop.permute.xlu0 %577
    %579 = vrot.lane.b32.xlu0 %v84, 55
    %v580 = vpop.permute.xlu0 %579
    %581 = vrot.lane.b32.xlu0 %v85, 55
    %v582 = vpop.permute.xlu0 %581
    %583 = vrot.lane.b32.xlu0 %v86, 55
    %v584 = vpop.permute.xlu0 %583
    %585 = vrot.lane.b32.xlu0 %v87, 55
    %v586 = vpop.permute.xlu0 %585
    %587 = vrot.lane.b32.xlu0 %v88, 55
    %v588 = vpop.permute.xlu0 %587
    %589 = vrot.lane.b32.xlu0 %v89, 55
    %v590 = vpop.permute.xlu0 %589
    %vm591 = vcmp.lt.s32.totalorder %v31, 55
    %v592 = vsel %vm591, %v588, %v590
    %v593 = vsel %vm591, %v586, %v588
    %v594 = vsel %vm591, %v584, %v586
    %v595 = vsel %vm591, %v582, %v584
    %v596 = vsel %vm591, %v580, %v582
    %v597 = vsel %vm591, %v578, %v580
    %v598 = vsel %vm591, %v576, %v578
    %v599 = vsel %vm591, %v590, %v576
    %600 = vrot.lane.b32.xlu0 %v82, 9
    %v601 = vpop.permute.xlu0 %600
    %602 = vrot.lane.b32.xlu0 %v83, 9
    %v603 = vpop.permute.xlu0 %602
    %604 = vrot.lane.b32.xlu0 %v84, 9
    %v605 = vpop.permute.xlu0 %604
    %606 = vrot.lane.b32.xlu0 %v85, 9
    %v607 = vpop.permute.xlu0 %606
    %608 = vrot.lane.b32.xlu0 %v86, 9
    %v609 = vpop.permute.xlu0 %608
    %610 = vrot.lane.b32.xlu0 %v87, 9
    %v611 = vpop.permute.xlu0 %610
    %612 = vrot.lane.b32.xlu0 %v88, 9
    %v613 = vpop.permute.xlu0 %612
    %614 = vrot.lane.b32.xlu0 %v89, 9
    %v615 = vpop.permute.xlu0 %614
    %vm616 = vcmp.lt.s32.totalorder %v31, 9
    %v617 = vsel %vm616, %v613, %v615
    %v618 = vsel %vm616, %v611, %v613
    %v619 = vsel %vm616, %v609, %v611
    %v620 = vsel %vm616, %v607, %v609
    %v621 = vsel %vm616, %v605, %v607
    %v622 = vsel %vm616, %v603, %v605
    %v623 = vsel %vm616, %v601, %v603
    %v624 = vsel %vm616, %v615, %v601
    %v625 = vsel %vm141, %v599, %v624
    %v626 = vsel %vm141, %v598, %v623
    %v627 = vsel %vm141, %v597, %v622
    %v628 = vsel %vm141, %v596, %v621
    %v629 = vsel %vm141, %v595, %v620
    %v630 = vsel %vm141, %v594, %v619
    %v631 = vsel %vm141, %v593, %v618
    %v632 = vsel %vm141, %v592, %v617
    %v633 = vadd.s32 %v47, %v182
    %v634 = vadd.s32 %v48, %v182
    %v635 = vadd.s32 %v49, %v182
    %v636 = vadd.s32 %v50, %v182
    %v637 = vadd.s32 %v51, %v182
    %v638 = vadd.s32 %v52, %v182
    %v639 = vadd.s32 %v53, %v182
    %v640 = vadd.s32 %v54, %v182
    %vm641 = vcmp.ge.s32.totalorder %v633, 0
    %vm642 = vcmp.ge.s32.totalorder %v634, 0
    %vm643 = vcmp.ge.s32.totalorder %v635, 0
    %vm644 = vcmp.ge.s32.totalorder %v636, 0
    %vm645 = vcmp.ge.s32.totalorder %v637, 0
    %vm646 = vcmp.ge.s32.totalorder %v638, 0
    %vm647 = vcmp.ge.s32.totalorder %v639, 0
    %vm648 = vcmp.ge.s32.totalorder %v640, 0
    %v649 = vadd.s32 %v63, %v305
    %v650 = vadd.s32 %v64, %v305
    %v651 = vadd.s32 %v65, %v305
    %v652 = vadd.s32 %v66, %v305
    %v653 = vadd.s32 %v67, %v305
    %v654 = vadd.s32 %v68, %v305
    %v655 = vadd.s32 %v69, %v305
    %v656 = vadd.s32 %v70, %v305
    %vm657 = vcmp.ge.s32.totalorder %v649, 0
    %vm658 = vcmp.ge.s32.totalorder %v650, 0
    %vm659 = vcmp.ge.s32.totalorder %v651, 0
    %vm660 = vcmp.ge.s32.totalorder %v652, 0
    %vm661 = vcmp.ge.s32.totalorder %v653, 0
    %vm662 = vcmp.ge.s32.totalorder %v654, 0
    %vm663 = vcmp.ge.s32.totalorder %v655, 0
    %vm664 = vcmp.ge.s32.totalorder %v656, 0
    %vm665 = vcmp.lt.s32.totalorder %v649, 8
    %vm666 = vcmp.lt.s32.totalorder %v650, 8
    %vm667 = vcmp.lt.s32.totalorder %v651, 8
    %vm668 = vcmp.lt.s32.totalorder %v652, 8
    %vm669 = vcmp.lt.s32.totalorder %v653, 8
    %vm670 = vcmp.lt.s32.totalorder %v654, 8
    %vm671 = vcmp.lt.s32.totalorder %v655, 8
    %vm672 = vcmp.lt.s32.totalorder %v656, 8
    %vm673 = vmand %vm641, %vm657
    %vm674 = vmand %vm642, %vm658
    %vm675 = vmand %vm643, %vm659
    %vm676 = vmand %vm644, %vm660
    %vm677 = vmand %vm645, %vm661
    %vm678 = vmand %vm646, %vm662
    %vm679 = vmand %vm647, %vm663
    %vm680 = vmand %vm648, %vm664
    %vm681 = vmand %vm673, %vm665
    %vm682 = vmand %vm674, %vm666
    %vm683 = vmand %vm675, %vm667
    %vm684 = vmand %vm676, %vm668
    %vm685 = vmand %vm677, %vm669
    %vm686 = vmand %vm678, %vm670
    %vm687 = vmand %vm679, %vm671
    %vm688 = vmand %vm680, %vm672
    %vm689 = vmand %vm681, %vm314
    %vm690 = vmand %vm682, %vm315
    %vm691 = vmand %vm683, %vm316
    %vm692 = vmand %vm684, %vm317
    %vm693 = vmand %vm685, %vm318
    %vm694 = vmand %vm686, %vm319
    %vm695 = vmand %vm687, %vm320
    %vm696 = vmand %vm688, %vm321
    %vm697 = vmand %vm689, %vm322
    %vm698 = vmand %vm690, %vm323
    %vm699 = vmand %vm691, %vm324
    %vm700 = vmand %vm692, %vm325
    %vm701 = vmand %vm693, %vm326
    %vm702 = vmand %vm694, %vm327
    %vm703 = vmand %vm695, %vm328
    %vm704 = vmand %vm696, %vm329
    %v705 = vsel %vm697, %v625, 0.0
    %v706 = vsel %vm698, %v626, 0.0
    %v707 = vsel %vm699, %v627, 0.0
    %v708 = vsel %vm700, %v628, 0.0
    %v709 = vsel %vm701, %v629, 0.0
    %v710 = vsel %vm702, %v630, 0.0
    %v711 = vsel %vm703, %v631, 0.0
    %v712 = vsel %vm704, %v632, 0.0
    %713 = vst [vmem:[#allocation2 + $0x100] sm:$0xff] %v705
    %714 = vst [vmem:[#allocation2 + $0x108] sm:$0xff] %v706
    %715 = vst [vmem:[#allocation2 + $0x110] sm:$0xff] %v707
    %716 = vst [vmem:[#allocation2 + $0x118] sm:$0xff] %v708
    %717 = vst [vmem:[#allocation2 + $0x120] sm:$0xff] %v709
    %718 = vst [vmem:[#allocation2 + $0x128] sm:$0xff] %v710
    %719 = vst [vmem:[#allocation2 + $0x130] sm:$0xff] %v711
    %720 = vst [vmem:[#allocation2 + $0x138] sm:$0xff] %v712
    %721 = vrot.lane.b32.xlu0 %v82, 8
    %v722 = vpop.permute.xlu0 %721
    %723 = vrot.lane.b32.xlu0 %v83, 8
    %v724 = vpop.permute.xlu0 %723
    %725 = vrot.lane.b32.xlu0 %v84, 8
    %v726 = vpop.permute.xlu0 %725
    %727 = vrot.lane.b32.xlu0 %v85, 8
    %v728 = vpop.permute.xlu0 %727
    %729 = vrot.lane.b32.xlu0 %v86, 8
    %v730 = vpop.permute.xlu0 %729
    %731 = vrot.lane.b32.xlu0 %v87, 8
    %v732 = vpop.permute.xlu0 %731
    %733 = vrot.lane.b32.xlu0 %v88, 8
    %v734 = vpop.permute.xlu0 %733
    %735 = vrot.lane.b32.xlu0 %v89, 8
    %v736 = vpop.permute.xlu0 %735
    %vm737 = vcmp.lt.s32.totalorder %v31, 8
    %v738 = vsel %vm737, %v734, %v736
    %v739 = vsel %vm737, %v732, %v734
    %v740 = vsel %vm737, %v730, %v732
    %v741 = vsel %vm737, %v728, %v730
    %v742 = vsel %vm737, %v726, %v728
    %v743 = vsel %vm737, %v724, %v726
    %v744 = vsel %vm737, %v722, %v724
    %v745 = vsel %vm737, %v736, %v722
    %746 = vrot.lane.b32.xlu0 %v82, 7
    %v747 = vpop.permute.xlu0 %746
    %748 = vrot.lane.b32.xlu0 %v83, 7
    %v749 = vpop.permute.xlu0 %748
    %750 = vrot.lane.b32.xlu0 %v84, 7
    %v751 = vpop.permute.xlu0 %750
    %752 = vrot.lane.b32.xlu0 %v85, 7
    %v753 = vpop.permute.xlu0 %752
    %754 = vrot.lane.b32.xlu0 %v86, 7
    %v755 = vpop.permute.xlu0 %754
    %756 = vrot.lane.b32.xlu0 %v87, 7
    %v757 = vpop.permute.xlu0 %756
    %758 = vrot.lane.b32.xlu0 %v88, 7
    %v759 = vpop.permute.xlu0 %758
    %760 = vrot.lane.b32.xlu0 %v89, 7
    %v761 = vpop.permute.xlu0 %760
    %vm762 = vcmp.lt.s32.totalorder %v31, 7
    %v763 = vsel %vm762, %v759, %v761
    %v764 = vsel %vm762, %v757, %v759
    %v765 = vsel %vm762, %v755, %v757
    %v766 = vsel %vm762, %v753, %v755
    %v767 = vsel %vm762, %v751, %v753
    %v768 = vsel %vm762, %v749, %v751
    %v769 = vsel %vm762, %v747, %v749
    %v770 = vsel %vm762, %v761, %v747
    %v771 = vsel %vm141, %v745, %v770
    %v772 = vsel %vm141, %v744, %v769
    %v773 = vsel %vm141, %v743, %v768
    %v774 = vsel %vm141, %v742, %v767
    %v775 = vsel %vm141, %v741, %v766
    %v776 = vsel %vm141, %v740, %v765
    %v777 = vsel %vm141, %v739, %v764
    %v778 = vsel %vm141, %v738, %v763
    %vm779 = vmand %vm174, %vm437
    %vm780 = vmand %vm175, %vm438
    %vm781 = vmand %vm176, %vm439
    %vm782 = vmand %vm177, %vm440
    %vm783 = vmand %vm178, %vm441
    %vm784 = vmand %vm179, %vm442
    %vm785 = vmand %vm180, %vm443
    %vm786 = vmand %vm181, %vm444
    %v787 = vsel %vm779, %v771, 0.0
    %v788 = vsel %vm780, %v772, 0.0
    %v789 = vsel %vm781, %v773, 0.0
    %v790 = vsel %vm782, %v774, 0.0
    %v791 = vsel %vm783, %v775, 0.0
    %v792 = vsel %vm784, %v776, 0.0
    %v793 = vsel %vm785, %v777, 0.0
    %v794 = vsel %vm786, %v778, 0.0
    %795 = vst [vmem:[#allocation2 + $0x140] sm:$0xff] %v787
    %796 = vst [vmem:[#allocation2 + $0x148] sm:$0xff] %v788
    %797 = vst [vmem:[#allocation2 + $0x150] sm:$0xff] %v789
    %798 = vst [vmem:[#allocation2 + $0x158] sm:$0xff] %v790
    %799 = vst [vmem:[#allocation2 + $0x160] sm:$0xff] %v791
    %800 = vst [vmem:[#allocation2 + $0x168] sm:$0xff] %v792
    %801 = vst [vmem:[#allocation2 + $0x170] sm:$0xff] %v793
    %802 = vst [vmem:[#allocation2 + $0x178] sm:$0xff] %v794
    %803 = vrot.lane.b32.xlu0 %v82, 1
    %v804 = vpop.permute.xlu0 %803
    %805 = vrot.lane.b32.xlu0 %v83, 1
    %v806 = vpop.permute.xlu0 %805
    %807 = vrot.lane.b32.xlu0 %v84, 1
    %v808 = vpop.permute.xlu0 %807
    %809 = vrot.lane.b32.xlu0 %v85, 1
    %v810 = vpop.permute.xlu0 %809
    %811 = vrot.lane.b32.xlu0 %v86, 1
    %v812 = vpop.permute.xlu0 %811
    %813 = vrot.lane.b32.xlu0 %v87, 1
    %v814 = vpop.permute.xlu0 %813
    %815 = vrot.lane.b32.xlu0 %v88, 1
    %v816 = vpop.permute.xlu0 %815
    %817 = vrot.lane.b32.xlu0 %v89, 1
    %v818 = vpop.permute.xlu0 %817
    %vm819 = vcmp.lt.s32.totalorder %v31, 1
    %v820 = vsel %vm819, %v816, %v818
    %v821 = vsel %vm819, %v814, %v816
    %v822 = vsel %vm819, %v812, %v814
    %v823 = vsel %vm819, %v810, %v812
    %v824 = vsel %vm819, %v808, %v810
    %v825 = vsel %vm819, %v806, %v808
    %v826 = vsel %vm819, %v804, %v806
    %v827 = vsel %vm819, %v818, %v804
    %v828 = vsel %vm141, %v827, %v82
    %v829 = vsel %vm141, %v826, %v83
    %v830 = vsel %vm141, %v825, %v84
    %v831 = vsel %vm141, %v824, %v85
    %v832 = vsel %vm141, %v823, %v86
    %v833 = vsel %vm141, %v822, %v87
    %v834 = vsel %vm141, %v821, %v88
    %v835 = vsel %vm141, %v820, %v89
    %v836 = vsel %vm191, %v828, 0.0
    %v837 = vsel %vm192, %v829, 0.0
    %v838 = vsel %vm193, %v830, 0.0
    %v839 = vsel %vm194, %v831, 0.0
    %v840 = vsel %vm195, %v832, 0.0
    %v841 = vsel %vm196, %v833, 0.0
    %v842 = vsel %vm197, %v834, 0.0
    %v843 = vsel %vm198, %v835, 0.0
    %844 = vst [vmem:[#allocation2 + $0x180] sm:$0xff] %v836
    %845 = vst [vmem:[#allocation2 + $0x188] sm:$0xff] %v837
    %846 = vst [vmem:[#allocation2 + $0x190] sm:$0xff] %v838
    %847 = vst [vmem:[#allocation2 + $0x198] sm:$0xff] %v839
    %848 = vst [vmem:[#allocation2 + $0x1a0] sm:$0xff] %v840
    %849 = vst [vmem:[#allocation2 + $0x1a8] sm:$0xff] %v841
    %850 = vst [vmem:[#allocation2 + $0x1b0] sm:$0xff] %v842
    %851 = vst [vmem:[#allocation2 + $0x1b8] sm:$0xff] %v843
    %852 = vrot.lane.b32.xlu0 %v82, 127
    %v853 = vpop.permute.xlu0 %852
    %854 = vrot.lane.b32.xlu0 %v83, 127
    %v855 = vpop.permute.xlu0 %854
    %856 = vrot.lane.b32.xlu0 %v84, 127
    %v857 = vpop.permute.xlu0 %856
    %858 = vrot.lane.b32.xlu0 %v85, 127
    %v859 = vpop.permute.xlu0 %858
    %860 = vrot.lane.b32.xlu0 %v86, 127
    %v861 = vpop.permute.xlu0 %860
    %862 = vrot.lane.b32.xlu0 %v87, 127
    %v863 = vpop.permute.xlu0 %862
    %864 = vrot.lane.b32.xlu0 %v88, 127
    %v865 = vpop.permute.xlu0 %864
    %866 = vrot.lane.b32.xlu0 %v89, 127
    %v867 = vpop.permute.xlu0 %866
    %vm868 = vcmp.lt.s32.totalorder %v31, 127
    %v869 = vsel %vm868, %v865, %v867
    %v870 = vsel %vm868, %v863, %v865
    %v871 = vsel %vm868, %v861, %v863
    %v872 = vsel %vm868, %v859, %v861
    %v873 = vsel %vm868, %v857, %v859
    %v874 = vsel %vm868, %v855, %v857
    %v875 = vsel %vm868, %v853, %v855
    %v876 = vsel %vm868, %v867, %v853
    %877 = vrot.lane.b32.xlu0 %v82, 121
    %v878 = vpop.permute.xlu0 %877
    %879 = vrot.lane.b32.xlu0 %v83, 121
    %v880 = vpop.permute.xlu0 %879
    %881 = vrot.lane.b32.xlu0 %v84, 121
    %v882 = vpop.permute.xlu0 %881
    %883 = vrot.lane.b32.xlu0 %v85, 121
    %v884 = vpop.permute.xlu0 %883
    %885 = vrot.lane.b32.xlu0 %v86, 121
    %v886 = vpop.permute.xlu0 %885
    %887 = vrot.lane.b32.xlu0 %v87, 121
    %v888 = vpop.permute.xlu0 %887
    %889 = vrot.lane.b32.xlu0 %v88, 121
    %v890 = vpop.permute.xlu0 %889
    %891 = vrot.lane.b32.xlu0 %v89, 121
    %v892 = vpop.permute.xlu0 %891
    %vm893 = vcmp.lt.s32.totalorder %v31, 121
    %v894 = vsel %vm893, %v890, %v892
    %v895 = vsel %vm893, %v888, %v890
    %v896 = vsel %vm893, %v886, %v888
    %v897 = vsel %vm893, %v884, %v886
    %v898 = vsel %vm893, %v882, %v884
    %v899 = vsel %vm893, %v880, %v882
    %v900 = vsel %vm893, %v878, %v880
    %v901 = vsel %vm893, %v892, %v878
    %v902 = vsel %vm141, %v875, %v900
    %v903 = vsel %vm141, %v874, %v899
    %v904 = vsel %vm141, %v873, %v898
    %v905 = vsel %vm141, %v872, %v897
    %v906 = vsel %vm141, %v871, %v896
    %v907 = vsel %vm141, %v870, %v895
    %v908 = vsel %vm141, %v869, %v894
    %v909 = vsel %vm141, %v876, %v901
    %v910 = vadd.s32 %v63, %v428
    %v911 = vadd.s32 %v64, %v428
    %v912 = vadd.s32 %v65, %v428
    %v913 = vadd.s32 %v66, %v428
    %v914 = vadd.s32 %v67, %v428
    %v915 = vadd.s32 %v68, %v428
    %v916 = vadd.s32 %v69, %v428
    %v917 = vadd.s32 %v70, %v428
    %vm918 = vcmp.lt.s32.totalorder %v910, 8
    %vm919 = vcmp.lt.s32.totalorder %v911, 8
    %vm920 = vcmp.lt.s32.totalorder %v912, 8
    %vm921 = vcmp.lt.s32.totalorder %v913, 8
    %vm922 = vcmp.lt.s32.totalorder %v914, 8
    %vm923 = vcmp.lt.s32.totalorder %v915, 8
    %vm924 = vcmp.lt.s32.totalorder %v916, 8
    %vm925 = vcmp.lt.s32.totalorder %v917, 8
    %vm926 = vmand %vm918, %vm314
    %vm927 = vmand %vm919, %vm315
    %vm928 = vmand %vm920, %vm316
    %vm929 = vmand %vm921, %vm317
    %vm930 = vmand %vm922, %vm318
    %vm931 = vmand %vm923, %vm319
    %vm932 = vmand %vm924, %vm320
    %vm933 = vmand %vm925, %vm321
    %vm934 = vmand %vm926, %vm322
    %vm935 = vmand %vm927, %vm323
    %vm936 = vmand %vm928, %vm324
    %vm937 = vmand %vm929, %vm325
    %vm938 = vmand %vm930, %vm326
    %vm939 = vmand %vm931, %vm327
    %vm940 = vmand %vm932, %vm328
    %vm941 = vmand %vm933, %vm329
    %v942 = vsel %vm934, %v902, 0.0
    %v943 = vsel %vm935, %v903, 0.0
    %v944 = vsel %vm936, %v904, 0.0
    %v945 = vsel %vm937, %v905, 0.0
    %v946 = vsel %vm938, %v906, 0.0
    %v947 = vsel %vm939, %v907, 0.0
    %v948 = vsel %vm940, %v908, 0.0
    %v949 = vsel %vm941, %v909, 0.0
    %950 = vst [vmem:[#allocation2 + $0x1c0] sm:$0xff] %v942
    %951 = vst [vmem:[#allocation2 + $0x1c8] sm:$0xff] %v943
    %952 = vst [vmem:[#allocation2 + $0x1d0] sm:$0xff] %v944
    %953 = vst [vmem:[#allocation2 + $0x1d8] sm:$0xff] %v945
    %954 = vst [vmem:[#allocation2 + $0x1e0] sm:$0xff] %v946
    %955 = vst [vmem:[#allocation2 + $0x1e8] sm:$0xff] %v947
    %956 = vst [vmem:[#allocation2 + $0x1f0] sm:$0xff] %v948
    %957 = vst [vmem:[#allocation2 + $0x1f8] sm:$0xff] %v949
    %958 = vrot.lane.b32.xlu0 %v82, 120
    %v959 = vpop.permute.xlu0 %958
    %960 = vrot.lane.b32.xlu0 %v83, 120
    %v961 = vpop.permute.xlu0 %960
    %962 = vrot.lane.b32.xlu0 %v84, 120
    %v963 = vpop.permute.xlu0 %962
    %964 = vrot.lane.b32.xlu0 %v85, 120
    %v965 = vpop.permute.xlu0 %964
    %966 = vrot.lane.b32.xlu0 %v86, 120
    %v967 = vpop.permute.xlu0 %966
    %968 = vrot.lane.b32.xlu0 %v87, 120
    %v969 = vpop.permute.xlu0 %968
    %970 = vrot.lane.b32.xlu0 %v88, 120
    %v971 = vpop.permute.xlu0 %970
    %972 = vrot.lane.b32.xlu0 %v89, 120
    %v973 = vpop.permute.xlu0 %972
    %vm974 = vcmp.lt.s32.totalorder %v31, 120
    %v975 = vsel %vm974, %v971, %v973
    %v976 = vsel %vm974, %v969, %v971
    %v977 = vsel %vm974, %v967, %v969
    %v978 = vsel %vm974, %v965, %v967
    %v979 = vsel %vm974, %v963, %v965
    %v980 = vsel %vm974, %v961, %v963
    %v981 = vsel %vm974, %v959, %v961
    %v982 = vsel %vm974, %v973, %v959
    %983 = vrot.lane.b32.xlu0 %v82, 119
    %v984 = vpop.permute.xlu0 %983
    %985 = vrot.lane.b32.xlu0 %v83, 119
    %v986 = vpop.permute.xlu0 %985
    %987 = vrot.lane.b32.xlu0 %v84, 119
    %v988 = vpop.permute.xlu0 %987
    %989 = vrot.lane.b32.xlu0 %v85, 119
    %v990 = vpop.permute.xlu0 %989
    %991 = vrot.lane.b32.xlu0 %v86, 119
    %v992 = vpop.permute.xlu0 %991
    %993 = vrot.lane.b32.xlu0 %v87, 119
    %v994 = vpop.permute.xlu0 %993
    %995 = vrot.lane.b32.xlu0 %v88, 119
    %v996 = vpop.permute.xlu0 %995
    %997 = vrot.lane.b32.xlu0 %v89, 119
    %v998 = vpop.permute.xlu0 %997
    %vm999 = vcmp.lt.s32.totalorder %v31, 119
    %v1000 = vsel %vm999, %v996, %v998
    %v1001 = vsel %vm999, %v994, %v996
    %v1002 = vsel %vm999, %v992, %v994
    %v1003 = vsel %vm999, %v990, %v992
    %v1004 = vsel %vm999, %v988, %v990
    %v1005 = vsel %vm999, %v986, %v988
    %v1006 = vsel %vm999, %v984, %v986
    %v1007 = vsel %vm999, %v998, %v984
    %v1008 = vsel %vm141, %v981, %v1006
    %v1009 = vsel %vm141, %v980, %v1005
    %v1010 = vsel %vm141, %v979, %v1004
    %v1011 = vsel %vm141, %v978, %v1003
    %v1012 = vsel %vm141, %v977, %v1002
    %v1013 = vsel %vm141, %v976, %v1001
    %v1014 = vsel %vm141, %v975, %v1000
    %v1015 = vsel %vm141, %v982, %v1007
    %vm1016 = vmand %vm535, %vm437
    %vm1017 = vmand %vm536, %vm438
    %vm1018 = vmand %vm537, %vm439
    %vm1019 = vmand %vm538, %vm440
    %vm1020 = vmand %vm539, %vm441
    %vm1021 = vmand %vm540, %vm442
    %vm1022 = vmand %vm541, %vm443
    %vm1023 = vmand %vm542, %vm444
    %v1024 = vsel %vm1016, %v1008, 0.0
    %v1025 = vsel %vm1017, %v1009, 0.0
    %v1026 = vsel %vm1018, %v1010, 0.0
    %v1027 = vsel %vm1019, %v1011, 0.0
    %v1028 = vsel %vm1020, %v1012, 0.0
    %v1029 = vsel %vm1021, %v1013, 0.0
    %v1030 = vsel %vm1022, %v1014, 0.0
    %v1031 = vsel %vm1023, %v1015, 0.0
    %1032 = vst [vmem:[#allocation2 + $0x200] sm:$0xff] %v1024
    %1033 = vst [vmem:[#allocation2 + $0x208] sm:$0xff] %v1025
    %1034 = vst [vmem:[#allocation2 + $0x210] sm:$0xff] %v1026
    %1035 = vst [vmem:[#allocation2 + $0x218] sm:$0xff] %v1027
    %1036 = vst [vmem:[#allocation2 + $0x220] sm:$0xff] %v1028
    %1037 = vst [vmem:[#allocation2 + $0x228] sm:$0xff] %v1029
    %1038 = vst [vmem:[#allocation2 + $0x230] sm:$0xff] %v1030
    %1039 = vst [vmem:[#allocation2 + $0x238] sm:$0xff] %v1031
    %v1040 = vadd.s32 %v47, 1
    %v1041 = vadd.s32 %v48, 1
    %v1042 = vadd.s32 %v49, 1
    %v1043 = vadd.s32 %v50, 1
    %v1044 = vadd.s32 %v51, 1
    %v1045 = vadd.s32 %v52, 1
    %v1046 = vadd.s32 %v53, 1
    %v1047 = vadd.s32 %v54, 1
    %vm1048 = vcmp.lt.s32.totalorder %v1040, 8
    %vm1049 = vcmp.lt.s32.totalorder %v1041, 8
    %vm1050 = vcmp.lt.s32.totalorder %v1042, 8
    %vm1051 = vcmp.lt.s32.totalorder %v1043, 8
    %vm1052 = vcmp.lt.s32.totalorder %v1044, 8
    %vm1053 = vcmp.lt.s32.totalorder %v1045, 8
    %vm1054 = vcmp.lt.s32.totalorder %v1046, 8
    %vm1055 = vcmp.lt.s32.totalorder %v1047, 8
    %vm1056 = vmand %vm1048, %vm174
    %vm1057 = vmand %vm1049, %vm175
    %vm1058 = vmand %vm1050, %vm176
    %vm1059 = vmand %vm1051, %vm177
    %vm1060 = vmand %vm1052, %vm178
    %vm1061 = vmand %vm1053, %vm179
    %vm1062 = vmand %vm1054, %vm180
    %vm1063 = vmand %vm1055, %vm181
    %vm1064 = vmand %vm1056, %vm191
    %vm1065 = vmand %vm1057, %vm192
    %vm1066 = vmand %vm1058, %vm193
    %vm1067 = vmand %vm1059, %vm194
    %vm1068 = vmand %vm1060, %vm195
    %vm1069 = vmand %vm1061, %vm196
    %vm1070 = vmand %vm1062, %vm197
    %vm1071 = vmand %vm1063, %vm198
    %v1072 = vsel %vm1064, %v143, 0.0
    %v1073 = vsel %vm1065, %v144, 0.0
    %v1074 = vsel %vm1066, %v145, 0.0
    %v1075 = vsel %vm1067, %v146, 0.0
    %v1076 = vsel %vm1068, %v147, 0.0
    %v1077 = vsel %vm1069, %v148, 0.0
    %v1078 = vsel %vm1070, %v149, 0.0
    %v1079 = vsel %vm1071, %v142, 0.0
    %1080 = vst [vmem:[#allocation2 + $0x240] sm:$0xff] %v1072
    %1081 = vst [vmem:[#allocation2 + $0x248] sm:$0xff] %v1073
    %1082 = vst [vmem:[#allocation2 + $0x250] sm:$0xff] %v1074
    %1083 = vst [vmem:[#allocation2 + $0x258] sm:$0xff] %v1075
    %1084 = vst [vmem:[#allocation2 + $0x260] sm:$0xff] %v1076
    %1085 = vst [vmem:[#allocation2 + $0x268] sm:$0xff] %v1077
    %1086 = vst [vmem:[#allocation2 + $0x270] sm:$0xff] %v1078
    %1087 = vst [vmem:[#allocation2 + $0x278] sm:$0xff] %v1079
    %vm1088 = vmand %vm1048, %vm297
    %vm1089 = vmand %vm1049, %vm298
    %vm1090 = vmand %vm1050, %vm299
    %vm1091 = vmand %vm1051, %vm300
    %vm1092 = vmand %vm1052, %vm301
    %vm1093 = vmand %vm1053, %vm302
    %vm1094 = vmand %vm1054, %vm303
    %vm1095 = vmand %vm1055, %vm304
    %vm1096 = vmand %vm1088, %vm314
    %vm1097 = vmand %vm1089, %vm315
    %vm1098 = vmand %vm1090, %vm316
    %vm1099 = vmand %vm1091, %vm317
    %vm1100 = vmand %vm1092, %vm318
    %vm1101 = vmand %vm1093, %vm319
    %vm1102 = vmand %vm1094, %vm320
    %vm1103 = vmand %vm1095, %vm321
    %vm1104 = vmand %vm1096, %vm322
    %vm1105 = vmand %vm1097, %vm323
    %vm1106 = vmand %vm1098, %vm324
    %vm1107 = vmand %vm1099, %vm325
    %vm1108 = vmand %vm1100, %vm326
    %vm1109 = vmand %vm1101, %vm327
    %vm1110 = vmand %vm1102, %vm328
    %vm1111 = vmand %vm1103, %vm329
    %v1112 = vsel %vm1104, %v282, 0.0
    %v1113 = vsel %vm1105, %v283, 0.0
    %v1114 = vsel %vm1106, %v284, 0.0
    %v1115 = vsel %vm1107, %v285, 0.0
    %v1116 = vsel %vm1108, %v286, 0.0
    %v1117 = vsel %vm1109, %v287, 0.0
    %v1118 = vsel %vm1110, %v288, 0.0
    %v1119 = vsel %vm1111, %v281, 0.0
    %1120 = vst [vmem:[#allocation2 + $0x280] sm:$0xff] %v1112
    %1121 = vst [vmem:[#allocation2 + $0x288] sm:$0xff] %v1113
    %1122 = vst [vmem:[#allocation2 + $0x290] sm:$0xff] %v1114
    %1123 = vst [vmem:[#allocation2 + $0x298] sm:$0xff] %v1115
    %1124 = vst [vmem:[#allocation2 + $0x2a0] sm:$0xff] %v1116
    %1125 = vst [vmem:[#allocation2 + $0x2a8] sm:$0xff] %v1117
    %1126 = vst [vmem:[#allocation2 + $0x2b0] sm:$0xff] %v1118
    %1127 = vst [vmem:[#allocation2 + $0x2b8] sm:$0xff] %v1119
    %vm1128 = vmand %vm1048, %vm437
    %vm1129 = vmand %vm1049, %vm438
    %vm1130 = vmand %vm1050, %vm439
    %vm1131 = vmand %vm1051, %vm440
    %vm1132 = vmand %vm1052, %vm441
    %vm1133 = vmand %vm1053, %vm442
    %vm1134 = vmand %vm1054, %vm443
    %vm1135 = vmand %vm1055, %vm444
    %v1136 = vsel %vm1128, %v421, 0.0
    %v1137 = vsel %vm1129, %v422, 0.0
    %v1138 = vsel %vm1130, %v423, 0.0
    %v1139 = vsel %vm1131, %v424, 0.0
    %v1140 = vsel %vm1132, %v425, 0.0
    %v1141 = vsel %vm1133, %v426, 0.0
    %v1142 = vsel %vm1134, %v427, 0.0
    %v1143 = vsel %vm1135, %v420, 0.0
    %1144 = vst [vmem:[#allocation2 + $0x2c0] sm:$0xff] %v1136
    %1145 = vst [vmem:[#allocation2 + $0x2c8] sm:$0xff] %v1137
    %1146 = vst [vmem:[#allocation2 + $0x2d0] sm:$0xff] %v1138
    %1147 = vst [vmem:[#allocation2 + $0x2d8] sm:$0xff] %v1139
    %1148 = vst [vmem:[#allocation2 + $0x2e0] sm:$0xff] %v1140
    %1149 = vst [vmem:[#allocation2 + $0x2e8] sm:$0xff] %v1141
    %1150 = vst [vmem:[#allocation2 + $0x2f0] sm:$0xff] %v1142
    %1151 = vst [vmem:[#allocation2 + $0x2f8] sm:$0xff] %v1143
    %vm1152 = vmand %vm1048, %vm535
    %vm1153 = vmand %vm1049, %vm536
    %vm1154 = vmand %vm1050, %vm537
    %vm1155 = vmand %vm1051, %vm538
    %vm1156 = vmand %vm1052, %vm539
    %vm1157 = vmand %vm1053, %vm540
    %vm1158 = vmand %vm1054, %vm541
    %vm1159 = vmand %vm1055, %vm542
    %vm1160 = vmand %vm1152, %vm191
    %vm1161 = vmand %vm1153, %vm192
    %vm1162 = vmand %vm1154, %vm193
    %vm1163 = vmand %vm1155, %vm194
    %vm1164 = vmand %vm1156, %vm195
    %vm1165 = vmand %vm1157, %vm196
    %vm1166 = vmand %vm1158, %vm197
    %vm1167 = vmand %vm1159, %vm198
    %v1168 = vsel %vm1160, %v520, 0.0
    %v1169 = vsel %vm1161, %v521, 0.0
    %v1170 = vsel %vm1162, %v522, 0.0
    %v1171 = vsel %vm1163, %v523, 0.0
    %v1172 = vsel %vm1164, %v524, 0.0
    %v1173 = vsel %vm1165, %v525, 0.0
    %v1174 = vsel %vm1166, %v526, 0.0
    %v1175 = vsel %vm1167, %v519, 0.0
    %1176 = vst [vmem:[#allocation2 + $0x300] sm:$0xff] %v1168
    %1177 = vst [vmem:[#allocation2 + $0x308] sm:$0xff] %v1169
    %1178 = vst [vmem:[#allocation2 + $0x310] sm:$0xff] %v1170
    %1179 = vst [vmem:[#allocation2 + $0x318] sm:$0xff] %v1171
    %1180 = vst [vmem:[#allocation2 + $0x320] sm:$0xff] %v1172
    %1181 = vst [vmem:[#allocation2 + $0x328] sm:$0xff] %v1173
    %1182 = vst [vmem:[#allocation2 + $0x330] sm:$0xff] %v1174
    %1183 = vst [vmem:[#allocation2 + $0x338] sm:$0xff] %v1175
    %v1184 = vsel %vm81, 1, 8
    %v1185 = vadd.s32 %v47, %v1184
    %v1186 = vadd.s32 %v48, %v1184
    %v1187 = vadd.s32 %v49, %v1184
    %v1188 = vadd.s32 %v50, %v1184
    %v1189 = vadd.s32 %v51, %v1184
    %v1190 = vadd.s32 %v52, %v1184
    %v1191 = vadd.s32 %v53, %v1184
    %v1192 = vadd.s32 %v54, %v1184
    %vm1193 = vcmp.lt.s32.totalorder %v1185, 8
    %vm1194 = vcmp.lt.s32.totalorder %v1186, 8
    %vm1195 = vcmp.lt.s32.totalorder %v1187, 8
    %vm1196 = vcmp.lt.s32.totalorder %v1188, 8
    %vm1197 = vcmp.lt.s32.totalorder %v1189, 8
    %vm1198 = vcmp.lt.s32.totalorder %v1190, 8
    %vm1199 = vcmp.lt.s32.totalorder %v1191, 8
    %vm1200 = vcmp.lt.s32.totalorder %v1192, 8
    %v1201 = vadd.s32 %v63, %v1184
    %v1202 = vadd.s32 %v64, %v1184
    %v1203 = vadd.s32 %v65, %v1184
    %v1204 = vadd.s32 %v66, %v1184
    %v1205 = vadd.s32 %v67, %v1184
    %v1206 = vadd.s32 %v68, %v1184
    %v1207 = vadd.s32 %v69, %v1184
    %v1208 = vadd.s32 %v70, %v1184
    %vm1209 = vcmp.lt.s32.totalorder %v1201, 8
    %vm1210 = vcmp.lt.s32.totalorder %v1202, 8
    %vm1211 = vcmp.lt.s32.totalorder %v1203, 8
    %vm1212 = vcmp.lt.s32.totalorder %v1204, 8
    %vm1213 = vcmp.lt.s32.totalorder %v1205, 8
    %vm1214 = vcmp.lt.s32.totalorder %v1206, 8
    %vm1215 = vcmp.lt.s32.totalorder %v1207, 8
    %vm1216 = vcmp.lt.s32.totalorder %v1208, 8
    %v1217 = vadd.s32 %v71, %v1184
    %v1218 = vadd.s32 %v72, %v1184
    %v1219 = vadd.s32 %v73, %v1184
    %v1220 = vadd.s32 %v74, %v1184
    %v1221 = vadd.s32 %v75, %v1184
    %v1222 = vadd.s32 %v76, %v1184
    %v1223 = vadd.s32 %v77, %v1184
    %v1224 = vadd.s32 %v78, %v1184
    %vm1225 = vcmp.lt.s32.totalorder %v1217, 8
    %vm1226 = vcmp.lt.s32.totalorder %v1218, 8
    %vm1227 = vcmp.lt.s32.totalorder %v1219, 8
    %vm1228 = vcmp.lt.s32.totalorder %v1220, 8
    %vm1229 = vcmp.lt.s32.totalorder %v1221, 8
    %vm1230 = vcmp.lt.s32.totalorder %v1222, 8
    %vm1231 = vcmp.lt.s32.totalorder %v1223, 8
    %vm1232 = vcmp.lt.s32.totalorder %v1224, 8
    %vm1233 = vmand %vm1193, %vm1209
    %vm1234 = vmand %vm1194, %vm1210
    %vm1235 = vmand %vm1195, %vm1211
    %vm1236 = vmand %vm1196, %vm1212
    %vm1237 = vmand %vm1197, %vm1213
    %vm1238 = vmand %vm1198, %vm1214
    %vm1239 = vmand %vm1199, %vm1215
    %vm1240 = vmand %vm1200, %vm1216
    %vm1241 = vmand %vm1233, %vm1225
    %vm1242 = vmand %vm1234, %vm1226
    %vm1243 = vmand %vm1235, %vm1227
    %vm1244 = vmand %vm1236, %vm1228
    %vm1245 = vmand %vm1237, %vm1229
    %vm1246 = vmand %vm1238, %vm1230
    %vm1247 = vmand %vm1239, %vm1231
    %vm1248 = vmand %vm1240, %vm1232
    %v1249 = vsel %vm1241, %v598, 0.0
    %v1250 = vsel %vm1242, %v597, 0.0
    %v1251 = vsel %vm1243, %v596, 0.0
    %v1252 = vsel %vm1244, %v595, 0.0
    %v1253 = vsel %vm1245, %v594, 0.0
    %v1254 = vsel %vm1246, %v593, 0.0
    %v1255 = vsel %vm1247, %v592, 0.0
    %v1256 = vsel %vm1248, %v599, 0.0
    %1257 = vst [vmem:[#allocation2 + $0x340] sm:$0xff] %v1249
    %1258 = vst [vmem:[#allocation2 + $0x348] sm:$0xff] %v1250
    %1259 = vst [vmem:[#allocation2 + $0x350] sm:$0xff] %v1251
    %1260 = vst [vmem:[#allocation2 + $0x358] sm:$0xff] %v1252
    %1261 = vst [vmem:[#allocation2 + $0x360] sm:$0xff] %v1253
    %1262 = vst [vmem:[#allocation2 + $0x368] sm:$0xff] %v1254
    %1263 = vst [vmem:[#allocation2 + $0x370] sm:$0xff] %v1255
    %1264 = vst [vmem:[#allocation2 + $0x378] sm:$0xff] %v1256
    %v1265 = vld [vmem:[%s1] sm:$0xff]
    %v1266 = vld [vmem:[#allocation2] sm:$0xff]
    %v1267 = vld [vmem:[#allocation2 + $0x8] sm:$0xff]
    %v1268 = vld [vmem:[#allocation2 + $0x10] sm:$0xff]
    %v1269 = vld [vmem:[#allocation2 + $0x18] sm:$0xff]
    %v1270 = vld [vmem:[#allocation2 + $0x20] sm:$0xff]
    %v1271 = vld [vmem:[#allocation2 + $0x28] sm:$0xff]
    %v1272 = vld [vmem:[#allocation2 + $0x30] sm:$0xff]
    %v1273 = vld [vmem:[#allocation2 + $0x38] sm:$0xff]
    %v1274 = vld [vmem:[#allocation2 + $0x40] sm:$0xff]
    %v1275 = vld [vmem:[#allocation2 + $0x48] sm:$0xff]
    %v1276 = vld [vmem:[#allocation2 + $0x50] sm:$0xff]
    %v1277 = vld [vmem:[#allocation2 + $0x58] sm:$0xff]
    %v1278 = vld [vmem:[#allocation2 + $0x60] sm:$0xff]
    %v1279 = vld [vmem:[#allocation2 + $0x68] sm:$0xff]
    %v1280 = vld [vmem:[#allocation2 + $0x70] sm:$0xff]
    %v1281 = vld [vmem:[#allocation2 + $0x78] sm:$0xff]
    %v1282 = vld [vmem:[#allocation2 + $0x80] sm:$0xff]
    %v1283 = vld [vmem:[#allocation2 + $0x88] sm:$0xff]
    %v1284 = vld [vmem:[#allocation2 + $0x90] sm:$0xff]
    %v1285 = vld [vmem:[#allocation2 + $0x98] sm:$0xff]
    %v1286 = vld [vmem:[#allocation2 + $0xa0] sm:$0xff]
    %v1287 = vld [vmem:[#allocation2 + $0xa8] sm:$0xff]
    %v1288 = vld [vmem:[#allocation2 + $0xb0] sm:$0xff]
    %v1289 = vld [vmem:[#allocation2 + $0xb8] sm:$0xff]
    %v1290 = vld [vmem:[#allocation2 + $0xc0] sm:$0xff]
    %v1291 = vld [vmem:[#allocation2 + $0xc8] sm:$0xff]
    %v1292 = vld [vmem:[#allocation2 + $0xd0] sm:$0xff]
    %v1293 = vld [vmem:[#allocation2 + $0xd8] sm:$0xff]
    %v1294 = vld [vmem:[#allocation2 + $0xe0] sm:$0xff]
    %v1295 = vld [vmem:[#allocation2 + $0xe8] sm:$0xff]
    %v1296 = vld [vmem:[#allocation2 + $0xf0] sm:$0xff]
    %v1297 = vld [vmem:[#allocation2 + $0xf8] sm:$0xff]
    %v1298 = vld [vmem:[#allocation2 + $0x100] sm:$0xff]
    %v1299 = vld [vmem:[#allocation2 + $0x108] sm:$0xff]
    %v1300 = vld [vmem:[#allocation2 + $0x110] sm:$0xff]
    %v1301 = vld [vmem:[#allocation2 + $0x118] sm:$0xff]
    %v1302 = vld [vmem:[#allocation2 + $0x120] sm:$0xff]
    %v1303 = vld [vmem:[#allocation2 + $0x128] sm:$0xff]
    %v1304 = vld [vmem:[#allocation2 + $0x130] sm:$0xff]
    %v1305 = vld [vmem:[#allocation2 + $0x138] sm:$0xff]
    %v1306 = vld [vmem:[#allocation2 + $0x140] sm:$0xff]
    %v1307 = vld [vmem:[#allocation2 + $0x148] sm:$0xff]
    %v1308 = vld [vmem:[#allocation2 + $0x150] sm:$0xff]
    %v1309 = vld [vmem:[#allocation2 + $0x158] sm:$0xff]
    %v1310 = vld [vmem:[#allocation2 + $0x160] sm:$0xff]
    %v1311 = vld [vmem:[#allocation2 + $0x168] sm:$0xff]
    %v1312 = vld [vmem:[#allocation2 + $0x170] sm:$0xff]
    %v1313 = vld [vmem:[#allocation2 + $0x178] sm:$0xff]
    %v1314 = vld [vmem:[#allocation2 + $0x180] sm:$0xff]
    %v1315 = vld [vmem:[#allocation2 + $0x188] sm:$0xff]
    %v1316 = vld [vmem:[#allocation2 + $0x190] sm:$0xff]
    %v1317 = vld [vmem:[#allocation2 + $0x198] sm:$0xff]
    %v1318 = vld [vmem:[#allocation2 + $0x1a0] sm:$0xff]
    %v1319 = vld [vmem:[#allocation2 + $0x1a8] sm:$0xff]
    %v1320 = vld [vmem:[#allocation2 + $0x1b0] sm:$0xff]
    %v1321 = vld [vmem:[#allocation2 + $0x1b8] sm:$0xff]
    %v1322 = vld [vmem:[#allocation2 + $0x1c0] sm:$0xff]
    %v1323 = vld [vmem:[#allocation2 + $0x1c8] sm:$0xff]
    %v1324 = vld [vmem:[#allocation2 + $0x1d0] sm:$0xff]
    %v1325 = vld [vmem:[#allocation2 + $0x1d8] sm:$0xff]
    %v1326 = vld [vmem:[#allocation2 + $0x1e0] sm:$0xff]
    %v1327 = vld [vmem:[#allocation2 + $0x1e8] sm:$0xff]
    %v1328 = vld [vmem:[#allocation2 + $0x1f0] sm:$0xff]
    %v1329 = vld [vmem:[#allocation2 + $0x1f8] sm:$0xff]
    %v1330 = vld [vmem:[#allocation2 + $0x200] sm:$0xff]
    %v1331 = vld [vmem:[#allocation2 + $0x208] sm:$0xff]
    %v1332 = vld [vmem:[#allocation2 + $0x210] sm:$0xff]
    %v1333 = vld [vmem:[#allocation2 + $0x218] sm:$0xff]
    %v1334 = vld [vmem:[#allocation2 + $0x220] sm:$0xff]
    %v1335 = vld [vmem:[#allocation2 + $0x228] sm:$0xff]
    %v1336 = vld [vmem:[#allocation2 + $0x230] sm:$0xff]
    %v1337 = vld [vmem:[#allocation2 + $0x238] sm:$0xff]
    %v1338 = vld [vmem:[#allocation2 + $0x240] sm:$0xff]
    %v1339 = vld [vmem:[#allocation2 + $0x248] sm:$0xff]
    %v1340 = vld [vmem:[#allocation2 + $0x250] sm:$0xff]
    %v1341 = vld [vmem:[#allocation2 + $0x258] sm:$0xff]
    %v1342 = vld [vmem:[#allocation2 + $0x260] sm:$0xff]
    %v1343 = vld [vmem:[#allocation2 + $0x268] sm:$0xff]
    %v1344 = vld [vmem:[#allocation2 + $0x270] sm:$0xff]
    %v1345 = vld [vmem:[#allocation2 + $0x278] sm:$0xff]
    %v1346 = vld [vmem:[#allocation2 + $0x280] sm:$0xff]
    %v1347 = vld [vmem:[#allocation2 + $0x288] sm:$0xff]
    %v1348 = vld [vmem:[#allocation2 + $0x290] sm:$0xff]
    %v1349 = vld [vmem:[#allocation2 + $0x298] sm:$0xff]
    %v1350 = vld [vmem:[#allocation2 + $0x2a0] sm:$0xff]
    %v1351 = vld [vmem:[#allocation2 + $0x2a8] sm:$0xff]
    %v1352 = vld [vmem:[#allocation2 + $0x2b0] sm:$0xff]
    %v1353 = vld [vmem:[#allocation2 + $0x2b8] sm:$0xff]
    %v1354 = vld [vmem:[#allocation2 + $0x2c0] sm:$0xff]
    %v1355 = vld [vmem:[#allocation2 + $0x2c8] sm:$0xff]
    %v1356 = vld [vmem:[#allocation2 + $0x2d0] sm:$0xff]
    %v1357 = vld [vmem:[#allocation2 + $0x2d8] sm:$0xff]
    %v1358 = vld [vmem:[#allocation2 + $0x2e0] sm:$0xff]
    %v1359 = vld [vmem:[#allocation2 + $0x2e8] sm:$0xff]
    %v1360 = vld [vmem:[#allocation2 + $0x2f0] sm:$0xff]
    %v1361 = vld [vmem:[#allocation2 + $0x2f8] sm:$0xff]
    %v1362 = vld [vmem:[#allocation2 + $0x300] sm:$0xff]
    %v1363 = vld [vmem:[#allocation2 + $0x308] sm:$0xff]
    %v1364 = vld [vmem:[#allocation2 + $0x310] sm:$0xff]
    %v1365 = vld [vmem:[#allocation2 + $0x318] sm:$0xff]
    %v1366 = vld [vmem:[#allocation2 + $0x320] sm:$0xff]
    %v1367 = vld [vmem:[#allocation2 + $0x328] sm:$0xff]
    %v1368 = vld [vmem:[#allocation2 + $0x330] sm:$0xff]
    %v1369 = vld [vmem:[#allocation2 + $0x338] sm:$0xff]
    %v1370 = vld [vmem:[#allocation2 + $0x340] sm:$0xff]
    %v1371 = vld [vmem:[#allocation2 + $0x348] sm:$0xff]
    %v1372 = vld [vmem:[#allocation2 + $0x350] sm:$0xff]
    %v1373 = vld [vmem:[#allocation2 + $0x358] sm:$0xff]
    %v1374 = vld [vmem:[#allocation2 + $0x360] sm:$0xff]
    %v1375 = vld [vmem:[#allocation2 + $0x368] sm:$0xff]
    %v1376 = vld [vmem:[#allocation2 + $0x370] sm:$0xff]
    %v1377 = vld [vmem:[#allocation2 + $0x378] sm:$0xff]
    %vm1378 = vcmask 916480
    %v1380 = vsel %vm1378, %v1265, 0
    %1382 = vmatprep.subr.mxu0 %v1267
    %1383 = vmatpush1.msra.mxu0 %v1266
    %1384 = vmatprep.subr.mxu0 %v1275
    %1385 = vmatpush1.msra.mxu0 %v1274
    %1386 = vmatprep.subr.mxu0 %v1283
    %1387 = vmatpush1.msra.mxu0 %v1282
    %1388 = vmatprep.subr.mxu0 %v1291
    %1389 = vmatpush1.msra.mxu0 %v1290
    %1390 = vmatprep.subr.mxu0 %v1299
    %1391 = vmatpush1.msra.mxu0 %v1298
    %1392 = vmatprep.subr.mxu0 %v1307
    %1393 = vmatpush1.msra.mxu0 %v1306
    %1394 = vmatprep.subr.mxu0 %v1315
    %1395 = vmatpush1.msra.mxu0 %v1314
    %1396 = vmatprep.subr.mxu0 %v1323
    %1397 = vmatpush1.msra.mxu0 %v1322
    %1398 = vmatprep.subr.mxu0 %v1331
    %1399 = vmatpush1.msra.mxu0 %v1330
    %1400 = vmatprep.subr.mxu0 %v1339
    %1401 = vmatpush1.msra.mxu0 %v1338
    %1402 = vmatprep.subr.mxu0 %v1347
    %1403 = vmatpush1.msra.mxu0 %v1346
    %1404 = vmatprep.subr.mxu0 %v1355
    %1405 = vmatpush1.msra.mxu0 %v1354
    %1406 = vmatprep.subr.mxu0 %v1363
    %1407 = vmatpush1.msra.mxu0 %v1362
    %1408 = vmatprep.subr.mxu0 %v1371
    %1409 = vmatpush1.msra.mxu0 %v1370
    %1410 = vmatprep.subr.mxu0 0.0
    %1411 = vmatpush1.msra.mxu0 0.0
    %1412 = vmatprep.subr.mxu0 0.0
    %1413 = vmatpush1.msra.mxu0 0.0
    %1414 = vmatprep.subr.mxu0 0.0
    %1415 = vmatpush1.msra.mxu0 0.0
    %1416 = vmatprep.subr.mxu0 0.0
    %1417 = vmatpush1.msra.mxu0 0.0
    %1418 = vmatprep.subr.mxu0 0.0
    %1419 = vmatpush1.msra.mxu0 0.0
    %1420 = vmatprep.subr.mxu0 0.0
    %1421 = vmatpush1.msra.mxu0 0.0
    %1422 = vmatprep.subr.mxu0 0.0
    %1423 = vmatpush1.msra.mxu0 0.0
    %1424 = vmatprep.subr.mxu0 0.0
    %1425 = vmatpush1.msra.mxu0 0.0
    %1426 = vmatprep.subr.mxu0 0.0
    %1427 = vmatpush1.msra.mxu0 0.0
    %1428 = vmatprep.subr.mxu0 0.0
    %1429 = vmatpush1.msra.mxu0 0.0
    %1430 = vmatprep.subr.mxu0 0.0
    %1431 = vmatpush1.msra.mxu0 0.0
    %1432 = vmatprep.subr.mxu0 0.0
    %1433 = vmatpush1.msra.mxu0 0.0
    %1434 = vmatprep.subr.mxu0 0.0
    %1435 = vmatpush1.msra.mxu0 0.0
    %1436 = vmatprep.subr.mxu0 0.0
    %1437 = vmatpush1.msra.mxu0 0.0
    %1438 = vmatprep.subr.mxu0 0.0
    %1439 = vmatpush1.msra.mxu0 0.0
    %1440 = vmatprep.subr.mxu0 0.0
    %1441 = vmatpush1.msra.mxu0 0.0
    %1442 = vmatprep.subr.mxu0 0.0
    %1443 = vmatpush1.msra.mxu0 0.0
    %1444 = vmatprep.subr.mxu0 0.0
    %1445 = vmatpush1.msra.mxu0 0.0
    %1446 = vmatprep.mubr.f32.mxu0 0.0
    %1447 = vmatmul.mubr.f32.gmra.mrb[0].mxu0 %v1380
    %v1448 = vpop.f32.mrb[0].mxu0
    %v1449 = vadd.f32 0.0, %v1448
    %v1450 = vpop.f32.mrb[0].mxu0
    %v1451 = vadd.f32 0.0, %v1450
    %1452 = vdwg.mxu0
    %1453 = vmatprep.subr.mxu0 %v1269
    %1454 = vmatpush1.msra.mxu0 %v1268
    %1455 = vmatprep.subr.mxu0 %v1277
    %1456 = vmatpush1.msra.mxu0 %v1276
    %1457 = vmatprep.subr.mxu0 %v1285
    %1458 = vmatpush1.msra.mxu0 %v1284
    %1459 = vmatprep.subr.mxu0 %v1293
    %1460 = vmatpush1.msra.mxu0 %v1292
    %1461 = vmatprep.subr.mxu0 %v1301
    %1462 = vmatpush1.msra.mxu0 %v1300
    %1463 = vmatprep.subr.mxu0 %v1309
    %1464 = vmatpush1.msra.mxu0 %v1308
    %1465 = vmatprep.subr.mxu0 %v1317
    %1466 = vmatpush1.msra.mxu0 %v1316
    %1467 = vmatprep.subr.mxu0 %v1325
    %1468 = vmatpush1.msra.mxu0 %v1324
    %1469 = vmatprep.subr.mxu0 %v1333
    %1470 = vmatpush1.msra.mxu0 %v1332
    %1471 = vmatprep.subr.mxu0 %v1341
    %1472 = vmatpush1.msra.mxu0 %v1340
    %1473 = vmatprep.subr.mxu0 %v1349
    %1474 = vmatpush1.msra.mxu0 %v1348
    %1475 = vmatprep.subr.mxu0 %v1357
    %1476 = vmatpush1.msra.mxu0 %v1356
    %1477 = vmatprep.subr.mxu0 %v1365
    %1478 = vmatpush1.msra.mxu0 %v1364
    %1479 = vmatprep.subr.mxu0 %v1373
    %1480 = vmatpush1.msra.mxu0 %v1372
    %1481 = vmatprep.subr.mxu0 0.0
    %1482 = vmatpush1.msra.mxu0 0.0
    %1483 = vmatprep.subr.mxu0 0.0
    %1484 = vmatpush1.msra.mxu0 0.0
    %1485 = vmatprep.subr.mxu0 0.0
    %1486 = vmatpush1.msra.mxu0 0.0
    %1487 = vmatprep.subr.mxu0 0.0
    %1488 = vmatpush1.msra.mxu0 0.0
    %1489 = vmatprep.subr.mxu0 0.0
    %1490 = vmatpush1.msra.mxu0 0.0
    %1491 = vmatprep.subr.mxu0 0.0
    %1492 = vmatpush1.msra.mxu0 0.0
    %1493 = vmatprep.subr.mxu0 0.0
    %1494 = vmatpush1.msra.mxu0 0.0
    %1495 = vmatprep.subr.mxu0 0.0
    %1496 = vmatpush1.msra.mxu0 0.0
    %1497 = vmatprep.subr.mxu0 0.0
    %1498 = vmatpush1.msra.mxu0 0.0
    %1499 = vmatprep.subr.mxu0 0.0
    %1500 = vmatpush1.msra.mxu0 0.0
    %1501 = vmatprep.subr.mxu0 0.0
    %1502 = vmatpush1.msra.mxu0 0.0
    %1503 = vmatprep.subr.mxu0 0.0
    %1504 = vmatpush1.msra.mxu0 0.0
    %1505 = vmatprep.subr.mxu0 0.0
    %1506 = vmatpush1.msra.mxu0 0.0
    %1507 = vmatprep.subr.mxu0 0.0
    %1508 = vmatpush1.msra.mxu0 0.0
    %1509 = vmatprep.subr.mxu0 0.0
    %1510 = vmatpush1.msra.mxu0 0.0
    %1511 = vmatprep.subr.mxu0 0.0
    %1512 = vmatpush1.msra.mxu0 0.0
    %1513 = vmatprep.subr.mxu0 0.0
    %1514 = vmatpush1.msra.mxu0 0.0
    %1515 = vmatprep.subr.mxu0 0.0
    %1516 = vmatpush1.msra.mxu0 0.0
    %1517 = vmatprep.mubr.f32.mxu0 0.0
    %1518 = vmatmul.mubr.f32.gmra.mrb[0].mxu0 %v1380
    %v1519 = vpop.f32.mrb[0].mxu0
    %v1520 = vadd.f32 0.0, %v1519
    %v1521 = vpop.f32.mrb[0].mxu0
    %v1522 = vadd.f32 0.0, %v1521
    %1523 = vdwg.mxu0
    %1524 = vmatprep.subr.mxu0 %v1271
    %1525 = vmatpush1.msra.mxu0 %v1270
    %1526 = vmatprep.subr.mxu0 %v1279
    %1527 = vmatpush1.msra.mxu0 %v1278
    %1528 = vmatprep.subr.mxu0 %v1287
    %1529 = vmatpush1.msra.mxu0 %v1286
    %1530 = vmatprep.subr.mxu0 %v1295
    %1531 = vmatpush1.msra.mxu0 %v1294
    %1532 = vmatprep.subr.mxu0 %v1303
    %1533 = vmatpush1.msra.mxu0 %v1302
    %1534 = vmatprep.subr.mxu0 %v1311
    %1535 = vmatpush1.msra.mxu0 %v1310
    %1536 = vmatprep.subr.mxu0 %v1319
    %1537 = vmatpush1.msra.mxu0 %v1318
    %1538 = vmatprep.subr.mxu0 %v1327
    %1539 = vmatpush1.msra.mxu0 %v1326
    %1540 = vmatprep.subr.mxu0 %v1335
    %1541 = vmatpush1.msra.mxu0 %v1334
    %1542 = vmatprep.subr.mxu0 %v1343
    %1543 = vmatpush1.msra.mxu0 %v1342
    %1544 = vmatprep.subr.mxu0 %v1351
    %1545 = vmatpush1.msra.mxu0 %v1350
    %1546 = vmatprep.subr.mxu0 %v1359
    %1547 = vmatpush1.msra.mxu0 %v1358
    %1548 = vmatprep.subr.mxu0 %v1367
    %1549 = vmatpush1.msra.mxu0 %v1366
    %1550 = vmatprep.subr.mxu0 %v1375
    %1551 = vmatpush1.msra.mxu0 %v1374
    %1552 = vmatprep.subr.mxu0 0.0
    %1553 = vmatpush1.msra.mxu0 0.0
    %1554 = vmatprep.subr.mxu0 0.0
    %1555 = vmatpush1.msra.mxu0 0.0
    %1556 = vmatprep.subr.mxu0 0.0
    %1557 = vmatpush1.msra.mxu0 0.0
    %1558 = vmatprep.subr.mxu0 0.0
    %1559 = vmatpush1.msra.mxu0 0.0
    %1560 = vmatprep.subr.mxu0 0.0
    %1561 = vmatpush1.msra.mxu0 0.0
    %1562 = vmatprep.subr.mxu0 0.0
    %1563 = vmatpush1.msra.mxu0 0.0
    %1564 = vmatprep.subr.mxu0 0.0
    %1565 = vmatpush1.msra.mxu0 0.0
    %1566 = vmatprep.subr.mxu0 0.0
    %1567 = vmatpush1.msra.mxu0 0.0
    %1568 = vmatprep.subr.mxu0 0.0
    %1569 = vmatpush1.msra.mxu0 0.0
    %1570 = vmatprep.subr.mxu0 0.0
    %1571 = vmatpush1.msra.mxu0 0.0
    %1572 = vmatprep.subr.mxu0 0.0
    %1573 = vmatpush1.msra.mxu0 0.0
    %1574 = vmatprep.subr.mxu0 0.0
    %1575 = vmatpush1.msra.mxu0 0.0
    %1576 = vmatprep.subr.mxu0 0.0
    %1577 = vmatpush1.msra.mxu0 0.0
    %1578 = vmatprep.subr.mxu0 0.0
    %1579 = vmatpush1.msra.mxu0 0.0
    %1580 = vmatprep.subr.mxu0 0.0
    %1581 = vmatpush1.msra.mxu0 0.0
    %1582 = vmatprep.subr.mxu0 0.0
    %1583 = vmatpush1.msra.mxu0 0.0
    %1584 = vmatprep.subr.mxu0 0.0
    %1585 = vmatpush1.msra.mxu0 0.0
    %1586 = vmatprep.subr.mxu0 0.0
    %1587 = vmatpush1.msra.mxu0 0.0
    %1588 = vmatprep.mubr.f32.mxu0 0.0
    %1589 = vmatmul.mubr.f32.gmra.mrb[0].mxu0 %v1380
    %v1590 = vpop.f32.mrb[0].mxu0
    %v1591 = vadd.f32 0.0, %v1590
    %v1592 = vpop.f32.mrb[0].mxu0
    %v1593 = vadd.f32 0.0, %v1592
    %1594 = vdwg.mxu0
    %1595 = vmatprep.subr.mxu0 %v1273
    %1596 = vmatpush1.msra.mxu0 %v1272
    %1597 = vmatprep.subr.mxu0 %v1281
    %1598 = vmatpush1.msra.mxu0 %v1280
    %1599 = vmatprep.subr.mxu0 %v1289
    %1600 = vmatpush1.msra.mxu0 %v1288
    %1601 = vmatprep.subr.mxu0 %v1297
    %1602 = vmatpush1.msra.mxu0 %v1296
    %1603 = vmatprep.subr.mxu0 %v1305
    %1604 = vmatpush1.msra.mxu0 %v1304
    %1605 = vmatprep.subr.mxu0 %v1313
    %1606 = vmatpush1.msra.mxu0 %v1312
    %1607 = vmatprep.subr.mxu0 %v1321
    %1608 = vmatpush1.msra.mxu0 %v1320
    %1609 = vmatprep.subr.mxu0 %v1329
    %1610 = vmatpush1.msra.mxu0 %v1328
    %1611 = vmatprep.subr.mxu0 %v1337
    %1612 = vmatpush1.msra.mxu0 %v1336
    %1613 = vmatprep.subr.mxu0 %v1345
    %1614 = vmatpush1.msra.mxu0 %v1344
    %1615 = vmatprep.subr.mxu0 %v1353
    %1616 = vmatpush1.msra.mxu0 %v1352
    %1617 = vmatprep.subr.mxu0 %v1361
    %1618 = vmatpush1.msra.mxu0 %v1360
    %1619 = vmatprep.subr.mxu0 %v1369
    %1620 = vmatpush1.msra.mxu0 %v1368
    %1621 = vmatprep.subr.mxu0 %v1377
    %1622 = vmatpush1.msra.mxu0 %v1376
    %1623 = vmatprep.subr.mxu0 0.0
    %1624 = vmatpush1.msra.mxu0 0.0
    %1625 = vmatprep.subr.mxu0 0.0
    %1626 = vmatpush1.msra.mxu0 0.0
    %1627 = vmatprep.subr.mxu0 0.0
    %1628 = vmatpush1.msra.mxu0 0.0
    %1629 = vmatprep.subr.mxu0 0.0
    %1630 = vmatpush1.msra.mxu0 0.0
    %1631 = vmatprep.subr.mxu0 0.0
    %1632 = vmatpush1.msra.mxu0 0.0
    %1633 = vmatprep.subr.mxu0 0.0
    %1634 = vmatpush1.msra.mxu0 0.0
    %1635 = vmatprep.subr.mxu0 0.0
    %1636 = vmatpush1.msra.mxu0 0.0
    %1637 = vmatprep.subr.mxu0 0.0
    %1638 = vmatpush1.msra.mxu0 0.0
    %1639 = vmatprep.subr.mxu0 0.0
    %1640 = vmatpush1.msra.mxu0 0.0
    %1641 = vmatprep.subr.mxu0 0.0
    %1642 = vmatpush1.msra.mxu0 0.0
    %1643 = vmatprep.subr.mxu0 0.0
    %1644 = vmatpush1.msra.mxu0 0.0
    %1645 = vmatprep.subr.mxu0 0.0
    %1646 = vmatpush1.msra.mxu0 0.0
    %1647 = vmatprep.subr.mxu0 0.0
    %1648 = vmatpush1.msra.mxu0 0.0
    %1649 = vmatprep.subr.mxu0 0.0
    %1650 = vmatpush1.msra.mxu0 0.0
    %1651 = vmatprep.subr.mxu0 0.0
    %1652 = vmatpush1.msra.mxu0 0.0
    %1653 = vmatprep.subr.mxu0 0.0
    %1654 = vmatpush1.msra.mxu0 0.0
    %1655 = vmatprep.subr.mxu0 0.0
    %1656 = vmatpush1.msra.mxu0 0.0
    %1657 = vmatprep.subr.mxu0 0.0
    %1658 = vmatpush1.msra.mxu0 0.0
    %1659 = vmatprep.mubr.f32.mxu0 0.0
    %1660 = vmatmul.mubr.f32.gmra.mrb[0].mxu0 %v1380
    %v1661 = vpop.f32.mrb[0].mxu0
    %v1662 = vadd.f32 0.0, %v1661
    %v1663 = vpop.f32.mrb[0].mxu0
    %v1664 = vadd.f32 0.0, %v1663
    %1665 = vdwg.mxu0
    %v1666 = vld [vmem:[%s3] sm:$0xff]
    %v1667 = vadd.f32 %v1449, %v1451
    %v1668 = vadd.f32 %v1667, %v1520
    %v1669 = vadd.f32 %v1668, %v1522
    %v1670 = vadd.f32 %v1669, %v1591
    %v1671 = vadd.f32 %v1670, %v1593
    %v1672 = vadd.f32 %v1671, %v1662
    %v1673 = vadd.f32 %v1672, %v1664
    %1674 = vadd.xlane.f32.xlu0 %v1673
    %v1675 = vpop.xlane.xlu0 %1674
    %v1676 = vrcp.pop 1024.0
    %v1677 = vmul.f32 %v1675, %v1676
    %v1678 = vsub.f32 %v1449, %v1677
    %v1679 = vsub.f32 %v1451, %v1677
    %v1680 = vsub.f32 %v1520, %v1677
    %v1681 = vsub.f32 %v1522, %v1677
    %v1682 = vsub.f32 %v1591, %v1677
    %v1683 = vsub.f32 %v1593, %v1677
    %v1684 = vsub.f32 %v1662, %v1677
    %v1685 = vsub.f32 %v1664, %v1677
    %v1686 = vmul.f32 %v1678, %v1678
    %v1687 = vmul.f32 %v1679, %v1679
    %v1688 = vmul.f32 %v1680, %v1680
    %v1689 = vmul.f32 %v1681, %v1681
    %v1690 = vmul.f32 %v1682, %v1682
    %v1691 = vmul.f32 %v1683, %v1683
    %v1692 = vmul.f32 %v1684, %v1684
    %v1693 = vmul.f32 %v1685, %v1685
    %v1694 = vadd.f32 %v1686, %v1687
    %v1695 = vadd.f32 %v1694, %v1688
    %v1696 = vadd.f32 %v1695, %v1689
    %v1697 = vadd.f32 %v1696, %v1690
    %v1698 = vadd.f32 %v1697, %v1691
    %v1699 = vadd.f32 %v1698, %v1692
    %v1700 = vadd.f32 %v1699, %v1693
    %1701 = vadd.xlane.f32.xlu0 %v1700
    %v1702 = vpop.xlane.xlu0 %1701
    %v1703 = vmul.f32 %v1702, %v1676
    %v1704 = vadd.f32 %v1703, 1e-05
    %v1705 = vrsqrt.pop %v1704
    %v1706 = vmul.f32 %v1678, %v1705
    %v1707 = vmul.f32 %v1679, %v1705
    %v1708 = vmul.f32 %v1680, %v1705
    %v1709 = vmul.f32 %v1681, %v1705
    %v1710 = vmul.f32 %v1682, %v1705
    %v1711 = vmul.f32 %v1683, %v1705
    %v1712 = vmul.f32 %v1684, %v1705
    %v1713 = vmul.f32 %v1685, %v1705
    %1715 = vset.pattern.permute.xlu0 0
    %1716 = vperm.xlu0 %1715, %v1666
    %v1717 = vpop.permute.xlu0 %1716
    %v1719 = vmul.f32 %v1706, %v1717
    %v1720 = vmul.f32 %v1707, %v1717
    %v1721 = vmul.f32 %v1708, %v1717
    %v1722 = vmul.f32 %v1709, %v1717
    %v1723 = vmul.f32 %v1710, %v1717
    %v1724 = vmul.f32 %v1711, %v1717
    %v1725 = vmul.f32 %v1712, %v1717
    %v1726 = vmul.f32 %v1713, %v1717
    %1727 = vset.pattern.permute.xlu0 1
    %1728 = vperm.xlu0 %1727, %v1666
    %v1729 = vpop.permute.xlu0 %1728
    %v1731 = vadd.f32 %v1719, %v1729
    %v1732 = vadd.f32 %v1720, %v1729
    %v1733 = vadd.f32 %v1721, %v1729
    %v1734 = vadd.f32 %v1722, %v1729
    %v1735 = vadd.f32 %v1723, %v1729
    %v1736 = vadd.f32 %v1724, %v1729
    %v1737 = vadd.f32 %v1725, %v1729
    %v1738 = vadd.f32 %v1726, %v1729
    %v1739 = vmax.f32 %v1731, 0.0
    %v1740 = vmax.f32 %v1732, 0.0
    %v1741 = vmax.f32 %v1733, 0.0
    %v1742 = vmax.f32 %v1734, 0.0
    %v1743 = vmax.f32 %v1735, 0.0
    %v1744 = vmax.f32 %v1736, 0.0
    %v1745 = vmax.f32 %v1737, 0.0
    %v1746 = vmax.f32 %v1738, 0.0
    %1747 = vrot.lane.b32.xlu0 %v1739, 73
    %v1748 = vpop.permute.xlu0 %1747
    %1749 = vrot.lane.b32.xlu0 %v1740, 73
    %v1750 = vpop.permute.xlu0 %1749
    %1751 = vrot.lane.b32.xlu0 %v1741, 73
    %v1752 = vpop.permute.xlu0 %1751
    %1753 = vrot.lane.b32.xlu0 %v1742, 73
    %v1754 = vpop.permute.xlu0 %1753
    %1755 = vrot.lane.b32.xlu0 %v1743, 73
    %v1756 = vpop.permute.xlu0 %1755
    %1757 = vrot.lane.b32.xlu0 %v1744, 73
    %v1758 = vpop.permute.xlu0 %1757
    %1759 = vrot.lane.b32.xlu0 %v1745, 73
    %v1760 = vpop.permute.xlu0 %1759
    %1761 = vrot.lane.b32.xlu0 %v1746, 73
    %v1762 = vpop.permute.xlu0 %1761
    %v1763 = vsel %vm106, %v1760, %v1762
    %v1764 = vsel %vm106, %v1758, %v1760
    %v1765 = vsel %vm106, %v1756, %v1758
    %v1766 = vsel %vm106, %v1754, %v1756
    %v1767 = vsel %vm106, %v1752, %v1754
    %v1768 = vsel %vm106, %v1750, %v1752
    %v1769 = vsel %vm106, %v1748, %v1750
    %v1770 = vsel %vm106, %v1762, %v1748
    %1771 = vrot.lane.b32.xlu0 %v1739, 72
    %v1772 = vpop.permute.xlu0 %1771
    %1773 = vrot.lane.b32.xlu0 %v1740, 72
    %v1774 = vpop.permute.xlu0 %1773
    %1775 = vrot.lane.b32.xlu0 %v1741, 72
    %v1776 = vpop.permute.xlu0 %1775
    %1777 = vrot.lane.b32.xlu0 %v1742, 72
    %v1778 = vpop.permute.xlu0 %1777
    %1779 = vrot.lane.b32.xlu0 %v1743, 72
    %v1780 = vpop.permute.xlu0 %1779
    %1781 = vrot.lane.b32.xlu0 %v1744, 72
    %v1782 = vpop.permute.xlu0 %1781
    %1783 = vrot.lane.b32.xlu0 %v1745, 72
    %v1784 = vpop.permute.xlu0 %1783
    %1785 = vrot.lane.b32.xlu0 %v1746, 72
    %v1786 = vpop.permute.xlu0 %1785
    %v1787 = vsel %vm131, %v1784, %v1786
    %v1788 = vsel %vm131, %v1782, %v1784
    %v1789 = vsel %vm131, %v1780, %v1782
    %v1790 = vsel %vm131, %v1778, %v1780
    %v1791 = vsel %vm131, %v1776, %v1778
    %v1792 = vsel %vm131, %v1774, %v1776
    %v1793 = vsel %vm131, %v1772, %v1774
    %v1794 = vsel %vm131, %v1786, %v1772
    %v1795 = vsel %vm141, %v1770, %v1794
    %v1796 = vsel %vm141, %v1769, %v1793
    %v1797 = vsel %vm141, %v1768, %v1792
    %v1798 = vsel %vm141, %v1767, %v1791
    %v1799 = vsel %vm141, %v1766, %v1790
    %v1800 = vsel %vm141, %v1765, %v1789
    %v1801 = vsel %vm141, %v1764, %v1788
    %v1802 = vsel %vm141, %v1763, %v1787
    %v1803 = vsel %vm207, %v1795, 0.0
    %v1804 = vsel %vm208, %v1796, 0.0
    %v1805 = vsel %vm209, %v1797, 0.0
    %v1806 = vsel %vm210, %v1798, 0.0
    %v1807 = vsel %vm211, %v1799, 0.0
    %v1808 = vsel %vm212, %v1800, 0.0
    %v1809 = vsel %vm213, %v1801, 0.0
    %v1810 = vsel %vm214, %v1802, 0.0
    %1811 = vst [vmem:[#allocation2] sm:$0xff] %v1803
    %1812 = vst [vmem:[#allocation2 + $0x8] sm:$0xff] %v1804
    %1813 = vst [vmem:[#allocation2 + $0x10] sm:$0xff] %v1805
    %1814 = vst [vmem:[#allocation2 + $0x18] sm:$0xff] %v1806
    %1815 = vst [vmem:[#allocation2 + $0x20] sm:$0xff] %v1807
    %1816 = vst [vmem:[#allocation2 + $0x28] sm:$0xff] %v1808
    %1817 = vst [vmem:[#allocation2 + $0x30] sm:$0xff] %v1809
    %1818 = vst [vmem:[#allocation2 + $0x38] sm:$0xff] %v1810
    %1819 = vrot.lane.b32.xlu0 %v1739, 71
    %v1820 = vpop.permute.xlu0 %1819
    %1821 = vrot.lane.b32.xlu0 %v1740, 71
    %v1822 = vpop.permute.xlu0 %1821
    %1823 = vrot.lane.b32.xlu0 %v1741, 71
    %v1824 = vpop.permute.xlu0 %1823
    %1825 = vrot.lane.b32.xlu0 %v1742, 71
    %v1826 = vpop.permute.xlu0 %1825
    %1827 = vrot.lane.b32.xlu0 %v1743, 71
    %v1828 = vpop.permute.xlu0 %1827
    %1829 = vrot.lane.b32.xlu0 %v1744, 71
    %v1830 = vpop.permute.xlu0 %1829
    %1831 = vrot.lane.b32.xlu0 %v1745, 71
    %v1832 = vpop.permute.xlu0 %1831
    %1833 = vrot.lane.b32.xlu0 %v1746, 71
    %v1834 = vpop.permute.xlu0 %1833
    %v1835 = vsel %vm247, %v1832, %v1834
    %v1836 = vsel %vm247, %v1830, %v1832
    %v1837 = vsel %vm247, %v1828, %v1830
    %v1838 = vsel %vm247, %v1826, %v1828
    %v1839 = vsel %vm247, %v1824, %v1826
    %v1840 = vsel %vm247, %v1822, %v1824
    %v1841 = vsel %vm247, %v1820, %v1822
    %v1842 = vsel %vm247, %v1834, %v1820
    %1843 = vrot.lane.b32.xlu0 %v1739, 65
    %v1844 = vpop.permute.xlu0 %1843
    %1845 = vrot.lane.b32.xlu0 %v1740, 65
    %v1846 = vpop.permute.xlu0 %1845
    %1847 = vrot.lane.b32.xlu0 %v1741, 65
    %v1848 = vpop.permute.xlu0 %1847
    %1849 = vrot.lane.b32.xlu0 %v1742, 65
    %v1850 = vpop.permute.xlu0 %1849
    %1851 = vrot.lane.b32.xlu0 %v1743, 65
    %v1852 = vpop.permute.xlu0 %1851
    %1853 = vrot.lane.b32.xlu0 %v1744, 65
    %v1854 = vpop.permute.xlu0 %1853
    %1855 = vrot.lane.b32.xlu0 %v1745, 65
    %v1856 = vpop.permute.xlu0 %1855
    %1857 = vrot.lane.b32.xlu0 %v1746, 65
    %v1858 = vpop.permute.xlu0 %1857
    %v1859 = vsel %vm272, %v1856, %v1858
    %v1860 = vsel %vm272, %v1854, %v1856
    %v1861 = vsel %vm272, %v1852, %v1854
    %v1862 = vsel %vm272, %v1850, %v1852
    %v1863 = vsel %vm272, %v1848, %v1850
    %v1864 = vsel %vm272, %v1846, %v1848
    %v1865 = vsel %vm272, %v1844, %v1846
    %v1866 = vsel %vm272, %v1858, %v1844
    %v1867 = vsel %vm141, %v1842, %v1866
    %v1868 = vsel %vm141, %v1841, %v1865
    %v1869 = vsel %vm141, %v1840, %v1864
    %v1870 = vsel %vm141, %v1839, %v1863
    %v1871 = vsel %vm141, %v1838, %v1862
    %v1872 = vsel %vm141, %v1837, %v1861
    %v1873 = vsel %vm141, %v1836, %v1860
    %v1874 = vsel %vm141, %v1835, %v1859
    %v1875 = vsel %vm346, %v1867, 0.0
    %v1876 = vsel %vm347, %v1868, 0.0
    %v1877 = vsel %vm348, %v1869, 0.0
    %v1878 = vsel %vm349, %v1870, 0.0
    %v1879 = vsel %vm350, %v1871, 0.0
    %v1880 = vsel %vm351, %v1872, 0.0
    %v1881 = vsel %vm352, %v1873, 0.0
    %v1882 = vsel %vm353, %v1874, 0.0
    %1883 = vst [vmem:[#allocation2 + $0x40] sm:$0xff] %v1875
    %1884 = vst [vmem:[#allocation2 + $0x48] sm:$0xff] %v1876
    %1885 = vst [vmem:[#allocation2 + $0x50] sm:$0xff] %v1877
    %1886 = vst [vmem:[#allocation2 + $0x58] sm:$0xff] %v1878
    %1887 = vst [vmem:[#allocation2 + $0x60] sm:$0xff] %v1879
    %1888 = vst [vmem:[#allocation2 + $0x68] sm:$0xff] %v1880
    %1889 = vst [vmem:[#allocation2 + $0x70] sm:$0xff] %v1881
    %1890 = vst [vmem:[#allocation2 + $0x78] sm:$0xff] %v1882
    %1891 = vrot.lane.b32.xlu0 %v1739, 64
    %v1892 = vpop.permute.xlu0 %1891
    %1893 = vrot.lane.b32.xlu0 %v1740, 64
    %v1894 = vpop.permute.xlu0 %1893
    %1895 = vrot.lane.b32.xlu0 %v1741, 64
    %v1896 = vpop.permute.xlu0 %1895
    %1897 = vrot.lane.b32.xlu0 %v1742, 64
    %v1898 = vpop.permute.xlu0 %1897
    %1899 = vrot.lane.b32.xlu0 %v1743, 64
    %v1900 = vpop.permute.xlu0 %1899
    %1901 = vrot.lane.b32.xlu0 %v1744, 64
    %v1902 = vpop.permute.xlu0 %1901
    %1903 = vrot.lane.b32.xlu0 %v1745, 64
    %v1904 = vpop.permute.xlu0 %1903
    %1905 = vrot.lane.b32.xlu0 %v1746, 64
    %v1906 = vpop.permute.xlu0 %1905
    %v1907 = vsel %vm386, %v1904, %v1906
    %v1908 = vsel %vm386, %v1902, %v1904
    %v1909 = vsel %vm386, %v1900, %v1902
    %v1910 = vsel %vm386, %v1898, %v1900
    %v1911 = vsel %vm386, %v1896, %v1898
    %v1912 = vsel %vm386, %v1894, %v1896
    %v1913 = vsel %vm386, %v1892, %v1894
    %v1914 = vsel %vm386, %v1906, %v1892
    %1915 = vrot.lane.b32.xlu0 %v1739, 63
    %v1916 = vpop.permute.xlu0 %1915
    %1917 = vrot.lane.b32.xlu0 %v1740, 63
    %v1918 = vpop.permute.xlu0 %1917
    %1919 = vrot.lane.b32.xlu0 %v1741, 63
    %v1920 = vpop.permute.xlu0 %1919
    %1921 = vrot.lane.b32.xlu0 %v1742, 63
    %v1922 = vpop.permute.xlu0 %1921
    %1923 = vrot.lane.b32.xlu0 %v1743, 63
    %v1924 = vpop.permute.xlu0 %1923
    %1925 = vrot.lane.b32.xlu0 %v1744, 63
    %v1926 = vpop.permute.xlu0 %1925
    %1927 = vrot.lane.b32.xlu0 %v1745, 63
    %v1928 = vpop.permute.xlu0 %1927
    %1929 = vrot.lane.b32.xlu0 %v1746, 63
    %v1930 = vpop.permute.xlu0 %1929
    %v1931 = vsel %vm411, %v1928, %v1930
    %v1932 = vsel %vm411, %v1926, %v1928
    %v1933 = vsel %vm411, %v1924, %v1926
    %v1934 = vsel %vm411, %v1922, %v1924
    %v1935 = vsel %vm411, %v1920, %v1922
    %v1936 = vsel %vm411, %v1918, %v1920
    %v1937 = vsel %vm411, %v1916, %v1918
    %v1938 = vsel %vm411, %v1930, %v1916
    %v1939 = vsel %vm141, %v1914, %v1938
    %v1940 = vsel %vm141, %v1913, %v1937
    %v1941 = vsel %vm141, %v1912, %v1936
    %v1942 = vsel %vm141, %v1911, %v1935
    %v1943 = vsel %vm141, %v1910, %v1934
    %v1944 = vsel %vm141, %v1909, %v1933
    %v1945 = vsel %vm141, %v1908, %v1932
    %v1946 = vsel %vm141, %v1907, %v1931
    %v1947 = vsel %vm445, %v1939, 0.0
    %v1948 = vsel %vm446, %v1940, 0.0
    %v1949 = vsel %vm447, %v1941, 0.0
    %v1950 = vsel %vm448, %v1942, 0.0
    %v1951 = vsel %vm449, %v1943, 0.0
    %v1952 = vsel %vm450, %v1944, 0.0
    %v1953 = vsel %vm451, %v1945, 0.0
    %v1954 = vsel %vm452, %v1946, 0.0
    %1955 = vst [vmem:[#allocation2 + $0x80] sm:$0xff] %v1947
    %1956 = vst [vmem:[#allocation2 + $0x88] sm:$0xff] %v1948
    %1957 = vst [vmem:[#allocation2 + $0x90] sm:$0xff] %v1949
    %1958 = vst [vmem:[#allocation2 + $0x98] sm:$0xff] %v1950
    %1959 = vst [vmem:[#allocation2 + $0xa0] sm:$0xff] %v1951
    %1960 = vst [vmem:[#allocation2 + $0xa8] sm:$0xff] %v1952
    %1961 = vst [vmem:[#allocation2 + $0xb0] sm:$0xff] %v1953
    %1962 = vst [vmem:[#allocation2 + $0xb8] sm:$0xff] %v1954
    %1963 = vrot.lane.b32.xlu0 %v1739, 57
    %v1964 = vpop.permute.xlu0 %1963
    %1965 = vrot.lane.b32.xlu0 %v1740, 57
    %v1966 = vpop.permute.xlu0 %1965
    %1967 = vrot.lane.b32.xlu0 %v1741, 57
    %v1968 = vpop.permute.xlu0 %1967
    %1969 = vrot.lane.b32.xlu0 %v1742, 57
    %v1970 = vpop.permute.xlu0 %1969
    %1971 = vrot.lane.b32.xlu0 %v1743, 57
    %v1972 = vpop.permute.xlu0 %1971
    %1973 = vrot.lane.b32.xlu0 %v1744, 57
    %v1974 = vpop.permute.xlu0 %1973
    %1975 = vrot.lane.b32.xlu0 %v1745, 57
    %v1976 = vpop.permute.xlu0 %1975
    %1977 = vrot.lane.b32.xlu0 %v1746, 57
    %v1978 = vpop.permute.xlu0 %1977
    %v1979 = vsel %vm485, %v1976, %v1978
    %v1980 = vsel %vm485, %v1974, %v1976
    %v1981 = vsel %vm485, %v1972, %v1974
    %v1982 = vsel %vm485, %v1970, %v1972
    %v1983 = vsel %vm485, %v1968, %v1970
    %v1984 = vsel %vm485, %v1966, %v1968
    %v1985 = vsel %vm485, %v1964, %v1966
    %v1986 = vsel %vm485, %v1978, %v1964
    %1987 = vrot.lane.b32.xlu0 %v1739, 56
    %v1988 = vpop.permute.xlu0 %1987
    %1989 = vrot.lane.b32.xlu0 %v1740, 56
    %v1990 = vpop.permute.xlu0 %1989
    %1991 = vrot.lane.b32.xlu0 %v1741, 56
    %v1992 = vpop.permute.xlu0 %1991
    %1993 = vrot.lane.b32.xlu0 %v1742, 56
    %v1994 = vpop.permute.xlu0 %1993
    %1995 = vrot.lane.b32.xlu0 %v1743, 56
    %v1996 = vpop.permute.xlu0 %1995
    %1997 = vrot.lane.b32.xlu0 %v1744, 56
    %v1998 = vpop.permute.xlu0 %1997
    %1999 = vrot.lane.b32.xlu0 %v1745, 56
    %v2000 = vpop.permute.xlu0 %1999
    %2001 = vrot.lane.b32.xlu0 %v1746, 56
    %v2002 = vpop.permute.xlu0 %2001
    %v2003 = vsel %vm510, %v2000, %v2002
    %v2004 = vsel %vm510, %v1998, %v2000
    %v2005 = vsel %vm510, %v1996, %v1998
    %v2006 = vsel %vm510, %v1994, %v1996
    %v2007 = vsel %vm510, %v1992, %v1994
    %v2008 = vsel %vm510, %v1990, %v1992
    %v2009 = vsel %vm510, %v1988, %v1990
    %v2010 = vsel %vm510, %v2002, %v1988
    %v2011 = vsel %vm141, %v1986, %v2010
    %v2012 = vsel %vm141, %v1985, %v2009
    %v2013 = vsel %vm141, %v1984, %v2008
    %v2014 = vsel %vm141, %v1983, %v2007
    %v2015 = vsel %vm141, %v1982, %v2006
    %v2016 = vsel %vm141, %v1981, %v2005
    %v2017 = vsel %vm141, %v1980, %v2004
    %v2018 = vsel %vm141, %v1979, %v2003
    %v2019 = vsel %vm551, %v2011, 0.0
    %v2020 = vsel %vm552, %v2012, 0.0
    %v2021 = vsel %vm553, %v2013, 0.0
    %v2022 = vsel %vm554, %v2014, 0.0
    %v2023 = vsel %vm555, %v2015, 0.0
    %v2024 = vsel %vm556, %v2016, 0.0
    %v2025 = vsel %vm557, %v2017, 0.0
    %v2026 = vsel %vm558, %v2018, 0.0
    %2027 = vst [vmem:[#allocation2 + $0xc0] sm:$0xff] %v2019
    %2028 = vst [vmem:[#allocation2 + $0xc8] sm:$0xff] %v2020
    %2029 = vst [vmem:[#allocation2 + $0xd0] sm:$0xff] %v2021
    %2030 = vst [vmem:[#allocation2 + $0xd8] sm:$0xff] %v2022
    %2031 = vst [vmem:[#allocation2 + $0xe0] sm:$0xff] %v2023
    %2032 = vst [vmem:[#allocation2 + $0xe8] sm:$0xff] %v2024
    %2033 = vst [vmem:[#allocation2 + $0xf0] sm:$0xff] %v2025
    %2034 = vst [vmem:[#allocation2 + $0xf8] sm:$0xff] %v2026
    %2035 = vrot.lane.b32.xlu0 %v1739, 55
    %v2036 = vpop.permute.xlu0 %2035
    %2037 = vrot.lane.b32.xlu0 %v1740, 55
    %v2038 = vpop.permute.xlu0 %2037
    %2039 = vrot.lane.b32.xlu0 %v1741, 55
    %v2040 = vpop.permute.xlu0 %2039
    %2041 = vrot.lane.b32.xlu0 %v1742, 55
    %v2042 = vpop.permute.xlu0 %2041
    %2043 = vrot.lane.b32.xlu0 %v1743, 55
    %v2044 = vpop.permute.xlu0 %2043
    %2045 = vrot.lane.b32.xlu0 %v1744, 55
    %v2046 = vpop.permute.xlu0 %2045
    %2047 = vrot.lane.b32.xlu0 %v1745, 55
    %v2048 = vpop.permute.xlu0 %2047
    %2049 = vrot.lane.b32.xlu0 %v1746, 55
    %v2050 = vpop.permute.xlu0 %2049
    %v2051 = vsel %vm591, %v2048, %v2050
    %v2052 = vsel %vm591, %v2046, %v2048
    %v2053 = vsel %vm591, %v2044, %v2046
    %v2054 = vsel %vm591, %v2042, %v2044
    %v2055 = vsel %vm591, %v2040, %v2042
    %v2056 = vsel %vm591, %v2038, %v2040
    %v2057 = vsel %vm591, %v2036, %v2038
    %v2058 = vsel %vm591, %v2050, %v2036
    %2059 = vrot.lane.b32.xlu0 %v1739, 9
    %v2060 = vpop.permute.xlu0 %2059
    %2061 = vrot.lane.b32.xlu0 %v1740, 9
    %v2062 = vpop.permute.xlu0 %2061
    %2063 = vrot.lane.b32.xlu0 %v1741, 9
    %v2064 = vpop.permute.xlu0 %2063
    %2065 = vrot.lane.b32.xlu0 %v1742, 9
    %v2066 = vpop.permute.xlu0 %2065
    %2067 = vrot.lane.b32.xlu0 %v1743, 9
    %v2068 = vpop.permute.xlu0 %2067
    %2069 = vrot.lane.b32.xlu0 %v1744, 9
    %v2070 = vpop.permute.xlu0 %2069
    %2071 = vrot.lane.b32.xlu0 %v1745, 9
    %v2072 = vpop.permute.xlu0 %2071
    %2073 = vrot.lane.b32.xlu0 %v1746, 9
    %v2074 = vpop.permute.xlu0 %2073
    %v2075 = vsel %vm616, %v2072, %v2074
    %v2076 = vsel %vm616, %v2070, %v2072
    %v2077 = vsel %vm616, %v2068, %v2070
    %v2078 = vsel %vm616, %v2066, %v2068
    %v2079 = vsel %vm616, %v2064, %v2066
    %v2080 = vsel %vm616, %v2062, %v2064
    %v2081 = vsel %vm616, %v2060, %v2062
    %v2082 = vsel %vm616, %v2074, %v2060
    %v2083 = vsel %vm141, %v2058, %v2082
    %v2084 = vsel %vm141, %v2057, %v2081
    %v2085 = vsel %vm141, %v2056, %v2080
    %v2086 = vsel %vm141, %v2055, %v2079
    %v2087 = vsel %vm141, %v2054, %v2078
    %v2088 = vsel %vm141, %v2053, %v2077
    %v2089 = vsel %vm141, %v2052, %v2076
    %v2090 = vsel %vm141, %v2051, %v2075
    %v2091 = vsel %vm697, %v2083, 0.0
    %v2092 = vsel %vm698, %v2084, 0.0
    %v2093 = vsel %vm699, %v2085, 0.0
    %v2094 = vsel %vm700, %v2086, 0.0
    %v2095 = vsel %vm701, %v2087, 0.0
    %v2096 = vsel %vm702, %v2088, 0.0
    %v2097 = vsel %vm703, %v2089, 0.0
    %v2098 = vsel %vm704, %v2090, 0.0
    %2099 = vst [vmem:[#allocation2 + $0x100] sm:$0xff] %v2091
    %2100 = vst [vmem:[#allocation2 + $0x108] sm:$0xff] %v2092
    %2101 = vst [vmem:[#allocation2 + $0x110] sm:$0xff] %v2093
    %2102 = vst [vmem:[#allocation2 + $0x118] sm:$0xff] %v2094
    %2103 = vst [vmem:[#allocation2 + $0x120] sm:$0xff] %v2095
    %2104 = vst [vmem:[#allocation2 + $0x128] sm:$0xff] %v2096
    %2105 = vst [vmem:[#allocation2 + $0x130] sm:$0xff] %v2097
    %2106 = vst [vmem:[#allocation2 + $0x138] sm:$0xff] %v2098
    %2107 = vrot.lane.b32.xlu0 %v1739, 8
    %v2108 = vpop.permute.xlu0 %2107
    %2109 = vrot.lane.b32.xlu0 %v1740, 8
    %v2110 = vpop.permute.xlu0 %2109
    %2111 = vrot.lane.b32.xlu0 %v1741, 8
    %v2112 = vpop.permute.xlu0 %2111
    %2113 = vrot.lane.b32.xlu0 %v1742, 8
    %v2114 = vpop.permute.xlu0 %2113
    %2115 = vrot.lane.b32.xlu0 %v1743, 8
    %v2116 = vpop.permute.xlu0 %2115
    %2117 = vrot.lane.b32.xlu0 %v1744, 8
    %v2118 = vpop.permute.xlu0 %2117
    %2119 = vrot.lane.b32.xlu0 %v1745, 8
    %v2120 = vpop.permute.xlu0 %2119
    %2121 = vrot.lane.b32.xlu0 %v1746, 8
    %v2122 = vpop.permute.xlu0 %2121
    %v2123 = vsel %vm737, %v2120, %v2122
    %v2124 = vsel %vm737, %v2118, %v2120
    %v2125 = vsel %vm737, %v2116, %v2118
    %v2126 = vsel %vm737, %v2114, %v2116
    %v2127 = vsel %vm737, %v2112, %v2114
    %v2128 = vsel %vm737, %v2110, %v2112
    %v2129 = vsel %vm737, %v2108, %v2110
    %v2130 = vsel %vm737, %v2122, %v2108
    %2131 = vrot.lane.b32.xlu0 %v1739, 7
    %v2132 = vpop.permute.xlu0 %2131
    %2133 = vrot.lane.b32.xlu0 %v1740, 7
    %v2134 = vpop.permute.xlu0 %2133
    %2135 = vrot.lane.b32.xlu0 %v1741, 7
    %v2136 = vpop.permute.xlu0 %2135
    %2137 = vrot.lane.b32.xlu0 %v1742, 7
    %v2138 = vpop.permute.xlu0 %2137
    %2139 = vrot.lane.b32.xlu0 %v1743, 7
    %v2140 = vpop.permute.xlu0 %2139
    %2141 = vrot.lane.b32.xlu0 %v1744, 7
    %v2142 = vpop.permute.xlu0 %2141
    %2143 = vrot.lane.b32.xlu0 %v1745, 7
    %v2144 = vpop.permute.xlu0 %2143
    %2145 = vrot.lane.b32.xlu0 %v1746, 7
    %v2146 = vpop.permute.xlu0 %2145
    %v2147 = vsel %vm762, %v2144, %v2146
    %v2148 = vsel %vm762, %v2142, %v2144
    %v2149 = vsel %vm762, %v2140, %v2142
    %v2150 = vsel %vm762, %v2138, %v2140
    %v2151 = vsel %vm762, %v2136, %v2138
    %v2152 = vsel %vm762, %v2134, %v2136
    %v2153 = vsel %vm762, %v2132, %v2134
    %v2154 = vsel %vm762, %v2146, %v2132
    %v2155 = vsel %vm141, %v2130, %v2154
    %v2156 = vsel %vm141, %v2129, %v2153
    %v2157 = vsel %vm141, %v2128, %v2152
    %v2158 = vsel %vm141, %v2127, %v2151
    %v2159 = vsel %vm141, %v2126, %v2150
    %v2160 = vsel %vm141, %v2125, %v2149
    %v2161 = vsel %vm141, %v2124, %v2148
    %v2162 = vsel %vm141, %v2123, %v2147
    %v2163 = vsel %vm779, %v2155, 0.0
    %v2164 = vsel %vm780, %v2156, 0.0
    %v2165 = vsel %vm781, %v2157, 0.0
    %v2166 = vsel %vm782, %v2158, 0.0
    %v2167 = vsel %vm783, %v2159, 0.0
    %v2168 = vsel %vm784, %v2160, 0.0
    %v2169 = vsel %vm785, %v2161, 0.0
    %v2170 = vsel %vm786, %v2162, 0.0
    %2171 = vst [vmem:[#allocation2 + $0x140] sm:$0xff] %v2163
    %2172 = vst [vmem:[#allocation2 + $0x148] sm:$0xff] %v2164
    %2173 = vst [vmem:[#allocation2 + $0x150] sm:$0xff] %v2165
    %2174 = vst [vmem:[#allocation2 + $0x158] sm:$0xff] %v2166
    %2175 = vst [vmem:[#allocation2 + $0x160] sm:$0xff] %v2167
    %2176 = vst [vmem:[#allocation2 + $0x168] sm:$0xff] %v2168
    %2177 = vst [vmem:[#allocation2 + $0x170] sm:$0xff] %v2169
    %2178 = vst [vmem:[#allocation2 + $0x178] sm:$0xff] %v2170
    %2179 = vrot.lane.b32.xlu0 %v1739, 1
    %v2180 = vpop.permute.xlu0 %2179
    %2181 = vrot.lane.b32.xlu0 %v1740, 1
    %v2182 = vpop.permute.xlu0 %2181
    %2183 = vrot.lane.b32.xlu0 %v1741, 1
    %v2184 = vpop.permute.xlu0 %2183
    %2185 = vrot.lane.b32.xlu0 %v1742, 1
    %v2186 = vpop.permute.xlu0 %2185
    %2187 = vrot.lane.b32.xlu0 %v1743, 1
    %v2188 = vpop.permute.xlu0 %2187
    %2189 = vrot.lane.b32.xlu0 %v1744, 1
    %v2190 = vpop.permute.xlu0 %2189
    %2191 = vrot.lane.b32.xlu0 %v1745, 1
    %v2192 = vpop.permute.xlu0 %2191
    %2193 = vrot.lane.b32.xlu0 %v1746, 1
    %v2194 = vpop.permute.xlu0 %2193
    %v2195 = vsel %vm819, %v2192, %v2194
    %v2196 = vsel %vm819, %v2190, %v2192
    %v2197 = vsel %vm819, %v2188, %v2190
    %v2198 = vsel %vm819, %v2186, %v2188
    %v2199 = vsel %vm819, %v2184, %v2186
    %v2200 = vsel %vm819, %v2182, %v2184
    %v2201 = vsel %vm819, %v2180, %v2182
    %v2202 = vsel %vm819, %v2194, %v2180
    %v2203 = vsel %vm141, %v2202, %v1739
    %v2204 = vsel %vm141, %v2201, %v1740
    %v2205 = vsel %vm141, %v2200, %v1741
    %v2206 = vsel %vm141, %v2199, %v1742
    %v2207 = vsel %vm141, %v2198, %v1743
    %v2208 = vsel %vm141, %v2197, %v1744
    %v2209 = vsel %vm141, %v2196, %v1745
    %v2210 = vsel %vm141, %v2195, %v1746
    %v2211 = vsel %vm191, %v2203, 0.0
    %v2212 = vsel %vm192, %v2204, 0.0
    %v2213 = vsel %vm193, %v2205, 0.0
    %v2214 = vsel %vm194, %v2206, 0.0
    %v2215 = vsel %vm195, %v2207, 0.0
    %v2216 = vsel %vm196, %v2208, 0.0
    %v2217 = vsel %vm197, %v2209, 0.0
    %v2218 = vsel %vm198, %v2210, 0.0
    %2219 = vst [vmem:[#allocation2 + $0x180] sm:$0xff] %v2211
    %2220 = vst [vmem:[#allocation2 + $0x188] sm:$0xff] %v2212
    %2221 = vst [vmem:[#allocation2 + $0x190] sm:$0xff] %v2213
    %2222 = vst [vmem:[#allocation2 + $0x198] sm:$0xff] %v2214
    %2223 = vst [vmem:[#allocation2 + $0x1a0] sm:$0xff] %v2215
    %2224 = vst [vmem:[#allocation2 + $0x1a8] sm:$0xff] %v2216
    %2225 = vst [vmem:[#allocation2 + $0x1b0] sm:$0xff] %v2217
    %2226 = vst [vmem:[#allocation2 + $0x1b8] sm:$0xff] %v2218
    %2227 = vrot.lane.b32.xlu0 %v1739, 127
    %v2228 = vpop.permute.xlu0 %2227
    %2229 = vrot.lane.b32.xlu0 %v1740, 127
    %v2230 = vpop.permute.xlu0 %2229
    %2231 = vrot.lane.b32.xlu0 %v1741, 127
    %v2232 = vpop.permute.xlu0 %2231
    %2233 = vrot.lane.b32.xlu0 %v1742, 127
    %v2234 = vpop.permute.xlu0 %2233
    %2235 = vrot.lane.b32.xlu0 %v1743, 127
    %v2236 = vpop.permute.xlu0 %2235
    %2237 = vrot.lane.b32.xlu0 %v1744, 127
    %v2238 = vpop.permute.xlu0 %2237
    %2239 = vrot.lane.b32.xlu0 %v1745, 127
    %v2240 = vpop.permute.xlu0 %2239
    %2241 = vrot.lane.b32.xlu0 %v1746, 127
    %v2242 = vpop.permute.xlu0 %2241
    %v2243 = vsel %vm868, %v2240, %v2242
    %v2244 = vsel %vm868, %v2238, %v2240
    %v2245 = vsel %vm868, %v2236, %v2238
    %v2246 = vsel %vm868, %v2234, %v2236
    %v2247 = vsel %vm868, %v2232, %v2234
    %v2248 = vsel %vm868, %v2230, %v2232
    %v2249 = vsel %vm868, %v2228, %v2230
    %v2250 = vsel %vm868, %v2242, %v2228
    %2251 = vrot.lane.b32.xlu0 %v1739, 121
    %v2252 = vpop.permute.xlu0 %2251
    %2253 = vrot.lane.b32.xlu0 %v1740, 121
    %v2254 = vpop.permute.xlu0 %2253
    %2255 = vrot.lane.b32.xlu0 %v1741, 121
    %v2256 = vpop.permute.xlu0 %2255
    %2257 = vrot.lane.b32.xlu0 %v1742, 121
    %v2258 = vpop.permute.xlu0 %2257
    %2259 = vrot.lane.b32.xlu0 %v1743, 121
    %v2260 = vpop.permute.xlu0 %2259
    %2261 = vrot.lane.b32.xlu0 %v1744, 121
    %v2262 = vpop.permute.xlu0 %2261
    %2263 = vrot.lane.b32.xlu0 %v1745, 121
    %v2264 = vpop.permute.xlu0 %2263
    %2265 = vrot.lane.b32.xlu0 %v1746, 121
    %v2266 = vpop.permute.xlu0 %2265
    %v2267 = vsel %vm893, %v2264, %v2266
    %v2268 = vsel %vm893, %v2262, %v2264
    %v2269 = vsel %vm893, %v2260, %v2262
    %v2270 = vsel %vm893, %v2258, %v2260
    %v2271 = vsel %vm893, %v2256, %v2258
    %v2272 = vsel %vm893, %v2254, %v2256
    %v2273 = vsel %vm893, %v2252, %v2254
    %v2274 = vsel %vm893, %v2266, %v2252
    %v2275 = vsel %vm141, %v2249, %v2273
    %v2276 = vsel %vm141, %v2248, %v2272
    %v2277 = vsel %vm141, %v2247, %v2271
    %v2278 = vsel %vm141, %v2246, %v2270
    %v2279 = vsel %vm141, %v2245, %v2269
    %v2280 = vsel %vm141, %v2244, %v2268
    %v2281 = vsel %vm141, %v2243, %v2267
    %v2282 = vsel %vm141, %v2250, %v2274
    %v2283 = vsel %vm934, %v2275, 0.0
    %v2284 = vsel %vm935, %v2276, 0.0
    %v2285 = vsel %vm936, %v2277, 0.0
    %v2286 = vsel %vm937, %v2278, 0.0
    %v2287 = vsel %vm938, %v2279, 0.0
    %v2288 = vsel %vm939, %v2280, 0.0
    %v2289 = vsel %vm940, %v2281, 0.0
    %v2290 = vsel %vm941, %v2282, 0.0
    %2291 = vst [vmem:[#allocation2 + $0x1c0] sm:$0xff] %v2283
    %2292 = vst [vmem:[#allocation2 + $0x1c8] sm:$0xff] %v2284
    %2293 = vst [vmem:[#allocation2 + $0x1d0] sm:$0xff] %v2285
    %2294 = vst [vmem:[#allocation2 + $0x1d8] sm:$0xff] %v2286
    %2295 = vst [vmem:[#allocation2 + $0x1e0] sm:$0xff] %v2287
    %2296 = vst [vmem:[#allocation2 + $0x1e8] sm:$0xff] %v2288
    %2297 = vst [vmem:[#allocation2 + $0x1f0] sm:$0xff] %v2289
    %2298 = vst [vmem:[#allocation2 + $0x1f8] sm:$0xff] %v2290
    %2299 = vrot.lane.b32.xlu0 %v1739, 120
    %v2300 = vpop.permute.xlu0 %2299
    %2301 = vrot.lane.b32.xlu0 %v1740, 120
    %v2302 = vpop.permute.xlu0 %2301
    %2303 = vrot.lane.b32.xlu0 %v1741, 120
    %v2304 = vpop.permute.xlu0 %2303
    %2305 = vrot.lane.b32.xlu0 %v1742, 120
    %v2306 = vpop.permute.xlu0 %2305
    %2307 = vrot.lane.b32.xlu0 %v1743, 120
    %v2308 = vpop.permute.xlu0 %2307
    %2309 = vrot.lane.b32.xlu0 %v1744, 120
    %v2310 = vpop.permute.xlu0 %2309
    %2311 = vrot.lane.b32.xlu0 %v1745, 120
    %v2312 = vpop.permute.xlu0 %2311
    %2313 = vrot.lane.b32.xlu0 %v1746, 120
    %v2314 = vpop.permute.xlu0 %2313
    %v2315 = vsel %vm974, %v2312, %v2314
    %v2316 = vsel %vm974, %v2310, %v2312
    %v2317 = vsel %vm974, %v2308, %v2310
    %v2318 = vsel %vm974, %v2306, %v2308
    %v2319 = vsel %vm974, %v2304, %v2306
    %v2320 = vsel %vm974, %v2302, %v2304
    %v2321 = vsel %vm974, %v2300, %v2302
    %v2322 = vsel %vm974, %v2314, %v2300
    %2323 = vrot.lane.b32.xlu0 %v1739, 119
    %v2324 = vpop.permute.xlu0 %2323
    %2325 = vrot.lane.b32.xlu0 %v1740, 119
    %v2326 = vpop.permute.xlu0 %2325
    %2327 = vrot.lane.b32.xlu0 %v1741, 119
    %v2328 = vpop.permute.xlu0 %2327
    %2329 = vrot.lane.b32.xlu0 %v1742, 119
    %v2330 = vpop.permute.xlu0 %2329
    %2331 = vrot.lane.b32.xlu0 %v1743, 119
    %v2332 = vpop.permute.xlu0 %2331
    %2333 = vrot.lane.b32.xlu0 %v1744, 119
    %v2334 = vpop.permute.xlu0 %2333
    %2335 = vrot.lane.b32.xlu0 %v1745, 119
    %v2336 = vpop.permute.xlu0 %2335
    %2337 = vrot.lane.b32.xlu0 %v1746, 119
    %v2338 = vpop.permute.xlu0 %2337
    %v2339 = vsel %vm999, %v2336, %v2338
    %v2340 = vsel %vm999, %v2334, %v2336
    %v2341 = vsel %vm999, %v2332, %v2334
    %v2342 = vsel %vm999, %v2330, %v2332
    %v2343 = vsel %vm999, %v2328, %v2330
    %v2344 = vsel %vm999, %v2326, %v2328
    %v2345 = vsel %vm999, %v2324, %v2326
    %v2346 = vsel %vm999, %v2338, %v2324
    %v2347 = vsel %vm141, %v2321, %v2345
    %v2348 = vsel %vm141, %v2320, %v2344
    %v2349 = vsel %vm141, %v2319, %v2343
    %v2350 = vsel %vm141, %v2318, %v2342
    %v2351 = vsel %vm141, %v2317, %v2341
    %v2352 = vsel %vm141, %v2316, %v2340
    %v2353 = vsel %vm141, %v2315, %v2339
    %v2354 = vsel %vm141, %v2322, %v2346
    %v2355 = vsel %vm1016, %v2347, 0.0
    %v2356 = vsel %vm1017, %v2348, 0.0
    %v2357 = vsel %vm1018, %v2349, 0.0
    %v2358 = vsel %vm1019, %v2350, 0.0
    %v2359 = vsel %vm1020, %v2351, 0.0
    %v2360 = vsel %vm1021, %v2352, 0.0
    %v2361 = vsel %vm1022, %v2353, 0.0
    %v2362 = vsel %vm1023, %v2354, 0.0
    %2363 = vst [vmem:[#allocation2 + $0x200] sm:$0xff] %v2355
    %2364 = vst [vmem:[#allocation2 + $0x208] sm:$0xff] %v2356
    %2365 = vst [vmem:[#allocation2 + $0x210] sm:$0xff] %v2357
    %2366 = vst [vmem:[#allocation2 + $0x218] sm:$0xff] %v2358
    %2367 = vst [vmem:[#allocation2 + $0x220] sm:$0xff] %v2359
    %2368 = vst [vmem:[#allocation2 + $0x228] sm:$0xff] %v2360
    %2369 = vst [vmem:[#allocation2 + $0x230] sm:$0xff] %v2361
    %2370 = vst [vmem:[#allocation2 + $0x238] sm:$0xff] %v2362
    %v2371 = vsel %vm1064, %v1796, 0.0
    %v2372 = vsel %vm1065, %v1797, 0.0
    %v2373 = vsel %vm1066, %v1798, 0.0
    %v2374 = vsel %vm1067, %v1799, 0.0
    %v2375 = vsel %vm1068, %v1800, 0.0
    %v2376 = vsel %vm1069, %v1801, 0.0
    %v2377 = vsel %vm1070, %v1802, 0.0
    %v2378 = vsel %vm1071, %v1795, 0.0
    %2379 = vst [vmem:[#allocation2 + $0x240] sm:$0xff] %v2371
    %2380 = vst [vmem:[#allocation2 + $0x248] sm:$0xff] %v2372
    %2381 = vst [vmem:[#allocation2 + $0x250] sm:$0xff] %v2373
    %2382 = vst [vmem:[#allocation2 + $0x258] sm:$0xff] %v2374
    %2383 = vst [vmem:[#allocation2 + $0x260] sm:$0xff] %v2375
    %2384 = vst [vmem:[#allocation2 + $0x268] sm:$0xff] %v2376
    %2385 = vst [vmem:[#allocation2 + $0x270] sm:$0xff] %v2377
    %2386 = vst [vmem:[#allocation2 + $0x278] sm:$0xff] %v2378
    %v2387 = vsel %vm1104, %v1868, 0.0
    %v2388 = vsel %vm1105, %v1869, 0.0
    %v2389 = vsel %vm1106, %v1870, 0.0
    %v2390 = vsel %vm1107, %v1871, 0.0
    %v2391 = vsel %vm1108, %v1872, 0.0
    %v2392 = vsel %vm1109, %v1873, 0.0
    %v2393 = vsel %vm1110, %v1874, 0.0
    %v2394 = vsel %vm1111, %v1867, 0.0
    %2395 = vst [vmem:[#allocation2 + $0x280] sm:$0xff] %v2387
    %2396 = vst [vmem:[#allocation2 + $0x288] sm:$0xff] %v2388
    %2397 = vst [vmem:[#allocation2 + $0x290] sm:$0xff] %v2389
    %2398 = vst [vmem:[#allocation2 + $0x298] sm:$0xff] %v2390
    %2399 = vst [vmem:[#allocation2 + $0x2a0] sm:$0xff] %v2391
    %2400 = vst [vmem:[#allocation2 + $0x2a8] sm:$0xff] %v2392
    %2401 = vst [vmem:[#allocation2 + $0x2b0] sm:$0xff] %v2393
    %2402 = vst [vmem:[#allocation2 + $0x2b8] sm:$0xff] %v2394
    %v2403 = vsel %vm1128, %v1940, 0.0
    %v2404 = vsel %vm1129, %v1941, 0.0
    %v2405 = vsel %vm1130, %v1942, 0.0
    %v2406 = vsel %vm1131, %v1943, 0.0
    %v2407 = vsel %vm1132, %v1944, 0.0
    %v2408 = vsel %vm1133, %v1945, 0.0
    %v2409 = vsel %vm1134, %v1946, 0.0
    %v2410 = vsel %vm1135, %v1939, 0.0
    %2411 = vst [vmem:[#allocation2 + $0x2c0] sm:$0xff] %v2403
    %2412 = vst [vmem:[#allocation2 + $0x2c8] sm:$0xff] %v2404
    %2413 = vst [vmem:[#allocation2 + $0x2d0] sm:$0xff] %v2405
    %2414 = vst [vmem:[#allocation2 + $0x2d8] sm:$0xff] %v2406
    %2415 = vst [vmem:[#allocation2 + $0x2e0] sm:$0xff] %v2407
    %2416 = vst [vmem:[#allocation2 + $0x2e8] sm:$0xff] %v2408
    %2417 = vst [vmem:[#allocation2 + $0x2f0] sm:$0xff] %v2409
    %2418 = vst [vmem:[#allocation2 + $0x2f8] sm:$0xff] %v2410
    %v2419 = vsel %vm1160, %v2012, 0.0
    %v2420 = vsel %vm1161, %v2013, 0.0
    %v2421 = vsel %vm1162, %v2014, 0.0
    %v2422 = vsel %vm1163, %v2015, 0.0
    %v2423 = vsel %vm1164, %v2016, 0.0
    %v2424 = vsel %vm1165, %v2017, 0.0
    %v2425 = vsel %vm1166, %v2018, 0.0
    %v2426 = vsel %vm1167, %v2011, 0.0
    %2427 = vst [vmem:[#allocation2 + $0x300] sm:$0xff] %v2419
    %2428 = vst [vmem:[#allocation2 + $0x308] sm:$0xff] %v2420
    %2429 = vst [vmem:[#allocation2 + $0x310] sm:$0xff] %v2421
    %2430 = vst [vmem:[#allocation2 + $0x318] sm:$0xff] %v2422
    %2431 = vst [vmem:[#allocation2 + $0x320] sm:$0xff] %v2423
    %2432 = vst [vmem:[#allocation2 + $0x328] sm:$0xff] %v2424
    %2433 = vst [vmem:[#allocation2 + $0x330] sm:$0xff] %v2425
    %2434 = vst [vmem:[#allocation2 + $0x338] sm:$0xff] %v2426
    %v2435 = vsel %vm1241, %v2057, 0.0
    %v2436 = vsel %vm1242, %v2056, 0.0
    %v2437 = vsel %vm1243, %v2055, 0.0
    %v2438 = vsel %vm1244, %v2054, 0.0
    %v2439 = vsel %vm1245, %v2053, 0.0
    %v2440 = vsel %vm1246, %v2052, 0.0
    %v2441 = vsel %vm1247, %v2051, 0.0
    %v2442 = vsel %vm1248, %v2058, 0.0
    %2443 = vst [vmem:[#allocation2 + $0x340] sm:$0xff] %v2435
    %2444 = vst [vmem:[#allocation2 + $0x348] sm:$0xff] %v2436
    %2445 = vst [vmem:[#allocation2 + $0x350] sm:$0xff] %v2437
    %2446 = vst [vmem:[#allocation2 + $0x358] sm:$0xff] %v2438
    %2447 = vst [vmem:[#allocation2 + $0x360] sm:$0xff] %v2439
    %2448 = vst [vmem:[#allocation2 + $0x368] sm:$0xff] %v2440
    %2449 = vst [vmem:[#allocation2 + $0x370] sm:$0xff] %v2441
    %2450 = vst [vmem:[#allocation2 + $0x378] sm:$0xff] %v2442
    %v2451 = vld [vmem:[%s2] sm:$0xf]
    %v2452 = vld [vmem:[#allocation2] sm:$0xff]
    %v2453 = vld [vmem:[#allocation2 + $0x8] sm:$0xff]
    %v2454 = vld [vmem:[#allocation2 + $0x10] sm:$0xff]
    %v2455 = vld [vmem:[#allocation2 + $0x18] sm:$0xff]
    %v2456 = vld [vmem:[#allocation2 + $0x20] sm:$0xff]
    %v2457 = vld [vmem:[#allocation2 + $0x28] sm:$0xff]
    %v2458 = vld [vmem:[#allocation2 + $0x30] sm:$0xff]
    %v2459 = vld [vmem:[#allocation2 + $0x38] sm:$0xff]
    %v2460 = vld [vmem:[#allocation2 + $0x40] sm:$0xff]
    %v2461 = vld [vmem:[#allocation2 + $0x48] sm:$0xff]
    %v2462 = vld [vmem:[#allocation2 + $0x50] sm:$0xff]
    %v2463 = vld [vmem:[#allocation2 + $0x58] sm:$0xff]
    %v2464 = vld [vmem:[#allocation2 + $0x60] sm:$0xff]
    %v2465 = vld [vmem:[#allocation2 + $0x68] sm:$0xff]
    %v2466 = vld [vmem:[#allocation2 + $0x70] sm:$0xff]
    %v2467 = vld [vmem:[#allocation2 + $0x78] sm:$0xff]
    %v2468 = vld [vmem:[#allocation2 + $0x80] sm:$0xff]
    %v2469 = vld [vmem:[#allocation2 + $0x88] sm:$0xff]
    %v2470 = vld [vmem:[#allocation2 + $0x90] sm:$0xff]
    %v2471 = vld [vmem:[#allocation2 + $0x98] sm:$0xff]
    %v2472 = vld [vmem:[#allocation2 + $0xa0] sm:$0xff]
    %v2473 = vld [vmem:[#allocation2 + $0xa8] sm:$0xff]
    %v2474 = vld [vmem:[#allocation2 + $0xb0] sm:$0xff]
    %v2475 = vld [vmem:[#allocation2 + $0xb8] sm:$0xff]
    %v2476 = vld [vmem:[#allocation2 + $0xc0] sm:$0xff]
    %v2477 = vld [vmem:[#allocation2 + $0xc8] sm:$0xff]
    %v2478 = vld [vmem:[#allocation2 + $0xd0] sm:$0xff]
    %v2479 = vld [vmem:[#allocation2 + $0xd8] sm:$0xff]
    %v2480 = vld [vmem:[#allocation2 + $0xe0] sm:$0xff]
    %v2481 = vld [vmem:[#allocation2 + $0xe8] sm:$0xff]
    %v2482 = vld [vmem:[#allocation2 + $0xf0] sm:$0xff]
    %v2483 = vld [vmem:[#allocation2 + $0xf8] sm:$0xff]
    %v2484 = vld [vmem:[#allocation2 + $0x100] sm:$0xff]
    %v2485 = vld [vmem:[#allocation2 + $0x108] sm:$0xff]
    %v2486 = vld [vmem:[#allocation2 + $0x110] sm:$0xff]
    %v2487 = vld [vmem:[#allocation2 + $0x118] sm:$0xff]
    %v2488 = vld [vmem:[#allocation2 + $0x120] sm:$0xff]
    %v2489 = vld [vmem:[#allocation2 + $0x128] sm:$0xff]
    %v2490 = vld [vmem:[#allocation2 + $0x130] sm:$0xff]
    %v2491 = vld [vmem:[#allocation2 + $0x138] sm:$0xff]
    %v2492 = vld [vmem:[#allocation2 + $0x140] sm:$0xff]
    %v2493 = vld [vmem:[#allocation2 + $0x148] sm:$0xff]
    %v2494 = vld [vmem:[#allocation2 + $0x150] sm:$0xff]
    %v2495 = vld [vmem:[#allocation2 + $0x158] sm:$0xff]
    %v2496 = vld [vmem:[#allocation2 + $0x160] sm:$0xff]
    %v2497 = vld [vmem:[#allocation2 + $0x168] sm:$0xff]
    %v2498 = vld [vmem:[#allocation2 + $0x170] sm:$0xff]
    %v2499 = vld [vmem:[#allocation2 + $0x178] sm:$0xff]
    %v2500 = vld [vmem:[#allocation2 + $0x180] sm:$0xff]
    %v2501 = vld [vmem:[#allocation2 + $0x188] sm:$0xff]
    %v2502 = vld [vmem:[#allocation2 + $0x190] sm:$0xff]
    %v2503 = vld [vmem:[#allocation2 + $0x198] sm:$0xff]
    %v2504 = vld [vmem:[#allocation2 + $0x1a0] sm:$0xff]
    %v2505 = vld [vmem:[#allocation2 + $0x1a8] sm:$0xff]
    %v2506 = vld [vmem:[#allocation2 + $0x1b0] sm:$0xff]
    %v2507 = vld [vmem:[#allocation2 + $0x1b8] sm:$0xff]
    %v2508 = vld [vmem:[#allocation2 + $0x1c0] sm:$0xff]
    %v2509 = vld [vmem:[#allocation2 + $0x1c8] sm:$0xff]
    %v2510 = vld [vmem:[#allocation2 + $0x1d0] sm:$0xff]
    %v2511 = vld [vmem:[#allocation2 + $0x1d8] sm:$0xff]
    %v2512 = vld [vmem:[#allocation2 + $0x1e0] sm:$0xff]
    %v2513 = vld [vmem:[#allocation2 + $0x1e8] sm:$0xff]
    %v2514 = vld [vmem:[#allocation2 + $0x1f0] sm:$0xff]
    %v2515 = vld [vmem:[#allocation2 + $0x1f8] sm:$0xff]
    %v2516 = vld [vmem:[#allocation2 + $0x200] sm:$0xff]
    %v2517 = vld [vmem:[#allocation2 + $0x208] sm:$0xff]
    %v2518 = vld [vmem:[#allocation2 + $0x210] sm:$0xff]
    %v2519 = vld [vmem:[#allocation2 + $0x218] sm:$0xff]
    %v2520 = vld [vmem:[#allocation2 + $0x220] sm:$0xff]
    %v2521 = vld [vmem:[#allocation2 + $0x228] sm:$0xff]
    %v2522 = vld [vmem:[#allocation2 + $0x230] sm:$0xff]
    %v2523 = vld [vmem:[#allocation2 + $0x238] sm:$0xff]
    %v2524 = vld [vmem:[#allocation2 + $0x240] sm:$0xff]
    %v2525 = vld [vmem:[#allocation2 + $0x248] sm:$0xff]
    %v2526 = vld [vmem:[#allocation2 + $0x250] sm:$0xff]
    %v2527 = vld [vmem:[#allocation2 + $0x258] sm:$0xff]
    %v2528 = vld [vmem:[#allocation2 + $0x260] sm:$0xff]
    %v2529 = vld [vmem:[#allocation2 + $0x268] sm:$0xff]
    %v2530 = vld [vmem:[#allocation2 + $0x270] sm:$0xff]
    %v2531 = vld [vmem:[#allocation2 + $0x278] sm:$0xff]
    %v2532 = vld [vmem:[#allocation2 + $0x280] sm:$0xff]
    %v2533 = vld [vmem:[#allocation2 + $0x288] sm:$0xff]
    %v2534 = vld [vmem:[#allocation2 + $0x290] sm:$0xff]
    %v2535 = vld [vmem:[#allocation2 + $0x298] sm:$0xff]
    %v2536 = vld [vmem:[#allocation2 + $0x2a0] sm:$0xff]
    %v2537 = vld [vmem:[#allocation2 + $0x2a8] sm:$0xff]
    %v2538 = vld [vmem:[#allocation2 + $0x2b0] sm:$0xff]
    %v2539 = vld [vmem:[#allocation2 + $0x2b8] sm:$0xff]
    %v2540 = vld [vmem:[#allocation2 + $0x2c0] sm:$0xff]
    %v2541 = vld [vmem:[#allocation2 + $0x2c8] sm:$0xff]
    %v2542 = vld [vmem:[#allocation2 + $0x2d0] sm:$0xff]
    %v2543 = vld [vmem:[#allocation2 + $0x2d8] sm:$0xff]
    %v2544 = vld [vmem:[#allocation2 + $0x2e0] sm:$0xff]
    %v2545 = vld [vmem:[#allocation2 + $0x2e8] sm:$0xff]
    %v2546 = vld [vmem:[#allocation2 + $0x2f0] sm:$0xff]
    %v2547 = vld [vmem:[#allocation2 + $0x2f8] sm:$0xff]
    %v2548 = vld [vmem:[#allocation2 + $0x300] sm:$0xff]
    %v2549 = vld [vmem:[#allocation2 + $0x308] sm:$0xff]
    %v2550 = vld [vmem:[#allocation2 + $0x310] sm:$0xff]
    %v2551 = vld [vmem:[#allocation2 + $0x318] sm:$0xff]
    %v2552 = vld [vmem:[#allocation2 + $0x320] sm:$0xff]
    %v2553 = vld [vmem:[#allocation2 + $0x328] sm:$0xff]
    %v2554 = vld [vmem:[#allocation2 + $0x330] sm:$0xff]
    %v2555 = vld [vmem:[#allocation2 + $0x338] sm:$0xff]
    %v2556 = vld [vmem:[#allocation2 + $0x340] sm:$0xff]
    %v2557 = vld [vmem:[#allocation2 + $0x348] sm:$0xff]
    %v2558 = vld [vmem:[#allocation2 + $0x350] sm:$0xff]
    %v2559 = vld [vmem:[#allocation2 + $0x358] sm:$0xff]
    %v2560 = vld [vmem:[#allocation2 + $0x360] sm:$0xff]
    %v2561 = vld [vmem:[#allocation2 + $0x368] sm:$0xff]
    %v2562 = vld [vmem:[#allocation2 + $0x370] sm:$0xff]
    %v2563 = vld [vmem:[#allocation2 + $0x378] sm:$0xff]
    %v2565 = vsel %vm1378, %v2451, 0
    %2567 = vmatprep.subr.mxu0 %v2453
    %2568 = vmatpush1.msra.mxu0 %v2452
    %2569 = vmatprep.subr.mxu0 %v2461
    %2570 = vmatpush1.msra.mxu0 %v2460
    %2571 = vmatprep.subr.mxu0 %v2469
    %2572 = vmatpush1.msra.mxu0 %v2468
    %2573 = vmatprep.subr.mxu0 %v2477
    %2574 = vmatpush1.msra.mxu0 %v2476
    %2575 = vmatprep.subr.mxu0 %v2485
    %2576 = vmatpush1.msra.mxu0 %v2484
    %2577 = vmatprep.subr.mxu0 %v2493
    %2578 = vmatpush1.msra.mxu0 %v2492
    %2579 = vmatprep.subr.mxu0 %v2501
    %2580 = vmatpush1.msra.mxu0 %v2500
    %2581 = vmatprep.subr.mxu0 %v2509
    %2582 = vmatpush1.msra.mxu0 %v2508
    %2583 = vmatprep.subr.mxu0 %v2517
    %2584 = vmatpush1.msra.mxu0 %v2516
    %2585 = vmatprep.subr.mxu0 %v2525
    %2586 = vmatpush1.msra.mxu0 %v2524
    %2587 = vmatprep.subr.mxu0 %v2533
    %2588 = vmatpush1.msra.mxu0 %v2532
    %2589 = vmatprep.subr.mxu0 %v2541
    %2590 = vmatpush1.msra.mxu0 %v2540
    %2591 = vmatprep.subr.mxu0 %v2549
    %2592 = vmatpush1.msra.mxu0 %v2548
    %2593 = vmatprep.subr.mxu0 %v2557
    %2594 = vmatpush1.msra.mxu0 %v2556
    %2595 = vmatprep.subr.mxu0 0.0
    %2596 = vmatpush1.msra.mxu0 0.0
    %2597 = vmatprep.subr.mxu0 0.0
    %2598 = vmatpush1.msra.mxu0 0.0
    %2599 = vmatprep.subr.mxu0 0.0
    %2600 = vmatpush1.msra.mxu0 0.0
    %2601 = vmatprep.subr.mxu0 0.0
    %2602 = vmatpush1.msra.mxu0 0.0
    %2603 = vmatprep.subr.mxu0 0.0
    %2604 = vmatpush1.msra.mxu0 0.0
    %2605 = vmatprep.subr.mxu0 0.0
    %2606 = vmatpush1.msra.mxu0 0.0
    %2607 = vmatprep.subr.mxu0 0.0
    %2608 = vmatpush1.msra.mxu0 0.0
    %2609 = vmatprep.subr.mxu0 0.0
    %2610 = vmatpush1.msra.mxu0 0.0
    %2611 = vmatprep.subr.mxu0 0.0
    %2612 = vmatpush1.msra.mxu0 0.0
    %2613 = vmatprep.subr.mxu0 0.0
    %2614 = vmatpush1.msra.mxu0 0.0
    %2615 = vmatprep.subr.mxu0 0.0
    %2616 = vmatpush1.msra.mxu0 0.0
    %2617 = vmatprep.subr.mxu0 0.0
    %2618 = vmatpush1.msra.mxu0 0.0
    %2619 = vmatprep.subr.mxu0 0.0
    %2620 = vmatpush1.msra.mxu0 0.0
    %2621 = vmatprep.subr.mxu0 0.0
    %2622 = vmatpush1.msra.mxu0 0.0
    %2623 = vmatprep.subr.mxu0 0.0
    %2624 = vmatpush1.msra.mxu0 0.0
    %2625 = vmatprep.subr.mxu0 0.0
    %2626 = vmatpush1.msra.mxu0 0.0
    %2627 = vmatprep.subr.mxu0 0.0
    %2628 = vmatpush1.msra.mxu0 0.0
    %2629 = vmatprep.subr.mxu0 0.0
    %2630 = vmatpush1.msra.mxu0 0.0
    %2631 = vmatprep.mubr.f32.mxu0 0.0
    %2632 = vmatmul.mubr.f32.gmra.mrb[0].mxu0 %v2565
    %v2633 = vpop.f32.mrb[0].mxu0
    %v2634 = vadd.f32 0.0, %v2633
    %v2635 = vpop.f32.mrb[0].mxu0
    %v2636 = vadd.f32 0.0, %v2635
    %2637 = vdwg.mxu0
    %2638 = vmatprep.subr.mxu0 %v2455
    %2639 = vmatpush1.msra.mxu0 %v2454
    %2640 = vmatprep.subr.mxu0 %v2463
    %2641 = vmatpush1.msra.mxu0 %v2462
    %2642 = vmatprep.subr.mxu0 %v2471
    %2643 = vmatpush1.msra.mxu0 %v2470
    %2644 = vmatprep.subr.mxu0 %v2479
    %2645 = vmatpush1.msra.mxu0 %v2478
    %2646 = vmatprep.subr.mxu0 %v2487
    %2647 = vmatpush1.msra.mxu0 %v2486
    %2648 = vmatprep.subr.mxu0 %v2495
    %2649 = vmatpush1.msra.mxu0 %v2494
    %2650 = vmatprep.subr.mxu0 %v2503
    %2651 = vmatpush1.msra.mxu0 %v2502
    %2652 = vmatprep.subr.mxu0 %v2511
    %2653 = vmatpush1.msra.mxu0 %v2510
    %2654 = vmatprep.subr.mxu0 %v2519
    %2655 = vmatpush1.msra.mxu0 %v2518
    %2656 = vmatprep.subr.mxu0 %v2527
    %2657 = vmatpush1.msra.mxu0 %v2526
    %2658 = vmatprep.subr.mxu0 %v2535
    %2659 = vmatpush1.msra.mxu0 %v2534
    %2660 = vmatprep.subr.mxu0 %v2543
    %2661 = vmatpush1.msra.mxu0 %v2542
    %2662 = vmatprep.subr.mxu0 %v2551
    %2663 = vmatpush1.msra.mxu0 %v2550
    %2664 = vmatprep.subr.mxu0 %v2559
    %2665 = vmatpush1.msra.mxu0 %v2558
    %2666 = vmatprep.subr.mxu0 0.0
    %2667 = vmatpush1.msra.mxu0 0.0
    %2668 = vmatprep.subr.mxu0 0.0
    %2669 = vmatpush1.msra.mxu0 0.0
    %2670 = vmatprep.subr.mxu0 0.0
    %2671 = vmatpush1.msra.mxu0 0.0
    %2672 = vmatprep.subr.mxu0 0.0
    %2673 = vmatpush1.msra.mxu0 0.0
    %2674 = vmatprep.subr.mxu0 0.0
    %2675 = vmatpush1.msra.mxu0 0.0
    %2676 = vmatprep.subr.mxu0 0.0
    %2677 = vmatpush1.msra.mxu0 0.0
    %2678 = vmatprep.subr.mxu0 0.0
    %2679 = vmatpush1.msra.mxu0 0.0
    %2680 = vmatprep.subr.mxu0 0.0
    %2681 = vmatpush1.msra.mxu0 0.0
    %2682 = vmatprep.subr.mxu0 0.0
    %2683 = vmatpush1.msra.mxu0 0.0
    %2684 = vmatprep.subr.mxu0 0.0
    %2685 = vmatpush1.msra.mxu0 0.0
    %2686 = vmatprep.subr.mxu0 0.0
    %2687 = vmatpush1.msra.mxu0 0.0
    %2688 = vmatprep.subr.mxu0 0.0
    %2689 = vmatpush1.msra.mxu0 0.0
    %2690 = vmatprep.subr.mxu0 0.0
    %2691 = vmatpush1.msra.mxu0 0.0
    %2692 = vmatprep.subr.mxu0 0.0
    %2693 = vmatpush1.msra.mxu0 0.0
    %2694 = vmatprep.subr.mxu0 0.0
    %2695 = vmatpush1.msra.mxu0 0.0
    %2696 = vmatprep.subr.mxu0 0.0
    %2697 = vmatpush1.msra.mxu0 0.0
    %2698 = vmatprep.subr.mxu0 0.0
    %2699 = vmatpush1.msra.mxu0 0.0
    %2700 = vmatprep.subr.mxu0 0.0
    %2701 = vmatpush1.msra.mxu0 0.0
    %2702 = vmatprep.mubr.f32.mxu0 0.0
    %2703 = vmatmul.mubr.f32.gmra.mrb[0].mxu0 %v2565
    %v2704 = vpop.f32.mrb[0].mxu0
    %v2705 = vadd.f32 0.0, %v2704
    %v2706 = vpop.f32.mrb[0].mxu0
    %v2707 = vadd.f32 0.0, %v2706
    %2708 = vdwg.mxu0
    %2709 = vmatprep.subr.mxu0 %v2457
    %2710 = vmatpush1.msra.mxu0 %v2456
    %2711 = vmatprep.subr.mxu0 %v2465
    %2712 = vmatpush1.msra.mxu0 %v2464
    %2713 = vmatprep.subr.mxu0 %v2473
    %2714 = vmatpush1.msra.mxu0 %v2472
    %2715 = vmatprep.subr.mxu0 %v2481
    %2716 = vmatpush1.msra.mxu0 %v2480
    %2717 = vmatprep.subr.mxu0 %v2489
    %2718 = vmatpush1.msra.mxu0 %v2488
    %2719 = vmatprep.subr.mxu0 %v2497
    %2720 = vmatpush1.msra.mxu0 %v2496
    %2721 = vmatprep.subr.mxu0 %v2505
    %2722 = vmatpush1.msra.mxu0 %v2504
    %2723 = vmatprep.subr.mxu0 %v2513
    %2724 = vmatpush1.msra.mxu0 %v2512
    %2725 = vmatprep.subr.mxu0 %v2521
    %2726 = vmatpush1.msra.mxu0 %v2520
    %2727 = vmatprep.subr.mxu0 %v2529
    %2728 = vmatpush1.msra.mxu0 %v2528
    %2729 = vmatprep.subr.mxu0 %v2537
    %2730 = vmatpush1.msra.mxu0 %v2536
    %2731 = vmatprep.subr.mxu0 %v2545
    %2732 = vmatpush1.msra.mxu0 %v2544
    %2733 = vmatprep.subr.mxu0 %v2553
    %2734 = vmatpush1.msra.mxu0 %v2552
    %2735 = vmatprep.subr.mxu0 %v2561
    %2736 = vmatpush1.msra.mxu0 %v2560
    %2737 = vmatprep.subr.mxu0 0.0
    %2738 = vmatpush1.msra.mxu0 0.0
    %2739 = vmatprep.subr.mxu0 0.0
    %2740 = vmatpush1.msra.mxu0 0.0
    %2741 = vmatprep.subr.mxu0 0.0
    %2742 = vmatpush1.msra.mxu0 0.0
    %2743 = vmatprep.subr.mxu0 0.0
    %2744 = vmatpush1.msra.mxu0 0.0
    %2745 = vmatprep.subr.mxu0 0.0
    %2746 = vmatpush1.msra.mxu0 0.0
    %2747 = vmatprep.subr.mxu0 0.0
    %2748 = vmatpush1.msra.mxu0 0.0
    %2749 = vmatprep.subr.mxu0 0.0
    %2750 = vmatpush1.msra.mxu0 0.0
    %2751 = vmatprep.subr.mxu0 0.0
    %2752 = vmatpush1.msra.mxu0 0.0
    %2753 = vmatprep.subr.mxu0 0.0
    %2754 = vmatpush1.msra.mxu0 0.0
    %2755 = vmatprep.subr.mxu0 0.0
    %2756 = vmatpush1.msra.mxu0 0.0
    %2757 = vmatprep.subr.mxu0 0.0
    %2758 = vmatpush1.msra.mxu0 0.0
    %2759 = vmatprep.subr.mxu0 0.0
    %2760 = vmatpush1.msra.mxu0 0.0
    %2761 = vmatprep.subr.mxu0 0.0
    %2762 = vmatpush1.msra.mxu0 0.0
    %2763 = vmatprep.subr.mxu0 0.0
    %2764 = vmatpush1.msra.mxu0 0.0
    %2765 = vmatprep.subr.mxu0 0.0
    %2766 = vmatpush1.msra.mxu0 0.0
    %2767 = vmatprep.subr.mxu0 0.0
    %2768 = vmatpush1.msra.mxu0 0.0
    %2769 = vmatprep.subr.mxu0 0.0
    %2770 = vmatpush1.msra.mxu0 0.0
    %2771 = vmatprep.subr.mxu0 0.0
    %2772 = vmatpush1.msra.mxu0 0.0
    %2773 = vmatprep.mubr.f32.mxu0 0.0
    %2774 = vmatmul.mubr.f32.gmra.mrb[0].mxu0 %v2565
    %v2775 = vpop.f32.mrb[0].mxu0
    %v2776 = vadd.f32 0.0, %v2775
    %v2777 = vpop.f32.mrb[0].mxu0
    %v2778 = vadd.f32 0.0, %v2777
    %2779 = vdwg.mxu0
    %2780 = vmatprep.subr.mxu0 %v2459
    %2781 = vmatpush1.msra.mxu0 %v2458
    %2782 = vmatprep.subr.mxu0 %v2467
    %2783 = vmatpush1.msra.mxu0 %v2466
    %2784 = vmatprep.subr.mxu0 %v2475
    %2785 = vmatpush1.msra.mxu0 %v2474
    %2786 = vmatprep.subr.mxu0 %v2483
    %2787 = vmatpush1.msra.mxu0 %v2482
    %2788 = vmatprep.subr.mxu0 %v2491
    %2789 = vmatpush1.msra.mxu0 %v2490
    %2790 = vmatprep.subr.mxu0 %v2499
    %2791 = vmatpush1.msra.mxu0 %v2498
    %2792 = vmatprep.subr.mxu0 %v2507
    %2793 = vmatpush1.msra.mxu0 %v2506
    %2794 = vmatprep.subr.mxu0 %v2515
    %2795 = vmatpush1.msra.mxu0 %v2514
    %2796 = vmatprep.subr.mxu0 %v2523
    %2797 = vmatpush1.msra.mxu0 %v2522
    %2798 = vmatprep.subr.mxu0 %v2531
    %2799 = vmatpush1.msra.mxu0 %v2530
    %2800 = vmatprep.subr.mxu0 %v2539
    %2801 = vmatpush1.msra.mxu0 %v2538
    %2802 = vmatprep.subr.mxu0 %v2547
    %2803 = vmatpush1.msra.mxu0 %v2546
    %2804 = vmatprep.subr.mxu0 %v2555
    %2805 = vmatpush1.msra.mxu0 %v2554
    %2806 = vmatprep.subr.mxu0 %v2563
    %2807 = vmatpush1.msra.mxu0 %v2562
    %2808 = vmatprep.subr.mxu0 0.0
    %2809 = vmatpush1.msra.mxu0 0.0
    %2810 = vmatprep.subr.mxu0 0.0
    %2811 = vmatpush1.msra.mxu0 0.0
    %2812 = vmatprep.subr.mxu0 0.0
    %2813 = vmatpush1.msra.mxu0 0.0
    %2814 = vmatprep.subr.mxu0 0.0
    %2815 = vmatpush1.msra.mxu0 0.0
    %2816 = vmatprep.subr.mxu0 0.0
    %2817 = vmatpush1.msra.mxu0 0.0
    %2818 = vmatprep.subr.mxu0 0.0
    %2819 = vmatpush1.msra.mxu0 0.0
    %2820 = vmatprep.subr.mxu0 0.0
    %2821 = vmatpush1.msra.mxu0 0.0
    %2822 = vmatprep.subr.mxu0 0.0
    %2823 = vmatpush1.msra.mxu0 0.0
    %2824 = vmatprep.subr.mxu0 0.0
    %2825 = vmatpush1.msra.mxu0 0.0
    %2826 = vmatprep.subr.mxu0 0.0
    %2827 = vmatpush1.msra.mxu0 0.0
    %2828 = vmatprep.subr.mxu0 0.0
    %2829 = vmatpush1.msra.mxu0 0.0
    %2830 = vmatprep.subr.mxu0 0.0
    %2831 = vmatpush1.msra.mxu0 0.0
    %2832 = vmatprep.subr.mxu0 0.0
    %2833 = vmatpush1.msra.mxu0 0.0
    %2834 = vmatprep.subr.mxu0 0.0
    %2835 = vmatpush1.msra.mxu0 0.0
    %2836 = vmatprep.subr.mxu0 0.0
    %2837 = vmatpush1.msra.mxu0 0.0
    %2838 = vmatprep.subr.mxu0 0.0
    %2839 = vmatpush1.msra.mxu0 0.0
    %2840 = vmatprep.subr.mxu0 0.0
    %2841 = vmatpush1.msra.mxu0 0.0
    %2842 = vmatprep.subr.mxu0 0.0
    %2843 = vmatpush1.msra.mxu0 0.0
    %2844 = vmatprep.mubr.f32.mxu0 0.0
    %2845 = vmatmul.mubr.f32.gmra.mrb[0].mxu0 %v2565
    %v2846 = vpop.f32.mrb[0].mxu0
    %v2847 = vadd.f32 0.0, %v2846
    %v2848 = vpop.f32.mrb[0].mxu0
    %v2849 = vadd.f32 0.0, %v2848
    %2850 = vdwg.mxu0
    %v2851 = vld [vmem:[%s3] sm:$0xf]
    %vm2852 = vcmask 1043456
    %v2853 = vsel %vm2852, %v2634, 0.0
    %v2854 = vsel %vm2852, %v2636, 0.0
    %v2855 = vadd.f32 %v2853, %v2854
    %v2856 = vsel %vm2852, %v2705, 0.0
    %v2857 = vadd.f32 %v2855, %v2856
    %v2858 = vsel %vm2852, %v2707, 0.0
    %v2859 = vadd.f32 %v2857, %v2858
    %v2860 = vsel %vm2852, %v2776, 0.0
    %v2861 = vadd.f32 %v2859, %v2860
    %v2862 = vsel %vm2852, %v2778, 0.0
    %v2863 = vadd.f32 %v2861, %v2862
    %v2864 = vsel %vm2852, %v2847, 0.0
    %v2865 = vadd.f32 %v2863, %v2864
    %v2866 = vsel %vm2852, %v2849, 0.0
    %v2867 = vadd.f32 %v2865, %v2866
    %2868 = vadd.xlane.f32.xlu0 %v2867
    %v2869 = vpop.xlane.xlu0 %2868
    %v2870 = vmul.f32 %v2869, %v1676
    %v2871 = vsub.f32 %v2634, %v2870
    %v2872 = vsub.f32 %v2636, %v2870
    %v2873 = vsub.f32 %v2705, %v2870
    %v2874 = vsub.f32 %v2707, %v2870
    %v2875 = vsub.f32 %v2776, %v2870
    %v2876 = vsub.f32 %v2778, %v2870
    %v2877 = vsub.f32 %v2847, %v2870
    %v2878 = vsub.f32 %v2849, %v2870
    %v2879 = vmul.f32 %v2871, %v2871
    %v2880 = vmul.f32 %v2872, %v2872
    %v2881 = vmul.f32 %v2873, %v2873
    %v2882 = vmul.f32 %v2874, %v2874
    %v2883 = vmul.f32 %v2875, %v2875
    %v2884 = vmul.f32 %v2876, %v2876
    %v2885 = vmul.f32 %v2877, %v2877
    %v2886 = vmul.f32 %v2878, %v2878
    %v2887 = vsel %vm2852, %v2879, 0.0
    %v2888 = vsel %vm2852, %v2880, 0.0
    %v2889 = vadd.f32 %v2887, %v2888
    %v2890 = vsel %vm2852, %v2881, 0.0
    %v2891 = vadd.f32 %v2889, %v2890
    %v2892 = vsel %vm2852, %v2882, 0.0
    %v2893 = vadd.f32 %v2891, %v2892
    %v2894 = vsel %vm2852, %v2883, 0.0
    %v2895 = vadd.f32 %v2893, %v2894
    %v2896 = vsel %vm2852, %v2884, 0.0
    %v2897 = vadd.f32 %v2895, %v2896
    %v2898 = vsel %vm2852, %v2885, 0.0
    %v2899 = vadd.f32 %v2897, %v2898
    %v2900 = vsel %vm2852, %v2886, 0.0
    %v2901 = vadd.f32 %v2899, %v2900
    %2902 = vadd.xlane.f32.xlu0 %v2901
    %v2903 = vpop.xlane.xlu0 %2902
    %v2904 = vmul.f32 %v2903, %v1676
    %v2905 = vadd.f32 %v2904, 1e-05
    %v2906 = vrsqrt.pop %v2905
    %v2907 = vmul.f32 %v2871, %v2906
    %v2908 = vmul.f32 %v2872, %v2906
    %v2909 = vmul.f32 %v2873, %v2906
    %v2910 = vmul.f32 %v2874, %v2906
    %v2911 = vmul.f32 %v2875, %v2906
    %v2912 = vmul.f32 %v2876, %v2906
    %v2913 = vmul.f32 %v2877, %v2906
    %v2914 = vmul.f32 %v2878, %v2906
    %2916 = vset.pattern.permute.xlu0 2
    %2917 = vperm.xlu0 %2916, %v2851
    %v2918 = vpop.permute.xlu0 %2917
    %v2920 = vmul.f32 %v2907, %v2918
    %v2921 = vmul.f32 %v2908, %v2918
    %v2922 = vmul.f32 %v2909, %v2918
    %v2923 = vmul.f32 %v2910, %v2918
    %v2924 = vmul.f32 %v2911, %v2918
    %v2925 = vmul.f32 %v2912, %v2918
    %v2926 = vmul.f32 %v2913, %v2918
    %v2927 = vmul.f32 %v2914, %v2918
    %2928 = vset.pattern.permute.xlu0 3
    %2929 = vperm.xlu0 %2928, %v2851
    %v2930 = vpop.permute.xlu0 %2929
    %v2932 = vadd.f32 %v2920, %v2930
    %v2933 = vadd.f32 %v2921, %v2930
    %v2934 = vadd.f32 %v2922, %v2930
    %v2935 = vadd.f32 %v2923, %v2930
    %v2936 = vadd.f32 %v2924, %v2930
    %v2937 = vadd.f32 %v2925, %v2930
    %v2938 = vadd.f32 %v2926, %v2930
    %v2939 = vadd.f32 %v2927, %v2930
    %v2940 = vld [vmem:[#allocation3] sm:$0xf]
    %v2941 = vld [vmem:[#allocation3 + $0x8] sm:$0xf]
    %v2942 = vld [vmem:[#allocation3 + $0x10] sm:$0xf]
    %v2943 = vld [vmem:[#allocation3 + $0x18] sm:$0xf]
    %v2944 = vld [vmem:[#allocation3 + $0x20] sm:$0xf]
    %v2945 = vld [vmem:[#allocation3 + $0x28] sm:$0xf]
    %v2946 = vld [vmem:[#allocation3 + $0x30] sm:$0xf]
    %v2947 = vld [vmem:[#allocation3 + $0x38] sm:$0xf]
    %v2948 = vadd.f32 %v2932, %v2940
    %v2949 = vadd.f32 %v2933, %v2941
    %v2950 = vadd.f32 %v2934, %v2942
    %v2951 = vadd.f32 %v2935, %v2943
    %v2952 = vadd.f32 %v2936, %v2944
    %v2953 = vadd.f32 %v2937, %v2945
    %v2954 = vadd.f32 %v2938, %v2946
    %v2955 = vadd.f32 %v2939, %v2947
    %v2956 = vmax.f32 %v2948, 0.0
    %v2957 = vmax.f32 %v2949, 0.0
    %v2958 = vmax.f32 %v2950, 0.0
    %v2959 = vmax.f32 %v2951, 0.0
    %v2960 = vmax.f32 %v2952, 0.0
    %v2961 = vmax.f32 %v2953, 0.0
    %v2962 = vmax.f32 %v2954, 0.0
    %v2963 = vmax.f32 %v2955, 0.0
    %v2972 = vcombine.low %v2956, %v2957
    %v2973 = vcombine.low %v2958, %v2959
    %v2974 = vcombine.low %v2960, %v2961
    %v2975 = vcombine.low %v2962, %v2963
    %2980 = vst [vmem:[#allocation6] sm:$0xff] %v2972
    %2981 = vst [vmem:[#allocation6 + $0x8] sm:$0xff] %v2973
    %2982 = vst [vmem:[#allocation6 + $0x10] sm:$0xff] %v2974
    %2983 = vst [vmem:[#allocation6 + $0x18] sm:$0xff] %v2975
    // Predicated region
    $region22: #{tpu_custom_call.1} parent=1 // pred_check
      _
    $region23: #{tpu_custom_call.1} parent=1 // pred_check_branch
      %2985 = sbr.rel (0) target = $region25
    $region24: #{tpu_custom_call.1} parent=1 // pred_region
      %s2987 = ssub.s32 512, 512
      %2988 = vsyncadd [#allocation5], %s2987
      %s2990 = sshll.u32 [#allocation6], 4
      %s2991 = int_to_ptr.vmem [resolvable:$true] %s2990
      %2993 = dma.vmem_to_hbm [thread:$0]  %s2991, 512, %s4, [#allocation5]
    $region25: #{tpu_custom_call.1} parent=1 // pred_fallthru
      _
    // Predicated region
    $region26: #{tpu_custom_call.1} parent=1 // pred_check
      _
    $region27: #{tpu_custom_call.1} parent=1 // pred_check_branch
      %2995 = sbr.rel (0) target = $region29
    $region28: #{tpu_custom_call.1} parent=1 // pred_region
      %2996 = dma.done [#allocation5], 512
    $region29: #{tpu_custom_call.1} parent=1 // pred_fallthru
      _
    %2997 = vsyncpa [#allocation4], 1
    %2998 = vsyncpa [#allocation5], 1

</llo_original>
